<compile_context>
chip_gen: v5e
topology: v5e:2x2
jax: 0.10.0
libtpu: 0.0.40
codegen_flags: <defaults>
</compile_context>

<pallas_src>
import functools

import numpy as np
import jax
import jax.numpy as jnp
from jax.experimental import pallas as pl
from jax.experimental.pallas import tpu as pltpu


# ----------------------------- layout helpers (in-kernel) -----------------------------
def _rows_to_lanes(x, bt, l):
    """(bt*l, c) -> (bt, 1, l*c): move the row axis onto the lane axis (row-major,
    channel-minor).  Uses only static slices + lane concatenation (always lowerable)."""
    c = x.shape[-1]
    x3 = x.reshape(bt, l, c)                       # leading-dim split: no relayout
    return jnp.concatenate([x3[:, j:j + 1, :] for j in range(l)], axis=-1)


def _lanes_to_rows(x, bt, l, c):
    """(bt, l*c) -> (bt*l, c): inverse of _rows_to_lanes."""
    parts = [x[:, None, j * c:(j + 1) * c] for j in range(l)]
    return jnp.concatenate(parts, axis=1).reshape(bt * l, c)   # leading-dim merge


# ----------------------------------- kernel -----------------------------------
def _graph_kernel(feat_ref, mcol_ref, mrep_ref,
                  w_inp_ref, wc_ref, wek_ref, wuv_ref, bias_ref,
                  out_v_ref, out_e_ref, *, n_step):
    Bt, L, n_inp = feat_ref.shape
    C = w_inp_ref.shape[1]
    LC = L * C

    def dot(a, w):
        # Cast activations to the weights' (offline-chosen) MXU dtype; f32 accumulate.
        return jnp.dot(a.astype(w.dtype), w, preferred_element_type=jnp.float32)

    # ---- hoisted weight / bias slices (constant across the message-passing steps) ----
    w_inp = w_inp_ref[...]                         # (n_inp, C)
    wc = wc_ref[...]                               # (C, 4LC + 3C + n_inp) packed
    wp = wc[:, :LC + C]                            # [tile(w_fex,L) | w_fey]
    wv = wc[:, LC + C:4 * LC + 3 * C]              # [tile(fexu)|tile(fexa)|tile(agg)|feyu|feya]
    w_oup = wc[:, 4 * LC + 3 * C:]                 # (C, n_inp)
    wek = wek_ref[...]                             # (LC, 2LC): [kron(I,w_ue2)|kron(I,w_ue2@w_attn)]
    wuv = wuv_ref[...]                             # (2C, C)
    bias = bias_ref[...]                           # (8, BW) f32
    b_inp = bias[0:1, :C]
    b_fe_t = bias[1:2, :LC]
    b_eu_t = bias[2:3, :LC]
    b_eua_t = bias[3:4, :LC]
    b_attn_t = bias[4:5, :LC]
    b_agg_t = bias[5:6, :LC]
    b_uv = bias[6:7, :C]
    b_oup = bias[7:8, :n_inp]

    mcol = mcol_ref[...]                           # (Bt, L, 1)    mask[b, i]
    mrep = mrep_ref[...]                           # (Bt, 1, LC)   mask[b, j] repeated C times
    emask = mcol * mrep                            # (Bt, L, LC)   mask[i]*mask[j]  (hoisted)

    # ---------------- prologue: xform_inp + initial (unmasked) edge features ----------------
    h = dot(feat_ref[...].reshape(Bt * L, n_inp), w_inp) + b_inp          # (Bt*L, C)
    hp = dot(h, wp)                                                       # (Bt*L, LC+C)
    ax0 = hp[:, :LC].reshape(Bt, L, LC)            # h_i @ w_fex   (lane-tiled over j)
    ay0 = _rows_to_lanes(hp[:, LC:], Bt, L)        # h_j @ w_fey   ((j, c) dense on lanes)
    fe = ax0 + ay0 + b_fe_t                        # (Bt, L, LC)   feat_e, unmasked (reference)
    fv = h                                         # (Bt*L, C)     feat_v

    def step(_, carry):
        fv, fe = carry
        # -------- fused vertex-side matmul: one dot, N = 3*L*C + 2*C --------
        fvm = dot(fv, wv)                                                  # (Bt*L, 3LC+2C)
        ax_t = fvm[:, :LC].reshape(Bt, L, LC)              # fv_i @ (w_fex@w_ue1), tiled over j
        axa_t = fvm[:, LC:2 * LC].reshape(Bt, L, LC)       # its attn_v fold, tiled over j
        xhid_raw = fvm[:, 2 * LC:3 * LC].reshape(Bt, L, LC)  # fv @ w_agg, tiled over j
        ay_d = _rows_to_lanes(fvm[:, 3 * LC:3 * LC + C], Bt, L)            # fv_j @ (w_fey@w_ue1)
        aya_d = _rows_to_lanes(fvm[:, 3 * LC + C:3 * LC + 2 * C], Bt, L)   # its attn_v fold

        # -------- fused edge-slab matmul: upd_e AND attn_v image in one pass --------
        eu_all = dot(fe.reshape(Bt * L, LC), wek)                          # (Bt*L, 2LC)
        eu_d = eu_all[:, :LC].reshape(Bt, L, LC)
        eua_d = eu_all[:, LC:].reshape(Bt, L, LC)

        # -------- edge update (mask exactly as in the reference) --------
        fe_new = (ax_t + ay_d + eu_d + b_eu_t) * emask                     # (Bt, L, LC)

        # -------- vertex update: per-channel softmax over source vertices i --------
        # attn_v(fe_new) folded through the {0,1} mask: attn = emask*(unmasked@w_attn)+b_attn
        attn = (axa_t + aya_d + eua_d + b_eua_t) * emask + b_attn_t
        attn = attn - jnp.max(attn, axis=1, keepdims=True)
        e = jnp.exp(attn)                                                  # (Bt, L_i, LC)
        xhid_t = mcol * xhid_raw + b_agg_t                                 # agg_v(fv*mask), tiled
        num = jnp.sum(e * xhid_t, axis=1)                                  # (Bt, LC)
        den = jnp.sum(e, axis=1)                                           # (Bt, LC), >= 1
        agg = jax.nn.sigmoid(num / den)                                    # (Bt, LC)
        agg_rows = _lanes_to_rows(agg, Bt, L, C)                           # (Bt*L, C), row = vertex
        xhid_rows = xhid_t[:, :, :C].reshape(Bt * L, C)                    # j=0 block == plain xhid
        # TODO(synk): attn_v_drop (nn.Dropout) is identity here (inference mode).
        fv_new = dot(jnp.concatenate([xhid_rows, agg_rows], axis=-1), wuv) + b_uv
        return fv_new, fe_new

    fv, fe = jax.lax.fori_loop(0, n_step, step, (fv, fe))

    out_v = dot(fv, w_oup) + b_oup                                         # (Bt*L, n_inp)
    out_v_ref[...] = _rows_to_lanes(out_v, Bt, L).astype(out_v_ref.dtype)  # lane-dense store
    out_e_ref[...] = fe.astype(out_e_ref.dtype)                            # single lane-dense store


# ----------------------------------- wrapper -----------------------------------
def _pick_batch_tile(B, L, C, vmem_budget_bytes):
    """Largest divisor of B (capped at B//2 so the batch grid keeps >= 2 steps for the
    two v7x TensorCores) whose in-loop live set fits the VMEM budget.  Accounts for
    128-lane / 8-sublane padding of the lane-dense (L, L*C) slabs and for the
    (possibly double-buffered) out_e output block."""
    lane = lambda n: max(128, -(-n // 128) * 128)
    sub = lambda n: -(-n // 8) * 8
    slab = sub(L) * lane(L * C) * 4                # one padded f32 (L, L*C) slab
    per_graph = 10 * slab + 2 * slab               # ~10 live slabs + out_e (2 buffers)
    cap = max(1, B // 2)
    best = 1
    for cand in range(1, cap + 1):
        if B % cand == 0 and cand * per_graph <= vmem_budget_bytes:
            best = cand
    return best


def make_params(key, n_inp, n_inn):
    """Deterministic PyTorch-style Linear params: weight (out, in), bias (out,)."""
    def linear(k, fan_in, fan_out):
        k1, k2 = jax.random.split(k)
        bound = 1.0 / np.sqrt(fan_in)
        w = jax.random.uniform(k1, (fan_out, fan_in), jnp.float32, -bound, bound)
        b = jax.random.uniform(k2, (fan_out,), jnp.float32, -bound, bound)
        return w, b
    keys = jax.random.split(key, 7)
    return {
        'xform_inp':    linear(keys[0], n_inp, n_inn),
        'xform_oup':    linear(keys[1], n_inn, n_inp),
        'xform_feat_e': linear(keys[2], 2 * n_inn, n_inn),
        'upd_e':        linear(keys[3], 2 * n_inn, n_inn),
        'agg_v':        linear(keys[4], n_inn, n_inn),
        'upd_v':        linear(keys[5], 2 * n_inn, n_inn),
        'attn_v':       linear(keys[6], n_inn, n_inn),
    }


def edge_focused_graph_network(feat, mask, params, n_step=3, mxu_dtype=jnp.bfloat16):
    """Forward pass of EdgeFocusedGraphNetworkWithEdge. Returns (feat_v, feat_e)."""
    B, L, n_inp = feat.shape
    C = params['xform_inp'][0].shape[0]
    LC = L * C
    f32 = jnp.float32
    HIGH = jax.lax.Precision.HIGHEST

    # ---- weight prep: transpose to (in, out), split concat layers, fold offline ----
    def T(name):
        return params[name][0].T.astype(f32)

    def bv(name):
        return params[name][1].astype(f32)

    w_inp, b_inp = T('xform_inp'), bv('xform_inp')
    w_oup, b_oup = T('xform_oup'), bv('xform_oup')
    w_fe, b_fe = T('xform_feat_e'), bv('xform_feat_e')
    w_fex, w_fey = w_fe[:C], w_fe[C:]
    w_ue, b_ue = T('upd_e'), bv('upd_e')
    w_ue1, w_ue2 = w_ue[:C], w_ue[C:]
    w_agg, b_agg = T('agg_v'), bv('agg_v')
    w_attn, b_attn = T('attn_v'), bv('attn_v')
    w_uv, b_uv = T('upd_v'), bv('upd_v')

    mm = lambda a, b: jnp.dot(a, b, precision=HIGH)
    # fold xform_feat_e o upd_e, then fold attn_v through the {0,1} edge mask
    w_fexu = mm(w_fex, w_ue1)
    w_feyu = mm(w_fey, w_ue1)
    b_eu = b_ue + mm(b_fe[None, :], w_ue1)[0]
    w_fexa = mm(w_fexu, w_attn)
    w_feya = mm(w_feyu, w_attn)
    w_ue2a = mm(w_ue2, w_attn)
    b_eua = mm(b_eu[None, :], w_attn)[0]

    tile = lambda w: jnp.tile(w, (1, L))           # lane-tile over destination vertex j
    eyeL = jnp.eye(L, dtype=f32)
    kron = lambda w: jnp.kron(eyeL, w)             # block-diag: per-j copy of w

    wp = jnp.concatenate([tile(w_fex), w_fey], axis=1)                       # (C, LC+C)
    wv = jnp.concatenate([tile(w_fexu), tile(w_fexa), tile(w_agg),
                          w_feyu, w_feya], axis=1)                           # (C, 3LC+2C)
    wc = jnp.concatenate([wp, wv, w_oup], axis=1).astype(mxu_dtype)          # packed, MXU dtype
    wek = jnp.concatenate([kron(w_ue2), kron(w_ue2a)], axis=1).astype(mxu_dtype)  # (LC, 2LC)
    wuv = w_uv.astype(mxu_dtype)                                             # (2C, C)
    w_inp_x = w_inp.astype(mxu_dtype)                                        # (n_inp, C)

    # bias pack (stays f32): rows in the order expected by the kernel
    BW = max(LC, n_inp)
    def row(v):
        return jnp.zeros((BW,), f32).at[:v.shape[0]].set(v)
    bias = jnp.stack([row(b_inp), row(jnp.tile(b_fe, L)), row(jnp.tile(b_eu, L)),
                      row(jnp.tile(b_eua, L)), row(jnp.tile(b_attn, L)),
                      row(jnp.tile(b_agg, L)), row(b_uv), row(b_oup)], axis=0)  # (8, BW)

    # masks: per-source-vertex column and per-destination-vertex lane-repeated row
    mask_f = mask.astype(f32)
    mask_col = mask_f[:, :, None]                                  # (B, L, 1)
    mask_rep = jnp.repeat(mask_f, C, axis=-1)[:, None, :]          # (B, 1, L*C)

    # ---- VMEM budgeting (generation aware) and batch tile ----
    try:
        vmem_cap = int(pltpu.get_tpu_info().vmem_capacity_bytes)
    except Exception:
        vmem_cap = 64 * 1024 * 1024        # conservative (v7x per-TC VMEM)
    vmem_limit = max(32 * 1024 * 1024,
                     min(vmem_cap - 8 * 1024 * 1024, int(vmem_cap * 0.85)))
    itemsize = jnp.dtype(mxu_dtype).itemsize
    fixed = 2 * (wc.size + wek.size + wuv.size + w_inp_x.size) * itemsize + 2 * bias.size * 4
    budget = max(2 * 1024 * 1024, int(vmem_limit * 0.6) - fixed)
    Bt = _pick_batch_tile(B, L, C, budget)
    grid = (B // Bt,)

    in_specs = [
        pl.BlockSpec((Bt, L, n_inp), lambda b: (b, 0, 0)),
        pl.BlockSpec((Bt, L, 1), lambda b: (b, 0, 0)),
        pl.BlockSpec((Bt, 1, LC), lambda b: (b, 0, 0)),
        pl.BlockSpec(w_inp_x.shape, lambda b: (0, 0)),
        pl.BlockSpec(wc.shape, lambda b: (0, 0)),
        pl.BlockSpec(wek.shape, lambda b: (0, 0)),
        pl.BlockSpec(wuv.shape, lambda b: (0, 0)),
        pl.BlockSpec(bias.shape, lambda b: (0, 0)),
    ]
    out_shape = (jax.ShapeDtypeStruct((B, 1, L * n_inp), f32),
                 jax.ShapeDtypeStruct((B, L, LC), f32))
    out_v_spec = pl.BlockSpec((Bt, 1, L * n_inp), lambda b: (b, 0, 0))
    kernel = functools.partial(_graph_kernel, n_step=n_step)
    args = (feat.astype(f32), mask_col, mask_rep, w_inp_x, wc, wek, wuv, bias)

    def run(single_buffer_out_e):
        kw = {}
        if single_buffer_out_e and hasattr(pl, "Buffered"):
            # out_e is written once after the loop; its HBM writeback is tiny vs the
            # per-step compute, so single buffering frees the largest VMEM allocation.
            kw["pipeline_mode"] = pl.Buffered(1)
        out_e_spec = pl.BlockSpec((Bt, L, LC), lambda b: (b, 0, 0), **kw)
        out = pl.pallas_call(
            kernel,
            grid=grid,
            in_specs=in_specs,
            out_specs=(out_v_spec, out_e_spec),
            out_shape=out_shape,
            compiler_params=pltpu.CompilerParams(
                dimension_semantics=("parallel",),
                vmem_limit_bytes=int(vmem_limit)),
        )(*args)
        jax.block_until_ready(out)
        return out

    try:
        out_v, out_e = run(True)
    except Exception:
        # pl.Buffered(1) not accepted by this jax version: fall back to default buffering.
        out_v, out_e = run(False)

    return out_v.reshape(B, L, n_inp), out_e.reshape(B, L, L, C)


# ---------------- pure-JAX reference (mirrors the PyTorch forward) ----------------
def _outer_concat(feat):
    n, l, c = feat.shape
    x = jnp.broadcast_to(feat[:, :, None, :], (n, l, l, c))
    y = jnp.broadcast_to(feat[:, None, :, :], (n, l, l, c))
    return jnp.concatenate([x, y], axis=3)


def reference_forward(feat, mask, params, n_step=3):
    lin = lambda x, p: x @ p[0].T + p[1]
    h = lin(feat, params['xform_inp'])
    feat_e = lin(_outer_concat(h), params['xform_feat_e'])
    feat_v = h
    bs, l, n_inn = h.shape
    for _ in range(n_step):
        # edge update
        _fe = lin(_outer_concat(feat_v), params['xform_feat_e'])
        _fe = jnp.concatenate([_fe, feat_e], axis=3)
        _fe = lin(_fe, params['upd_e'])
        _fe = _fe * (mask[:, None, :] * mask[:, :, None])[..., None]
        # vertex update
        hid = feat_v * mask[..., None]
        xhid = lin(hid, params['agg_v'])
        aggs = []
        for j in range(l):
            attn = lin(_fe[:, :, j, :], params['attn_v'])
            w = jax.nn.softmax(attn, axis=1)
            aggs.append(jax.nn.sigmoid(jnp.sum(w * xhid, axis=1, keepdims=True)))
        agg = jnp.concatenate(aggs, axis=1)
        xh2 = jnp.concatenate([xhid, agg], axis=2)
        feat_v = lin(xh2, params['upd_v'])
        feat_e = _fe
    feat_v = lin(feat_v, params['xform_oup'])
    return feat_v, feat_e


if __name__ == "__main__":
    key = jax.random.PRNGKey(0)
    kp, kf, km = jax.random.split(key, 3)

    B, L, n_inp, n_inn, n_step = 2, 8, 16, 32, 3
    params = make_params(kp, n_inp, n_inn)
    feat = jax.random.normal(kf, (B, L, n_inp), jnp.float32)
    mask = (jax.random.uniform(km, (B, L)) > 0.25).astype(jnp.float32)

    ref_v, ref_e = reference_forward(feat, mask, params, n_step)

    # f32-MXU path: tight structural check (only offline weight-fold reassociation differs).
    v32, e32 = edge_focused_graph_network(feat, mask, params, n_step, mxu_dtype=jnp.float32)
    jax.block_until_ready((v32, e32))
    np.testing.assert_allclose(np.asarray(v32), np.asarray(ref_v), rtol=5e-4, atol=5e-4)
    np.testing.assert_allclose(np.asarray(e32), np.asarray(ref_e), rtol=5e-4, atol=5e-4)

    # default bf16-MXU path (perf recommendation for v5e/v6e/v7x): f32 accumulation and
    # f32 elementwise keep errors at the few-1e-3 level over 3 steps; 5e-2 is ample margin
    # while still catching any structural bug.
    out_v, out_e = edge_focused_graph_network(feat, mask, params, n_step)
    jax.block_until_ready((out_v, out_e))
    np.testing.assert_allclose(np.asarray(out_v), np.asarray(ref_v), rtol=5e-2, atol=5e-2)
    np.testing.assert_allclose(np.asarray(out_e), np.asarray(ref_e), rtol=5e-2, atol=5e-2)

    print("KERNEL_OK")
</pallas_src>

<mosaic_0001>
module attributes {stable_mosaic.version = 11 : i64} {
  func.func @_graph_kernel(%arg0: i32, %arg1: memref<1x8x16xf32, #tpu.memory_space<vmem>>, %arg2: memref<1x8x1xf32, #tpu.memory_space<vmem>>, %arg3: memref<1x1x256xf32, #tpu.memory_space<vmem>>, %arg4: memref<16x32xf32, #tpu.memory_space<vmem>>, %arg5: memref<32x1136xf32, #tpu.memory_space<vmem>>, %arg6: memref<256x512xf32, #tpu.memory_space<vmem>>, %arg7: memref<64x32xf32, #tpu.memory_space<vmem>>, %arg8: memref<8x256xf32, #tpu.memory_space<vmem>>, %arg9: memref<1x1x128xf32, #tpu.memory_space<vmem>>, %arg10: memref<1x8x256xf32, #tpu.memory_space<vmem>>) attributes {dimension_semantics = [#tpu.dimension_semantics<parallel>], iteration_bounds = array<i64: 2>, scalar_prefetch = 0 : i64, scratch_operands = 0 : i64, tpu.core_type = #tpu.core_type<tc>, window_params = [{transform_indices = @transform_0, window_bounds = array<i64: 1, 8, 16>}, {transform_indices = @transform_1, window_bounds = array<i64: 1, 8, 1>}, {transform_indices = @transform_2, window_bounds = array<i64: 1, 1, 256>}, {pipeline_mode = #tpu.pipeline_mode<synchronous>, transform_indices = @transform_3, window_bounds = array<i64: 16, 32>}, {pipeline_mode = #tpu.pipeline_mode<synchronous>, transform_indices = @transform_4, window_bounds = array<i64: 32, 1136>}, {pipeline_mode = #tpu.pipeline_mode<synchronous>, transform_indices = @transform_5, window_bounds = array<i64: 256, 512>}, {pipeline_mode = #tpu.pipeline_mode<synchronous>, transform_indices = @transform_6, window_bounds = array<i64: 64, 32>}, {pipeline_mode = #tpu.pipeline_mode<synchronous>, transform_indices = @transform_7, window_bounds = array<i64: 8, 256>}, {transform_indices = @transform_8, window_bounds = array<i64: 1, 1, 128>}, {pipeline_mode = #tpu.pipeline_mode<synchronous>, transform_indices = @transform_9, window_bounds = array<i64: 1, 8, 256>}]} {
    %c0 = arith.constant 0 : index
    %c0_0 = arith.constant 0 : index
    %0 = vector.load %arg4[%c0, %c0_0] : memref<16x32xf32, #tpu.memory_space<vmem>>, vector<16x32xf32>
    %c0_1 = arith.constant 0 : index
    %c0_2 = arith.constant 0 : index
    %1 = vector.load %arg5[%c0_1, %c0_2] : memref<32x1136xf32, #tpu.memory_space<vmem>>, vector<32x1136xf32>
    %2 = vector.extract_strided_slice %1 {offsets = [0, 0], sizes = [32, 288], strides = [1, 1]} : vector<32x1136xf32> to vector<32x288xf32>
    %3 = vector.extract_strided_slice %1 {offsets = [0, 288], sizes = [32, 832], strides = [1, 1]} : vector<32x1136xf32> to vector<32x832xf32>
    %4 = vector.extract_strided_slice %1 {offsets = [0, 1120], sizes = [32, 16], strides = [1, 1]} : vector<32x1136xf32> to vector<32x16xf32>
    %c0_3 = arith.constant 0 : index
    %c0_4 = arith.constant 0 : index
    %5 = vector.load %arg6[%c0_3, %c0_4] : memref<256x512xf32, #tpu.memory_space<vmem>>, vector<256x512xf32>
    %c0_5 = arith.constant 0 : index
    %c0_6 = arith.constant 0 : index
    %6 = vector.load %arg7[%c0_5, %c0_6] : memref<64x32xf32, #tpu.memory_space<vmem>>, vector<64x32xf32>
    %c0_7 = arith.constant 0 : index
    %c0_8 = arith.constant 0 : index
    %7 = vector.load %arg8[%c0_7, %c0_8] : memref<8x256xf32, #tpu.memory_space<vmem>>, vector<8x256xf32>
    %8 = vector.extract_strided_slice %7 {offsets = [0, 0], sizes = [1, 32], strides = [1, 1]} : vector<8x256xf32> to vector<1x32xf32>
    %9 = vector.extract_strided_slice %7 {offsets = [1, 0], sizes = [1, 256], strides = [1, 1]} : vector<8x256xf32> to vector<1x256xf32>
    %10 = vector.extract_strided_slice %7 {offsets = [2, 0], sizes = [1, 256], strides = [1, 1]} : vector<8x256xf32> to vector<1x256xf32>
    %11 = vector.extract_strided_slice %7 {offsets = [3, 0], sizes = [1, 256], strides = [1, 1]} : vector<8x256xf32> to vector<1x256xf32>
    %12 = vector.extract_strided_slice %7 {offsets = [4, 0], sizes = [1, 256], strides = [1, 1]} : vector<8x256xf32> to vector<1x256xf32>
    %13 = vector.extract_strided_slice %7 {offsets = [5, 0], sizes = [1, 256], strides = [1, 1]} : vector<8x256xf32> to vector<1x256xf32>
    %14 = vector.extract_strided_slice %7 {offsets = [6, 0], sizes = [1, 32], strides = [1, 1]} : vector<8x256xf32> to vector<1x32xf32>
    %15 = vector.extract_strided_slice %7 {offsets = [7, 0], sizes = [1, 16], strides = [1, 1]} : vector<8x256xf32> to vector<1x16xf32>
    %c0_9 = arith.constant 0 : index
    %c0_10 = arith.constant 0 : index
    %c0_11 = arith.constant 0 : index
    %16 = vector.load %arg2[%c0_9, %c0_10, %c0_11] : memref<1x8x1xf32, #tpu.memory_space<vmem>>, vector<1x8x1xf32>
    %c0_12 = arith.constant 0 : index
    %c0_13 = arith.constant 0 : index
    %c0_14 = arith.constant 0 : index
    %17 = vector.load %arg3[%c0_12, %c0_13, %c0_14] : memref<1x1x256xf32, #tpu.memory_space<vmem>>, vector<1x1x256xf32>
    %18 = vector.broadcast %16 : vector<1x8x1xf32> to vector<1x8x256xf32>
    %19 = vector.broadcast %17 : vector<1x1x256xf32> to vector<1x8x256xf32>
    %20 = arith.mulf %18, %19 : vector<1x8x256xf32>
    %c0_15 = arith.constant 0 : index
    %c0_16 = arith.constant 0 : index
    %c0_17 = arith.constant 0 : index
    %21 = vector.load %arg1[%c0_15, %c0_16, %c0_17] : memref<1x8x16xf32, #tpu.memory_space<vmem>>, vector<1x8x16xf32>
    %22 = vector.shape_cast %21 : vector<1x8x16xf32> to vector<8x16xf32>
    %cst = arith.constant dense<0.000000e+00> : vector<8x32xf32>
    %23 = tpu.matmul %22, %0, %cst {dimension_numbers = #tpu.dot_dimension_numbers<[1], [0], [0], [1], [0, 0, 1, 1], [], []>} : vector<8x16xf32>, vector<16x32xf32>, vector<8x32xf32> -> vector<8x32xf32>
    %24 = vector.broadcast %8 : vector<1x32xf32> to vector<8x32xf32>
    %25 = arith.addf %23, %24 : vector<8x32xf32>
    %cst_18 = arith.constant dense<0.000000e+00> : vector<8x288xf32>
    %26 = tpu.matmul %25, %2, %cst_18 {dimension_numbers = #tpu.dot_dimension_numbers<[1], [0], [0], [1], [0, 0, 1, 1], [], []>} : vector<8x32xf32>, vector<32x288xf32>, vector<8x288xf32> -> vector<8x288xf32>
    %27 = vector.extract_strided_slice %26 {offsets = [0, 0], sizes = [8, 256], strides = [1, 1]} : vector<8x288xf32> to vector<8x256xf32>
    %28 = vector.shape_cast %27 : vector<8x256xf32> to vector<1x8x256xf32>
    %29 = vector.extract_strided_slice %26 {offsets = [0, 256], sizes = [8, 32], strides = [1, 1]} : vector<8x288xf32> to vector<8x32xf32>
    %30 = vector.shape_cast %29 : vector<8x32xf32> to vector<1x8x32xf32>
    %31 = vector.extract_strided_slice %30 {offsets = [0, 0, 0], sizes = [1, 1, 32], strides = [1, 1, 1]} : vector<1x8x32xf32> to vector<1x1x32xf32>
    %32 = vector.extract_strided_slice %30 {offsets = [0, 1, 0], sizes = [1, 1, 32], strides = [1, 1, 1]} : vector<1x8x32xf32> to vector<1x1x32xf32>
    %33 = vector.extract_strided_slice %30 {offsets = [0, 2, 0], sizes = [1, 1, 32], strides = [1, 1, 1]} : vector<1x8x32xf32> to vector<1x1x32xf32>
    %34 = vector.extract_strided_slice %30 {offsets = [0, 3, 0], sizes = [1, 1, 32], strides = [1, 1, 1]} : vector<1x8x32xf32> to vector<1x1x32xf32>
    %35 = vector.extract_strided_slice %30 {offsets = [0, 4, 0], sizes = [1, 1, 32], strides = [1, 1, 1]} : vector<1x8x32xf32> to vector<1x1x32xf32>
    %36 = vector.extract_strided_slice %30 {offsets = [0, 5, 0], sizes = [1, 1, 32], strides = [1, 1, 1]} : vector<1x8x32xf32> to vector<1x1x32xf32>
    %37 = vector.extract_strided_slice %30 {offsets = [0, 6, 0], sizes = [1, 1, 32], strides = [1, 1, 1]} : vector<1x8x32xf32> to vector<1x1x32xf32>
    %38 = vector.extract_strided_slice %30 {offsets = [0, 7, 0], sizes = [1, 1, 32], strides = [1, 1, 1]} : vector<1x8x32xf32> to vector<1x1x32xf32>
    %39 = tpu.concatenate %31, %32, %33, %34, %35, %36, %37, %38 in 2 : vector<1x1x32xf32>, vector<1x1x32xf32>, vector<1x1x32xf32>, vector<1x1x32xf32>, vector<1x1x32xf32>, vector<1x1x32xf32>, vector<1x1x32xf32>, vector<1x1x32xf32> -> vector<1x1x256xf32>
    %40 = vector.broadcast %39 : vector<1x1x256xf32> to vector<1x8x256xf32>
    %41 = arith.addf %28, %40 : vector<1x8x256xf32>
    %42 = vector.shape_cast %9 : vector<1x256xf32> to vector<1x1x256xf32>
    %43 = vector.broadcast %42 : vector<1x1x256xf32> to vector<1x8x256xf32>
    %44 = arith.addf %41, %43 : vector<1x8x256xf32>
    %c0_i32 = arith.constant 0 : i32
    %c3_i32 = arith.constant 3 : i32
    %45 = arith.addi %c0_i32, %c3_i32 : i32
    %c1_i32 = arith.constant 1 : i32
    %46:2 = scf.for %arg11 = %c0_i32 to %45 step %c1_i32 iter_args(%arg12 = %25, %arg13 = %44) -> (vector<8x32xf32>, vector<1x8x256xf32>)  : i32 {
      %cst_26 = arith.constant dense<0.000000e+00> : vector<8x832xf32>
      %62 = tpu.matmul %arg12, %3, %cst_26 {dimension_numbers = #tpu.dot_dimension_numbers<[1], [0], [0], [1], [0, 0, 1, 1], [], []>} : vector<8x32xf32>, vector<32x832xf32>, vector<8x832xf32> -> vector<8x832xf32>
      %63 = vector.extract_strided_slice %62 {offsets = [0, 0], sizes = [8, 256], strides = [1, 1]} : vector<8x832xf32> to vector<8x256xf32>
      %64 = vector.shape_cast %63 : vector<8x256xf32> to vector<1x8x256xf32>
      %65 = vector.extract_strided_slice %62 {offsets = [0, 256], sizes = [8, 256], strides = [1, 1]} : vector<8x832xf32> to vector<8x256xf32>
      %66 = vector.shape_cast %65 : vector<8x256xf32> to vector<1x8x256xf32>
      %67 = vector.extract_strided_slice %62 {offsets = [0, 512], sizes = [8, 256], strides = [1, 1]} : vector<8x832xf32> to vector<8x256xf32>
      %68 = vector.shape_cast %67 : vector<8x256xf32> to vector<1x8x256xf32>
      %69 = vector.extract_strided_slice %62 {offsets = [0, 768], sizes = [8, 32], strides = [1, 1]} : vector<8x832xf32> to vector<8x32xf32>
      %70 = vector.shape_cast %69 : vector<8x32xf32> to vector<1x8x32xf32>
      %71 = vector.extract_strided_slice %70 {offsets = [0, 0, 0], sizes = [1, 1, 32], strides = [1, 1, 1]} : vector<1x8x32xf32> to vector<1x1x32xf32>
      %72 = vector.extract_strided_slice %70 {offsets = [0, 1, 0], sizes = [1, 1, 32], strides = [1, 1, 1]} : vector<1x8x32xf32> to vector<1x1x32xf32>
      %73 = vector.extract_strided_slice %70 {offsets = [0, 2, 0], sizes = [1, 1, 32], strides = [1, 1, 1]} : vector<1x8x32xf32> to vector<1x1x32xf32>
      %74 = vector.extract_strided_slice %70 {offsets = [0, 3, 0], sizes = [1, 1, 32], strides = [1, 1, 1]} : vector<1x8x32xf32> to vector<1x1x32xf32>
      %75 = vector.extract_strided_slice %70 {offsets = [0, 4, 0], sizes = [1, 1, 32], strides = [1, 1, 1]} : vector<1x8x32xf32> to vector<1x1x32xf32>
      %76 = vector.extract_strided_slice %70 {offsets = [0, 5, 0], sizes = [1, 1, 32], strides = [1, 1, 1]} : vector<1x8x32xf32> to vector<1x1x32xf32>
      %77 = vector.extract_strided_slice %70 {offsets = [0, 6, 0], sizes = [1, 1, 32], strides = [1, 1, 1]} : vector<1x8x32xf32> to vector<1x1x32xf32>
      %78 = vector.extract_strided_slice %70 {offsets = [0, 7, 0], sizes = [1, 1, 32], strides = [1, 1, 1]} : vector<1x8x32xf32> to vector<1x1x32xf32>
      %79 = tpu.concatenate %71, %72, %73, %74, %75, %76, %77, %78 in 2 : vector<1x1x32xf32>, vector<1x1x32xf32>, vector<1x1x32xf32>, vector<1x1x32xf32>, vector<1x1x32xf32>, vector<1x1x32xf32>, vector<1x1x32xf32>, vector<1x1x32xf32> -> vector<1x1x256xf32>
      %80 = vector.extract_strided_slice %62 {offsets = [0, 800], sizes = [8, 32], strides = [1, 1]} : vector<8x832xf32> to vector<8x32xf32>
      %81 = vector.shape_cast %80 : vector<8x32xf32> to vector<1x8x32xf32>
      %82 = vector.extract_strided_slice %81 {offsets = [0, 0, 0], sizes = [1, 1, 32], strides = [1, 1, 1]} : vector<1x8x32xf32> to vector<1x1x32xf32>
      %83 = vector.extract_strided_slice %81 {offsets = [0, 1, 0], sizes = [1, 1, 32], strides = [1, 1, 1]} : vector<1x8x32xf32> to vector<1x1x32xf32>
      %84 = vector.extract_strided_slice %81 {offsets = [0, 2, 0], sizes = [1, 1, 32], strides = [1, 1, 1]} : vector<1x8x32xf32> to vector<1x1x32xf32>
      %85 = vector.extract_strided_slice %81 {offsets = [0, 3, 0], sizes = [1, 1, 32], strides = [1, 1, 1]} : vector<1x8x32xf32> to vector<1x1x32xf32>
      %86 = vector.extract_strided_slice %81 {offsets = [0, 4, 0], sizes = [1, 1, 32], strides = [1, 1, 1]} : vector<1x8x32xf32> to vector<1x1x32xf32>
      %87 = vector.extract_strided_slice %81 {offsets = [0, 5, 0], sizes = [1, 1, 32], strides = [1, 1, 1]} : vector<1x8x32xf32> to vector<1x1x32xf32>
      %88 = vector.extract_strided_slice %81 {offsets = [0, 6, 0], sizes = [1, 1, 32], strides = [1, 1, 1]} : vector<1x8x32xf32> to vector<1x1x32xf32>
      %89 = vector.extract_strided_slice %81 {offsets = [0, 7, 0], sizes = [1, 1, 32], strides = [1, 1, 1]} : vector<1x8x32xf32> to vector<1x1x32xf32>
      %90 = tpu.concatenate %82, %83, %84, %85, %86, %87, %88, %89 in 2 : vector<1x1x32xf32>, vector<1x1x32xf32>, vector<1x1x32xf32>, vector<1x1x32xf32>, vector<1x1x32xf32>, vector<1x1x32xf32>, vector<1x1x32xf32>, vector<1x1x32xf32> -> vector<1x1x256xf32>
      %91 = vector.shape_cast %arg13 : vector<1x8x256xf32> to vector<8x256xf32>
      %cst_27 = arith.constant dense<0.000000e+00> : vector<8x512xf32>
      %92 = tpu.matmul %91, %5, %cst_27 {dimension_numbers = #tpu.dot_dimension_numbers<[1], [0], [0], [1], [0, 0, 1, 1], [], []>} : vector<8x256xf32>, vector<256x512xf32>, vector<8x512xf32> -> vector<8x512xf32>
      %93 = vector.extract_strided_slice %92 {offsets = [0, 0], sizes = [8, 256], strides = [1, 1]} : vector<8x512xf32> to vector<8x256xf32>
      %94 = vector.shape_cast %93 : vector<8x256xf32> to vector<1x8x256xf32>
      %95 = vector.extract_strided_slice %92 {offsets = [0, 256], sizes = [8, 256], strides = [1, 1]} : vector<8x512xf32> to vector<8x256xf32>
      %96 = vector.shape_cast %95 : vector<8x256xf32> to vector<1x8x256xf32>
      %97 = vector.broadcast %79 : vector<1x1x256xf32> to vector<1x8x256xf32>
      %98 = arith.addf %64, %97 : vector<1x8x256xf32>
      %99 = arith.addf %98, %94 : vector<1x8x256xf32>
      %100 = vector.shape_cast %10 : vector<1x256xf32> to vector<1x1x256xf32>
      %101 = vector.broadcast %100 : vector<1x1x256xf32> to vector<1x8x256xf32>
      %102 = arith.addf %99, %101 : vector<1x8x256xf32>
      %103 = arith.mulf %102, %20 : vector<1x8x256xf32>
      %104 = vector.broadcast %90 : vector<1x1x256xf32> to vector<1x8x256xf32>
      %105 = arith.addf %66, %104 : vector<1x8x256xf32>
      %106 = arith.addf %105, %96 : vector<1x8x256xf32>
      %107 = vector.shape_cast %11 : vector<1x256xf32> to vector<1x1x256xf32>
      %108 = vector.broadcast %107 : vector<1x1x256xf32> to vector<1x8x256xf32>
      %109 = arith.addf %106, %108 : vector<1x8x256xf32>
      %110 = arith.mulf %109, %20 : vector<1x8x256xf32>
      %111 = vector.shape_cast %12 : vector<1x256xf32> to vector<1x1x256xf32>
      %112 = vector.broadcast %111 : vector<1x1x256xf32> to vector<1x8x256xf32>
      %113 = arith.addf %110, %112 : vector<1x8x256xf32>
      %cst_28 = arith.constant dense<0xFF800000> : vector<1x256xf32>
      %114 = vector.multi_reduction <maximumf>, %113, %cst_28 [1] : vector<1x8x256xf32> to vector<1x256xf32>
      %115 = vector.shape_cast %114 : vector<1x256xf32> to vector<1x1x256xf32>
      %116 = vector.broadcast %115 : vector<1x1x256xf32> to vector<1x8x256xf32>
      %117 = arith.subf %113, %116 : vector<1x8x256xf32>
      %118 = math.exp %117 : vector<1x8x256xf32>
      %119 = vector.broadcast %16 : vector<1x8x1xf32> to vector<1x8x256xf32>
      %120 = arith.mulf %119, %68 : vector<1x8x256xf32>
      %121 = vector.shape_cast %13 : vector<1x256xf32> to vector<1x1x256xf32>
      %122 = vector.broadcast %121 : vector<1x1x256xf32> to vector<1x8x256xf32>
      %123 = arith.addf %120, %122 : vector<1x8x256xf32>
      %124 = arith.mulf %118, %123 : vector<1x8x256xf32>
      %cst_29 = arith.constant dense<0.000000e+00> : vector<1x256xf32>
      %125 = vector.multi_reduction <add>, %124, %cst_29 [1] : vector<1x8x256xf32> to vector<1x256xf32>
      %cst_30 = arith.constant dense<0.000000e+00> : vector<1x256xf32>
      %126 = vector.multi_reduction <add>, %118, %cst_30 [1] : vector<1x8x256xf32> to vector<1x256xf32>
      %127 = arith.divf %125, %126 : vector<1x256xf32>
      %128 = arith.negf %127 : vector<1x256xf32>
      %129 = math.exp %128 : vector<1x256xf32>
      %cst_31 = arith.constant 1.000000e+00 : f32
      %130 = vector.broadcast %cst_31 : f32 to vector<1x256xf32>
      %131 = arith.addf %130, %129 : vector<1x256xf32>
      %132 = arith.divf %130, %131 : vector<1x256xf32>
      %133 = vector.extract_strided_slice %132 {offsets = [0, 0], sizes = [1, 32], strides = [1, 1]} : vector<1x256xf32> to vector<1x32xf32>
      %134 = vector.shape_cast %133 : vector<1x32xf32> to vector<1x1x32xf32>
      %135 = vector.extract_strided_slice %132 {offsets = [0, 32], sizes = [1, 32], strides = [1, 1]} : vector<1x256xf32> to vector<1x32xf32>
      %136 = vector.shape_cast %135 : vector<1x32xf32> to vector<1x1x32xf32>
      %137 = vector.extract_strided_slice %132 {offsets = [0, 64], sizes = [1, 32], strides = [1, 1]} : vector<1x256xf32> to vector<1x32xf32>
      %138 = vector.shape_cast %137 : vector<1x32xf32> to vector<1x1x32xf32>
      %139 = vector.extract_strided_slice %132 {offsets = [0, 96], sizes = [1, 32], strides = [1, 1]} : vector<1x256xf32> to vector<1x32xf32>
      %140 = vector.shape_cast %139 : vector<1x32xf32> to vector<1x1x32xf32>
      %141 = vector.extract_strided_slice %132 {offsets = [0, 128], sizes = [1, 32], strides = [1, 1]} : vector<1x256xf32> to vector<1x32xf32>
      %142 = vector.shape_cast %141 : vector<1x32xf32> to vector<1x1x32xf32>
      %143 = vector.extract_strided_slice %132 {offsets = [0, 160], sizes = [1, 32], strides = [1, 1]} : vector<1x256xf32> to vector<1x32xf32>
      %144 = vector.shape_cast %143 : vector<1x32xf32> to vector<1x1x32xf32>
      %145 = vector.extract_strided_slice %132 {offsets = [0, 192], sizes = [1, 32], strides = [1, 1]} : vector<1x256xf32> to vector<1x32xf32>
      %146 = vector.shape_cast %145 : vector<1x32xf32> to vector<1x1x32xf32>
      %147 = vector.extract_strided_slice %132 {offsets = [0, 224], sizes = [1, 32], strides = [1, 1]} : vector<1x256xf32> to vector<1x32xf32>
      %148 = vector.shape_cast %147 : vector<1x32xf32> to vector<1x1x32xf32>
      %149 = tpu.concatenate %134, %136, %138, %140, %142, %144, %146, %148 in 1 : vector<1x1x32xf32>, vector<1x1x32xf32>, vector<1x1x32xf32>, vector<1x1x32xf32>, vector<1x1x32xf32>, vector<1x1x32xf32>, vector<1x1x32xf32>, vector<1x1x32xf32> -> vector<1x8x32xf32>
      %150 = vector.shape_cast %149 : vector<1x8x32xf32> to vector<8x32xf32>
      %151 = vector.extract_strided_slice %123 {offsets = [0, 0, 0], sizes = [1, 8, 32], strides = [1, 1, 1]} : vector<1x8x256xf32> to vector<1x8x32xf32>
      %152 = vector.shape_cast %151 : vector<1x8x32xf32> to vector<8x32xf32>
      %153 = tpu.concatenate %152, %150 in 1 : vector<8x32xf32>, vector<8x32xf32> -> vector<8x64xf32>
      %cst_32 = arith.constant dense<0.000000e+00> : vector<8x32xf32>
      %154 = tpu.matmul %153, %6, %cst_32 {dimension_numbers = #tpu.dot_dimension_numbers<[1], [0], [0], [1], [0, 0, 1, 1], [], []>} : vector<8x64xf32>, vector<64x32xf32>, vector<8x32xf32> -> vector<8x32xf32>
      %155 = vector.broadcast %14 : vector<1x32xf32> to vector<8x32xf32>
      %156 = arith.addf %154, %155 : vector<8x32xf32>
      scf.yield %156, %103 : vector<8x32xf32>, vector<1x8x256xf32>
    }
    %cst_19 = arith.constant dense<0.000000e+00> : vector<8x16xf32>
    %47 = tpu.matmul %46#0, %4, %cst_19 {dimension_numbers = #tpu.dot_dimension_numbers<[1], [0], [0], [1], [0, 0, 1, 1], [], []>} : vector<8x32xf32>, vector<32x16xf32>, vector<8x16xf32> -> vector<8x16xf32>
    %48 = vector.broadcast %15 : vector<1x16xf32> to vector<8x16xf32>
    %49 = arith.addf %47, %48 : vector<8x16xf32>
    %50 = vector.shape_cast %49 : vector<8x16xf32> to vector<1x8x16xf32>
    %51 = vector.extract_strided_slice %50 {offsets = [0, 0, 0], sizes = [1, 1, 16], strides = [1, 1, 1]} : vector<1x8x16xf32> to vector<1x1x16xf32>
    %52 = vector.extract_strided_slice %50 {offsets = [0, 1, 0], sizes = [1, 1, 16], strides = [1, 1, 1]} : vector<1x8x16xf32> to vector<1x1x16xf32>
    %53 = vector.extract_strided_slice %50 {offsets = [0, 2, 0], sizes = [1, 1, 16], strides = [1, 1, 1]} : vector<1x8x16xf32> to vector<1x1x16xf32>
    %54 = vector.extract_strided_slice %50 {offsets = [0, 3, 0], sizes = [1, 1, 16], strides = [1, 1, 1]} : vector<1x8x16xf32> to vector<1x1x16xf32>
    %55 = vector.extract_strided_slice %50 {offsets = [0, 4, 0], sizes = [1, 1, 16], strides = [1, 1, 1]} : vector<1x8x16xf32> to vector<1x1x16xf32>
    %56 = vector.extract_strided_slice %50 {offsets = [0, 5, 0], sizes = [1, 1, 16], strides = [1, 1, 1]} : vector<1x8x16xf32> to vector<1x1x16xf32>
    %57 = vector.extract_strided_slice %50 {offsets = [0, 6, 0], sizes = [1, 1, 16], strides = [1, 1, 1]} : vector<1x8x16xf32> to vector<1x1x16xf32>
    %58 = vector.extract_strided_slice %50 {offsets = [0, 7, 0], sizes = [1, 1, 16], strides = [1, 1, 1]} : vector<1x8x16xf32> to vector<1x1x16xf32>
    %59 = tpu.concatenate %51, %52, %53, %54, %55, %56, %57, %58 in 2 : vector<1x1x16xf32>, vector<1x1x16xf32>, vector<1x1x16xf32>, vector<1x1x16xf32>, vector<1x1x16xf32>, vector<1x1x16xf32>, vector<1x1x16xf32>, vector<1x1x16xf32> -> vector<1x1x128xf32>
    %c0_20 = arith.constant 0 : index
    %c0_21 = arith.constant 0 : index
    %c0_22 = arith.constant 0 : index
    %60 = vector.load %arg9[%c0_20, %c0_21, %c0_22] : memref<1x1x128xf32, #tpu.memory_space<vmem>>, vector<1x1x128xf32>
    tpu.vector_store %arg9[%c0_20, %c0_21, %c0_22], %59 {strides = array<i32>} : memref<1x1x128xf32, #tpu.memory_space<vmem>>, vector<1x1x128xf32>,
    %c0_23 = arith.constant 0 : index
    %c0_24 = arith.constant 0 : index
    %c0_25 = arith.constant 0 : index
    %61 = vector.load %arg10[%c0_23, %c0_24, %c0_25] : memref<1x8x256xf32, #tpu.memory_space<vmem>>, vector<1x8x256xf32>
    tpu.vector_store %arg10[%c0_23, %c0_24, %c0_25], %46#1 {strides = array<i32>} : memref<1x8x256xf32, #tpu.memory_space<vmem>>, vector<1x8x256xf32>,
    return
  }
  func.func @transform_0(%arg0: i32) -> (i32, i32, i32) {
    %c0_i32 = arith.constant 0 : i32
    %c0_i32_0 = arith.constant 0 : i32
    %c0_i32_1 = arith.constant 0 : i32
    return %arg0, %c0_i32, %c0_i32_0 : i32, i32, i32
  }
  func.func @transform_1(%arg0: i32) -> (i32, i32, i32) {
    %c0_i32 = arith.constant 0 : i32
    %c0_i32_0 = arith.constant 0 : i32
    %c0_i32_1 = arith.constant 0 : i32
    return %arg0, %c0_i32, %c0_i32_0 : i32, i32, i32
  }
  func.func @transform_2(%arg0: i32) -> (i32, i32, i32) {
    %c0_i32 = arith.constant 0 : i32
    %c0_i32_0 = arith.constant 0 : i32
    %c0_i32_1 = arith.constant 0 : i32
    return %arg0, %c0_i32, %c0_i32_0 : i32, i32, i32
  }
  func.func @transform_3(%arg0: i32) -> (i32, i32) {
    %c0_i32 = arith.constant 0 : i32
    %c0_i32_0 = arith.constant 0 : i32
    %c0_i32_1 = arith.constant 0 : i32
    return %c0_i32, %c0_i32_0 : i32, i32
  }
  func.func @transform_4(%arg0: i32) -> (i32, i32) {
    %c0_i32 = arith.constant 0 : i32
    %c0_i32_0 = arith.constant 0 : i32
    %c0_i32_1 = arith.constant 0 : i32
    return %c0_i32, %c0_i32_0 : i32, i32
  }
  func.func @transform_5(%arg0: i32) -> (i32, i32) {
    %c0_i32 = arith.constant 0 : i32
    %c0_i32_0 = arith.constant 0 : i32
    %c0_i32_1 = arith.constant 0 : i32
    return %c0_i32, %c0_i32_0 : i32, i32
  }
  func.func @transform_6(%arg0: i32) -> (i32, i32) {
    %c0_i32 = arith.constant 0 : i32
    %c0_i32_0 = arith.constant 0 : i32
    %c0_i32_1 = arith.constant 0 : i32
    return %c0_i32, %c0_i32_0 : i32, i32
  }
  func.func @transform_7(%arg0: i32) -> (i32, i32) {
    %c0_i32 = arith.constant 0 : i32
    %c0_i32_0 = arith.constant 0 : i32
    %c0_i32_1 = arith.constant 0 : i32
    return %c0_i32, %c0_i32_0 : i32, i32
  }
  func.func @transform_8(%arg0: i32) -> (i32, i32, i32) {
    %c0_i32 = arith.constant 0 : i32
    %c0_i32_0 = arith.constant 0 : i32
    %c0_i32_1 = arith.constant 0 : i32
    return %arg0, %c0_i32, %c0_i32_0 : i32, i32, i32
  }
  func.func @transform_9(%arg0: i32) -> (i32, i32, i32) {
    %c0_i32 = arith.constant 0 : i32
    %c0_i32_0 = arith.constant 0 : i32
    %c0_i32_1 = arith.constant 0 : i32
    return %arg0, %c0_i32, %c0_i32_0 : i32, i32, i32
  }
}

module attributes {stable_mosaic.version = 11 : i64} {
  func.func @_graph_kernel(%arg0: i32, %arg1: memref<1x8x16xf32, #tpu.memory_space<vmem>>, %arg2: memref<1x8x1xf32, #tpu.memory_space<vmem>>, %arg3: memref<1x1x256xf32, #tpu.memory_space<vmem>>, %arg4: memref<16x32xf32, #tpu.memory_space<vmem>>, %arg5: memref<32x1136xf32, #tpu.memory_space<vmem>>, %arg6: memref<256x512xf32, #tpu.memory_space<vmem>>, %arg7: memref<64x32xf32, #tpu.memory_space<vmem>>, %arg8: memref<8x256xf32, #tpu.memory_space<vmem>>, %arg9: memref<1x1x128xf32, #tpu.memory_space<vmem>>, %arg10: memref<1x8x256xf32, #tpu.memory_space<vmem>>) attributes {dimension_semantics = [#tpu.dimension_semantics<parallel>], iteration_bounds = array<i64: 2>, scalar_prefetch = 0 : i64, scratch_operands = 0 : i64, tpu.core_type = #tpu.core_type<tc>, window_params = [{transform_indices = @transform_0, window_bounds = array<i64: 1, 8, 16>}, {transform_indices = @transform_1, window_bounds = array<i64: 1, 8, 1>}, {transform_indices = @transform_2, window_bounds = array<i64: 1, 1, 256>}, {pipeline_mode = #tpu.pipeline_mode<synchronous>, transform_indices = @transform_3, window_bounds = array<i64: 16, 32>}, {pipeline_mode = #tpu.pipeline_mode<synchronous>, transform_indices = @transform_4, window_bounds = array<i64: 32, 1136>}, {pipeline_mode = #tpu.pipeline_mode<synchronous>, transform_indices = @transform_5, window_bounds = array<i64: 256, 512>}, {pipeline_mode = #tpu.pipeline_mode<synchronous>, transform_indices = @transform_6, window_bounds = array<i64: 64, 32>}, {pipeline_mode = #tpu.pipeline_mode<synchronous>, transform_indices = @transform_7, window_bounds = array<i64: 8, 256>}, {transform_indices = @transform_8, window_bounds = array<i64: 1, 1, 128>}, {transform_indices = @transform_9, window_bounds = array<i64: 1, 8, 256>}]} {
    %c0 = arith.constant 0 : index
    %c0_0 = arith.constant 0 : index
    %0 = vector.load %arg4[%c0, %c0_0] : memref<16x32xf32, #tpu.memory_space<vmem>>, vector<16x32xf32>
    %c0_1 = arith.constant 0 : index
    %c0_2 = arith.constant 0 : index
    %1 = vector.load %arg5[%c0_1, %c0_2] : memref<32x1136xf32, #tpu.memory_space<vmem>>, vector<32x1136xf32>
    %2 = vector.extract_strided_slice %1 {offsets = [0, 0], sizes = [32, 288], strides = [1, 1]} : vector<32x1136xf32> to vector<32x288xf32>
    %3 = vector.extract_strided_slice %1 {offsets = [0, 288], sizes = [32, 832], strides = [1, 1]} : vector<32x1136xf32> to vector<32x832xf32>
    %4 = vector.extract_strided_slice %1 {offsets = [0, 1120], sizes = [32, 16], strides = [1, 1]} : vector<32x1136xf32> to vector<32x16xf32>
    %c0_3 = arith.constant 0 : index
    %c0_4 = arith.constant 0 : index
    %5 = vector.load %arg6[%c0_3, %c0_4] : memref<256x512xf32, #tpu.memory_space<vmem>>, vector<256x512xf32>
    %c0_5 = arith.constant 0 : index
    %c0_6 = arith.constant 0 : index
    %6 = vector.load %arg7[%c0_5, %c0_6] : memref<64x32xf32, #tpu.memory_space<vmem>>, vector<64x32xf32>
    %c0_7 = arith.constant 0 : index
    %c0_8 = arith.constant 0 : index
    %7 = vector.load %arg8[%c0_7, %c0_8] : memref<8x256xf32, #tpu.memory_space<vmem>>, vector<8x256xf32>
    %8 = vector.extract_strided_slice %7 {offsets = [0, 0], sizes = [1, 32], strides = [1, 1]} : vector<8x256xf32> to vector<1x32xf32>
    %9 = vector.extract_strided_slice %7 {offsets = [1, 0], sizes = [1, 256], strides = [1, 1]} : vector<8x256xf32> to vector<1x256xf32>
    %10 = vector.extract_strided_slice %7 {offsets = [2, 0], sizes = [1, 256], strides = [1, 1]} : vector<8x256xf32> to vector<1x256xf32>
    %11 = vector.extract_strided_slice %7 {offsets = [3, 0], sizes = [1, 256], strides = [1, 1]} : vector<8x256xf32> to vector<1x256xf32>
    %12 = vector.extract_strided_slice %7 {offsets = [4, 0], sizes = [1, 256], strides = [1, 1]} : vector<8x256xf32> to vector<1x256xf32>
    %13 = vector.extract_strided_slice %7 {offsets = [5, 0], sizes = [1, 256], strides = [1, 1]} : vector<8x256xf32> to vector<1x256xf32>
    %14 = vector.extract_strided_slice %7 {offsets = [6, 0], sizes = [1, 32], strides = [1, 1]} : vector<8x256xf32> to vector<1x32xf32>
    %15 = vector.extract_strided_slice %7 {offsets = [7, 0], sizes = [1, 16], strides = [1, 1]} : vector<8x256xf32> to vector<1x16xf32>
    %c0_9 = arith.constant 0 : index
    %c0_10 = arith.constant 0 : index
    %c0_11 = arith.constant 0 : index
    %16 = vector.load %arg2[%c0_9, %c0_10, %c0_11] : memref<1x8x1xf32, #tpu.memory_space<vmem>>, vector<1x8x1xf32>
    %c0_12 = arith.constant 0 : index
    %c0_13 = arith.constant 0 : index
    %c0_14 = arith.constant 0 : index
    %17 = vector.load %arg3[%c0_12, %c0_13, %c0_14] : memref<1x1x256xf32, #tpu.memory_space<vmem>>, vector<1x1x256xf32>
    %18 = vector.broadcast %16 : vector<1x8x1xf32> to vector<1x8x256xf32>
    %19 = vector.broadcast %17 : vector<1x1x256xf32> to vector<1x8x256xf32>
    %20 = arith.mulf %18, %19 : vector<1x8x256xf32>
    %c0_15 = arith.constant 0 : index
    %c0_16 = arith.constant 0 : index
    %c0_17 = arith.constant 0 : index
    %21 = vector.load %arg1[%c0_15, %c0_16, %c0_17] : memref<1x8x16xf32, #tpu.memory_space<vmem>>, vector<1x8x16xf32>
    %22 = vector.shape_cast %21 : vector<1x8x16xf32> to vector<8x16xf32>
    %cst = arith.constant dense<0.000000e+00> : vector<8x32xf32>
    %23 = tpu.matmul %22, %0, %cst {dimension_numbers = #tpu.dot_dimension_numbers<[1], [0], [0], [1], [0, 0, 1, 1], [], []>} : vector<8x16xf32>, vector<16x32xf32>, vector<8x32xf32> -> vector<8x32xf32>
    %24 = vector.broadcast %8 : vector<1x32xf32> to vector<8x32xf32>
    %25 = arith.addf %23, %24 : vector<8x32xf32>
    %cst_18 = arith.constant dense<0.000000e+00> : vector<8x288xf32>
    %26 = tpu.matmul %25, %2, %cst_18 {dimension_numbers = #tpu.dot_dimension_numbers<[1], [0], [0], [1], [0, 0, 1, 1], [], []>} : vector<8x32xf32>, vector<32x288xf32>, vector<8x288xf32> -> vector<8x288xf32>
    %27 = vector.extract_strided_slice %26 {offsets = [0, 0], sizes = [8, 256], strides = [1, 1]} : vector<8x288xf32> to vector<8x256xf32>
    %28 = vector.shape_cast %27 : vector<8x256xf32> to vector<1x8x256xf32>
    %29 = vector.extract_strided_slice %26 {offsets = [0, 256], sizes = [8, 32], strides = [1, 1]} : vector<8x288xf32> to vector<8x32xf32>
    %30 = vector.shape_cast %29 : vector<8x32xf32> to vector<1x8x32xf32>
    %31 = vector.extract_strided_slice %30 {offsets = [0, 0, 0], sizes = [1, 1, 32], strides = [1, 1, 1]} : vector<1x8x32xf32> to vector<1x1x32xf32>
    %32 = vector.extract_strided_slice %30 {offsets = [0, 1, 0], sizes = [1, 1, 32], strides = [1, 1, 1]} : vector<1x8x32xf32> to vector<1x1x32xf32>
    %33 = vector.extract_strided_slice %30 {offsets = [0, 2, 0], sizes = [1, 1, 32], strides = [1, 1, 1]} : vector<1x8x32xf32> to vector<1x1x32xf32>
    %34 = vector.extract_strided_slice %30 {offsets = [0, 3, 0], sizes = [1, 1, 32], strides = [1, 1, 1]} : vector<1x8x32xf32> to vector<1x1x32xf32>
    %35 = vector.extract_strided_slice %30 {offsets = [0, 4, 0], sizes = [1, 1, 32], strides = [1, 1, 1]} : vector<1x8x32xf32> to vector<1x1x32xf32>
    %36 = vector.extract_strided_slice %30 {offsets = [0, 5, 0], sizes = [1, 1, 32], strides = [1, 1, 1]} : vector<1x8x32xf32> to vector<1x1x32xf32>
    %37 = vector.extract_strided_slice %30 {offsets = [0, 6, 0], sizes = [1, 1, 32], strides = [1, 1, 1]} : vector<1x8x32xf32> to vector<1x1x32xf32>
    %38 = vector.extract_strided_slice %30 {offsets = [0, 7, 0], sizes = [1, 1, 32], strides = [1, 1, 1]} : vector<1x8x32xf32> to vector<1x1x32xf32>
    %39 = tpu.concatenate %31, %32, %33, %34, %35, %36, %37, %38 in 2 : vector<1x1x32xf32>, vector<1x1x32xf32>, vector<1x1x32xf32>, vector<1x1x32xf32>, vector<1x1x32xf32>, vector<1x1x32xf32>, vector<1x1x32xf32>, vector<1x1x32xf32> -> vector<1x1x256xf32>
    %40 = vector.broadcast %39 : vector<1x1x256xf32> to vector<1x8x256xf32>
    %41 = arith.addf %28, %40 : vector<1x8x256xf32>
    %42 = vector.shape_cast %9 : vector<1x256xf32> to vector<1x1x256xf32>
    %43 = vector.broadcast %42 : vector<1x1x256xf32> to vector<1x8x256xf32>
    %44 = arith.addf %41, %43 : vector<1x8x256xf32>
    %c0_i32 = arith.constant 0 : i32
    %c3_i32 = arith.constant 3 : i32
    %45 = arith.addi %c0_i32, %c3_i32 : i32
    %c1_i32 = arith.constant 1 : i32
    %46:2 = scf.for %arg11 = %c0_i32 to %45 step %c1_i32 iter_args(%arg12 = %25, %arg13 = %44) -> (vector<8x32xf32>, vector<1x8x256xf32>)  : i32 {
      %cst_26 = arith.constant dense<0.000000e+00> : vector<8x832xf32>
      %62 = tpu.matmul %arg12, %3, %cst_26 {dimension_numbers = #tpu.dot_dimension_numbers<[1], [0], [0], [1], [0, 0, 1, 1], [], []>} : vector<8x32xf32>, vector<32x832xf32>, vector<8x832xf32> -> vector<8x832xf32>
      %63 = vector.extract_strided_slice %62 {offsets = [0, 0], sizes = [8, 256], strides = [1, 1]} : vector<8x832xf32> to vector<8x256xf32>
      %64 = vector.shape_cast %63 : vector<8x256xf32> to vector<1x8x256xf32>
      %65 = vector.extract_strided_slice %62 {offsets = [0, 256], sizes = [8, 256], strides = [1, 1]} : vector<8x832xf32> to vector<8x256xf32>
      %66 = vector.shape_cast %65 : vector<8x256xf32> to vector<1x8x256xf32>
      %67 = vector.extract_strided_slice %62 {offsets = [0, 512], sizes = [8, 256], strides = [1, 1]} : vector<8x832xf32> to vector<8x256xf32>
      %68 = vector.shape_cast %67 : vector<8x256xf32> to vector<1x8x256xf32>
      %69 = vector.extract_strided_slice %62 {offsets = [0, 768], sizes = [8, 32], strides = [1, 1]} : vector<8x832xf32> to vector<8x32xf32>
      %70 = vector.shape_cast %69 : vector<8x32xf32> to vector<1x8x32xf32>
      %71 = vector.extract_strided_slice %70 {offsets = [0, 0, 0], sizes = [1, 1, 32], strides = [1, 1, 1]} : vector<1x8x32xf32> to vector<1x1x32xf32>
      %72 = vector.extract_strided_slice %70 {offsets = [0, 1, 0], sizes = [1, 1, 32], strides = [1, 1, 1]} : vector<1x8x32xf32> to vector<1x1x32xf32>
      %73 = vector.extract_strided_slice %70 {offsets = [0, 2, 0], sizes = [1, 1, 32], strides = [1, 1, 1]} : vector<1x8x32xf32> to vector<1x1x32xf32>
      %74 = vector.extract_strided_slice %70 {offsets = [0, 3, 0], sizes = [1, 1, 32], strides = [1, 1, 1]} : vector<1x8x32xf32> to vector<1x1x32xf32>
      %75 = vector.extract_strided_slice %70 {offsets = [0, 4, 0], sizes = [1, 1, 32], strides = [1, 1, 1]} : vector<1x8x32xf32> to vector<1x1x32xf32>
      %76 = vector.extract_strided_slice %70 {offsets = [0, 5, 0], sizes = [1, 1, 32], strides = [1, 1, 1]} : vector<1x8x32xf32> to vector<1x1x32xf32>
      %77 = vector.extract_strided_slice %70 {offsets = [0, 6, 0], sizes = [1, 1, 32], strides = [1, 1, 1]} : vector<1x8x32xf32> to vector<1x1x32xf32>
      %78 = vector.extract_strided_slice %70 {offsets = [0, 7, 0], sizes = [1, 1, 32], strides = [1, 1, 1]} : vector<1x8x32xf32> to vector<1x1x32xf32>
      %79 = tpu.concatenate %71, %72, %73, %74, %75, %76, %77, %78 in 2 : vector<1x1x32xf32>, vector<1x1x32xf32>, vector<1x1x32xf32>, vector<1x1x32xf32>, vector<1x1x32xf32>, vector<1x1x32xf32>, vector<1x1x32xf32>, vector<1x1x32xf32> -> vector<1x1x256xf32>
      %80 = vector.extract_strided_slice %62 {offsets = [0, 800], sizes = [8, 32], strides = [1, 1]} : vector<8x832xf32> to vector<8x32xf32>
      %81 = vector.shape_cast %80 : vector<8x32xf32> to vector<1x8x32xf32>
      %82 = vector.extract_strided_slice %81 {offsets = [0, 0, 0], sizes = [1, 1, 32], strides = [1, 1, 1]} : vector<1x8x32xf32> to vector<1x1x32xf32>
      %83 = vector.extract_strided_slice %81 {offsets = [0, 1, 0], sizes = [1, 1, 32], strides = [1, 1, 1]} : vector<1x8x32xf32> to vector<1x1x32xf32>
      %84 = vector.extract_strided_slice %81 {offsets = [0, 2, 0], sizes = [1, 1, 32], strides = [1, 1, 1]} : vector<1x8x32xf32> to vector<1x1x32xf32>
      %85 = vector.extract_strided_slice %81 {offsets = [0, 3, 0], sizes = [1, 1, 32], strides = [1, 1, 1]} : vector<1x8x32xf32> to vector<1x1x32xf32>
      %86 = vector.extract_strided_slice %81 {offsets = [0, 4, 0], sizes = [1, 1, 32], strides = [1, 1, 1]} : vector<1x8x32xf32> to vector<1x1x32xf32>
      %87 = vector.extract_strided_slice %81 {offsets = [0, 5, 0], sizes = [1, 1, 32], strides = [1, 1, 1]} : vector<1x8x32xf32> to vector<1x1x32xf32>
      %88 = vector.extract_strided_slice %81 {offsets = [0, 6, 0], sizes = [1, 1, 32], strides = [1, 1, 1]} : vector<1x8x32xf32> to vector<1x1x32xf32>
      %89 = vector.extract_strided_slice %81 {offsets = [0, 7, 0], sizes = [1, 1, 32], strides = [1, 1, 1]} : vector<1x8x32xf32> to vector<1x1x32xf32>
      %90 = tpu.concatenate %82, %83, %84, %85, %86, %87, %88, %89 in 2 : vector<1x1x32xf32>, vector<1x1x32xf32>, vector<1x1x32xf32>, vector<1x1x32xf32>, vector<1x1x32xf32>, vector<1x1x32xf32>, vector<1x1x32xf32>, vector<1x1x32xf32> -> vector<1x1x256xf32>
      %91 = vector.shape_cast %arg13 : vector<1x8x256xf32> to vector<8x256xf32>
      %cst_27 = arith.constant dense<0.000000e+00> : vector<8x512xf32>
      %92 = tpu.matmul %91, %5, %cst_27 {dimension_numbers = #tpu.dot_dimension_numbers<[1], [0], [0], [1], [0, 0, 1, 1], [], []>} : vector<8x256xf32>, vector<256x512xf32>, vector<8x512xf32> -> vector<8x512xf32>
      %93 = vector.extract_strided_slice %92 {offsets = [0, 0], sizes = [8, 256], strides = [1, 1]} : vector<8x512xf32> to vector<8x256xf32>
      %94 = vector.shape_cast %93 : vector<8x256xf32> to vector<1x8x256xf32>
      %95 = vector.extract_strided_slice %92 {offsets = [0, 256], sizes = [8, 256], strides = [1, 1]} : vector<8x512xf32> to vector<8x256xf32>
      %96 = vector.shape_cast %95 : vector<8x256xf32> to vector<1x8x256xf32>
      %97 = vector.broadcast %79 : vector<1x1x256xf32> to vector<1x8x256xf32>
      %98 = arith.addf %64, %97 : vector<1x8x256xf32>
      %99 = arith.addf %98, %94 : vector<1x8x256xf32>
      %100 = vector.shape_cast %10 : vector<1x256xf32> to vector<1x1x256xf32>
      %101 = vector.broadcast %100 : vector<1x1x256xf32> to vector<1x8x256xf32>
      %102 = arith.addf %99, %101 : vector<1x8x256xf32>
      %103 = arith.mulf %102, %20 : vector<1x8x256xf32>
      %104 = vector.broadcast %90 : vector<1x1x256xf32> to vector<1x8x256xf32>
      %105 = arith.addf %66, %104 : vector<1x8x256xf32>
      %106 = arith.addf %105, %96 : vector<1x8x256xf32>
      %107 = vector.shape_cast %11 : vector<1x256xf32> to vector<1x1x256xf32>
      %108 = vector.broadcast %107 : vector<1x1x256xf32> to vector<1x8x256xf32>
      %109 = arith.addf %106, %108 : vector<1x8x256xf32>
      %110 = arith.mulf %109, %20 : vector<1x8x256xf32>
      %111 = vector.shape_cast %12 : vector<1x256xf32> to vector<1x1x256xf32>
      %112 = vector.broadcast %111 : vector<1x1x256xf32> to vector<1x8x256xf32>
      %113 = arith.addf %110, %112 : vector<1x8x256xf32>
      %cst_28 = arith.constant dense<0xFF800000> : vector<1x256xf32>
      %114 = vector.multi_reduction <maximumf>, %113, %cst_28 [1] : vector<1x8x256xf32> to vector<1x256xf32>
      %115 = vector.shape_cast %114 : vector<1x256xf32> to vector<1x1x256xf32>
      %116 = vector.broadcast %115 : vector<1x1x256xf32> to vector<1x8x256xf32>
      %117 = arith.subf %113, %116 : vector<1x8x256xf32>
      %118 = math.exp %117 : vector<1x8x256xf32>
      %119 = vector.broadcast %16 : vector<1x8x1xf32> to vector<1x8x256xf32>
      %120 = arith.mulf %119, %68 : vector<1x8x256xf32>
      %121 = vector.shape_cast %13 : vector<1x256xf32> to vector<1x1x256xf32>
      %122 = vector.broadcast %121 : vector<1x1x256xf32> to vector<1x8x256xf32>
      %123 = arith.addf %120, %122 : vector<1x8x256xf32>
      %124 = arith.mulf %118, %123 : vector<1x8x256xf32>
      %cst_29 = arith.constant dense<0.000000e+00> : vector<1x256xf32>
      %125 = vector.multi_reduction <add>, %124, %cst_29 [1] : vector<1x8x256xf32> to vector<1x256xf32>
      %cst_30 = arith.constant dense<0.000000e+00> : vector<1x256xf32>
      %126 = vector.multi_reduction <add>, %118, %cst_30 [1] : vector<1x8x256xf32> to vector<1x256xf32>
      %127 = arith.divf %125, %126 : vector<1x256xf32>
      %128 = arith.negf %127 : vector<1x256xf32>
      %129 = math.exp %128 : vector<1x256xf32>
      %cst_31 = arith.constant 1.000000e+00 : f32
      %130 = vector.broadcast %cst_31 : f32 to vector<1x256xf32>
      %131 = arith.addf %130, %129 : vector<1x256xf32>
      %132 = arith.divf %130, %131 : vector<1x256xf32>
      %133 = vector.extract_strided_slice %132 {offsets = [0, 0], sizes = [1, 32], strides = [1, 1]} : vector<1x256xf32> to vector<1x32xf32>
      %134 = vector.shape_cast %133 : vector<1x32xf32> to vector<1x1x32xf32>
      %135 = vector.extract_strided_slice %132 {offsets = [0, 32], sizes = [1, 32], strides = [1, 1]} : vector<1x256xf32> to vector<1x32xf32>
      %136 = vector.shape_cast %135 : vector<1x32xf32> to vector<1x1x32xf32>
      %137 = vector.extract_strided_slice %132 {offsets = [0, 64], sizes = [1, 32], strides = [1, 1]} : vector<1x256xf32> to vector<1x32xf32>
      %138 = vector.shape_cast %137 : vector<1x32xf32> to vector<1x1x32xf32>
      %139 = vector.extract_strided_slice %132 {offsets = [0, 96], sizes = [1, 32], strides = [1, 1]} : vector<1x256xf32> to vector<1x32xf32>
      %140 = vector.shape_cast %139 : vector<1x32xf32> to vector<1x1x32xf32>
      %141 = vector.extract_strided_slice %132 {offsets = [0, 128], sizes = [1, 32], strides = [1, 1]} : vector<1x256xf32> to vector<1x32xf32>
      %142 = vector.shape_cast %141 : vector<1x32xf32> to vector<1x1x32xf32>
      %143 = vector.extract_strided_slice %132 {offsets = [0, 160], sizes = [1, 32], strides = [1, 1]} : vector<1x256xf32> to vector<1x32xf32>
      %144 = vector.shape_cast %143 : vector<1x32xf32> to vector<1x1x32xf32>
      %145 = vector.extract_strided_slice %132 {offsets = [0, 192], sizes = [1, 32], strides = [1, 1]} : vector<1x256xf32> to vector<1x32xf32>
      %146 = vector.shape_cast %145 : vector<1x32xf32> to vector<1x1x32xf32>
      %147 = vector.extract_strided_slice %132 {offsets = [0, 224], sizes = [1, 32], strides = [1, 1]} : vector<1x256xf32> to vector<1x32xf32>
      %148 = vector.shape_cast %147 : vector<1x32xf32> to vector<1x1x32xf32>
      %149 = tpu.concatenate %134, %136, %138, %140, %142, %144, %146, %148 in 1 : vector<1x1x32xf32>, vector<1x1x32xf32>, vector<1x1x32xf32>, vector<1x1x32xf32>, vector<1x1x32xf32>, vector<1x1x32xf32>, vector<1x1x32xf32>, vector<1x1x32xf32> -> vector<1x8x32xf32>
      %150 = vector.shape_cast %149 : vector<1x8x32xf32> to vector<8x32xf32>
      %151 = vector.extract_strided_slice %123 {offsets = [0, 0, 0], sizes = [1, 8, 32], strides = [1, 1, 1]} : vector<1x8x256xf32> to vector<1x8x32xf32>
      %152 = vector.shape_cast %151 : vector<1x8x32xf32> to vector<8x32xf32>
      %153 = tpu.concatenate %152, %150 in 1 : vector<8x32xf32>, vector<8x32xf32> -> vector<8x64xf32>
      %cst_32 = arith.constant dense<0.000000e+00> : vector<8x32xf32>
      %154 = tpu.matmul %153, %6, %cst_32 {dimension_numbers = #tpu.dot_dimension_numbers<[1], [0], [0], [1], [0, 0, 1, 1], [], []>} : vector<8x64xf32>, vector<64x32xf32>, vector<8x32xf32> -> vector<8x32xf32>
      %155 = vector.broadcast %14 : vector<1x32xf32> to vector<8x32xf32>
      %156 = arith.addf %154, %155 : vector<8x32xf32>
      scf.yield %156, %103 : vector<8x32xf32>, vector<1x8x256xf32>
    }
    %cst_19 = arith.constant dense<0.000000e+00> : vector<8x16xf32>
    %47 = tpu.matmul %46#0, %4, %cst_19 {dimension_numbers = #tpu.dot_dimension_numbers<[1], [0], [0], [1], [0, 0, 1, 1], [], []>} : vector<8x32xf32>, vector<32x16xf32>, vector<8x16xf32> -> vector<8x16xf32>
    %48 = vector.broadcast %15 : vector<1x16xf32> to vector<8x16xf32>
    %49 = arith.addf %47, %48 : vector<8x16xf32>
    %50 = vector.shape_cast %49 : vector<8x16xf32> to vector<1x8x16xf32>
    %51 = vector.extract_strided_slice %50 {offsets = [0, 0, 0], sizes = [1, 1, 16], strides = [1, 1, 1]} : vector<1x8x16xf32> to vector<1x1x16xf32>
    %52 = vector.extract_strided_slice %50 {offsets = [0, 1, 0], sizes = [1, 1, 16], strides = [1, 1, 1]} : vector<1x8x16xf32> to vector<1x1x16xf32>
    %53 = vector.extract_strided_slice %50 {offsets = [0, 2, 0], sizes = [1, 1, 16], strides = [1, 1, 1]} : vector<1x8x16xf32> to vector<1x1x16xf32>
    %54 = vector.extract_strided_slice %50 {offsets = [0, 3, 0], sizes = [1, 1, 16], strides = [1, 1, 1]} : vector<1x8x16xf32> to vector<1x1x16xf32>
    %55 = vector.extract_strided_slice %50 {offsets = [0, 4, 0], sizes = [1, 1, 16], strides = [1, 1, 1]} : vector<1x8x16xf32> to vector<1x1x16xf32>
    %56 = vector.extract_strided_slice %50 {offsets = [0, 5, 0], sizes = [1, 1, 16], strides = [1, 1, 1]} : vector<1x8x16xf32> to vector<1x1x16xf32>
    %57 = vector.extract_strided_slice %50 {offsets = [0, 6, 0], sizes = [1, 1, 16], strides = [1, 1, 1]} : vector<1x8x16xf32> to vector<1x1x16xf32>
    %58 = vector.extract_strided_slice %50 {offsets = [0, 7, 0], sizes = [1, 1, 16], strides = [1, 1, 1]} : vector<1x8x16xf32> to vector<1x1x16xf32>
    %59 = tpu.concatenate %51, %52, %53, %54, %55, %56, %57, %58 in 2 : vector<1x1x16xf32>, vector<1x1x16xf32>, vector<1x1x16xf32>, vector<1x1x16xf32>, vector<1x1x16xf32>, vector<1x1x16xf32>, vector<1x1x16xf32>, vector<1x1x16xf32> -> vector<1x1x128xf32>
    %c0_20 = arith.constant 0 : index
    %c0_21 = arith.constant 0 : index
    %c0_22 = arith.constant 0 : index
    %60 = vector.load %arg9[%c0_20, %c0_21, %c0_22] : memref<1x1x128xf32, #tpu.memory_space<vmem>>, vector<1x1x128xf32>
    tpu.vector_store %arg9[%c0_20, %c0_21, %c0_22], %59 {strides = array<i32>} : memref<1x1x128xf32, #tpu.memory_space<vmem>>, vector<1x1x128xf32>,
    %c0_23 = arith.constant 0 : index
    %c0_24 = arith.constant 0 : index
    %c0_25 = arith.constant 0 : index
    %61 = vector.load %arg10[%c0_23, %c0_24, %c0_25] : memref<1x8x256xf32, #tpu.memory_space<vmem>>, vector<1x8x256xf32>
    tpu.vector_store %arg10[%c0_23, %c0_24, %c0_25], %46#1 {strides = array<i32>} : memref<1x8x256xf32, #tpu.memory_space<vmem>>, vector<1x8x256xf32>,
    return
  }
  func.func @transform_0(%arg0: i32) -> (i32, i32, i32) {
    %c0_i32 = arith.constant 0 : i32
    %c0_i32_0 = arith.constant 0 : i32
    %c0_i32_1 = arith.constant 0 : i32
    return %arg0, %c0_i32, %c0_i32_0 : i32, i32, i32
  }
  func.func @transform_1(%arg0: i32) -> (i32, i32, i32) {
    %c0_i32 = arith.constant 0 : i32
    %c0_i32_0 = arith.constant 0 : i32
    %c0_i32_1 = arith.constant 0 : i32
    return %arg0, %c0_i32, %c0_i32_0 : i32, i32, i32
  }
  func.func @transform_2(%arg0: i32) -> (i32, i32, i32) {
    %c0_i32 = arith.constant 0 : i32
    %c0_i32_0 = arith.constant 0 : i32
    %c0_i32_1 = arith.constant 0 : i32
    return %arg0, %c0_i32, %c0_i32_0 : i32, i32, i32
  }
  func.func @transform_3(%arg0: i32) -> (i32, i32) {
    %c0_i32 = arith.constant 0 : i32
    %c0_i32_0 = arith.constant 0 : i32
    %c0_i32_1 = arith.constant 0 : i32
    return %c0_i32, %c0_i32_0 : i32, i32
  }
  func.func @transform_4(%arg0: i32) -> (i32, i32) {
    %c0_i32 = arith.constant 0 : i32
    %c0_i32_0 = arith.constant 0 : i32
    %c0_i32_1 = arith.constant 0 : i32
    return %c0_i32, %c0_i32_0 : i32, i32
  }
  func.func @transform_5(%arg0: i32) -> (i32, i32) {
    %c0_i32 = arith.constant 0 : i32
    %c0_i32_0 = arith.constant 0 : i32
    %c0_i32_1 = arith.constant 0 : i32
    return %c0_i32, %c0_i32_0 : i32, i32
  }
  func.func @transform_6(%arg0: i32) -> (i32, i32) {
    %c0_i32 = arith.constant 0 : i32
    %c0_i32_0 = arith.constant 0 : i32
    %c0_i32_1 = arith.constant 0 : i32
    return %c0_i32, %c0_i32_0 : i32, i32
  }
  func.func @transform_7(%arg0: i32) -> (i32, i32) {
    %c0_i32 = arith.constant 0 : i32
    %c0_i32_0 = arith.constant 0 : i32
    %c0_i32_1 = arith.constant 0 : i32
    return %c0_i32, %c0_i32_0 : i32, i32
  }
  func.func @transform_8(%arg0: i32) -> (i32, i32, i32) {
    %c0_i32 = arith.constant 0 : i32
    %c0_i32_0 = arith.constant 0 : i32
    %c0_i32_1 = arith.constant 0 : i32
    return %arg0, %c0_i32, %c0_i32_0 : i32, i32, i32
  }
  func.func @transform_9(%arg0: i32) -> (i32, i32, i32) {
    %c0_i32 = arith.constant 0 : i32
    %c0_i32_0 = arith.constant 0 : i32
    %c0_i32_1 = arith.constant 0 : i32
    return %arg0, %c0_i32, %c0_i32_0 : i32, i32, i32
  }
}

</mosaic_0001>

<llo_original>
// kernel: tpu_custom_call.1
$region0: #{tpu_custom_call.1}
  #allocation0 [shape = 'u32[]', space=smem, size = 0x4, offset = 0x4, fixed_abs, tag = 'smem constant byte address 0x4 - core index']
  #allocation1 [shape = 'u32[72,128]{1,0:T(1,128)}', space=vmem, size = 0x9000, scoped, tag = 'internal scratch']
  %s0 = inlined_call_operand.vmem [shape: f32[2,8,16], index: 0, kind: input, shape index: {}]
  %s1 = inlined_call_operand.vmem [shape: f32[2,8,1], index: 1, kind: input, shape index: {}]
  %s2 = inlined_call_operand.vmem [shape: f32[2,1,256], index: 2, kind: input, shape index: {}]
  %s3 = inlined_call_operand.vmem [shape: f32[16,32], index: 3, kind: input, shape index: {}]
  %s4 = inlined_call_operand.hbm [shape: f32[32,1136], index: 4, kind: input, shape index: {}]
  %s5 = inlined_call_operand.hbm [shape: f32[256,512], index: 5, kind: input, shape index: {}]
  %s6 = inlined_call_operand.vmem [shape: f32[64,32], index: 6, kind: input, shape index: {}]
  %s7 = inlined_call_operand.vmem [shape: f32[8,256], index: 7, kind: input, shape index: {}]
  %s8 = inlined_call_operand.hbm [shape: f32[2,1,128], index: 8, kind: output, shape index: {0}]
  %s9 = inlined_call_operand.hbm [shape: f32[2,8,256], index: 9, kind: output, shape index: {1}]
  %10 = xla_tuple %s8, %s9
  %s11 = sld [smem:[#allocation0]]
  $region88: #{tpu_custom_call.1} parent=0
    _
  %s13 = ssub.s32 1, %s11
  %s14 = scalar_select 0, %s13, %s11
  $region1: #{tpu_custom_call.1} parent=0
    #allocation2 [shape = 'u8[147456]{0}', space=vmem, size = 0x24000, scoped, tag = 'input window, operand 4, single buffered']
    #allocation3 [shape = 's32[2]{0}', space=sflag, size = 0x8, scoped, tag = 'scoped memory for tpu_custom_call.1']
    #allocation4 [shape = 's32[2]{0}', space=sflag, size = 0x8, scoped, tag = 'scoped memory for tpu_custom_call.1']
    #allocation5 [shape = 'u8[524288]{0}', space=vmem, size = 0x80000, scoped, tag = 'input window, operand 5, single buffered']
    #allocation6 [shape = 's32[1]{0}', space=sflag, size = 0x4, scoped, tag = 'scoped memory for tpu_custom_call.1']
    #allocation7 [shape = 'u8[1024]{0}', space=vmem, size = 0x400, scoped, tag = 'output window, operand 0']
    #allocation8 [shape = 'u8[8192]{0}', space=vmem, size = 0x2000, scoped, tag = 'output window, operand 1, single buffered']
    #allocation9 [shape = 's32[1]{0}', space=sflag, size = 0x4, scoped, tag = 'scoped memory for tpu_custom_call.1']
    %15 = vsyncpa [#allocation3], 0
    %16 = vsyncpa [#allocation6], 0
    %17 = vsyncpa [#allocation4], 0
    %s18 = scalar_lea.sflag [#allocation4], 1
    %19 = vsyncpa %s18, 0
    %20 = vsyncpa [#allocation9], 0
    loop: start=0, step=1, limit=4
    $region2: #{tpu_custom_call.1} parent=1 // loop_pre_header
      _
    $region3: #{tpu_custom_call.1} parent=1 // loop_header
      %s22 = sphi 0, %s26
      %p23 = scmp.ge.s32.totalorder %s22, 4
      %s32 = sphi 0, %s34
      %s35 = sphi 0, %s32
      %s36 = sphi 0, %s35
      %s52 = sphi 0, %s36
      %s58 = sphi 0, %s60
      %s61 = sphi 0, %s58
      %s62 = sphi 0, %s61
      %s78 = sphi 0, %s62
      %s84 = sphi 0, %s86
      %s87 = sphi 0, %s84
      %s88 = sphi 0, %s87
      %s104 = sphi 0, %s88
      %s108 = sphi 0, %s108
      %s110 = sphi 0, %s108
      %s111 = sphi 0, %s110
      %s125 = sphi 0, %s111
      %s129 = sphi 0, %s129
      %s131 = sphi 0, %s129
      %s132 = sphi 0, %s131
      %s146 = sphi 0, %s132
      %s150 = sphi 0, %s150
      %s152 = sphi 0, %s150
      %s153 = sphi 0, %s152
      %s167 = sphi 0, %s153
      %s171 = sphi 0, %s171
      %s173 = sphi 0, %s171
      %s174 = sphi 0, %s173
      %s188 = sphi 0, %s174
      %s192 = sphi 0, %s192
      %s194 = sphi 0, %s192
      %s195 = sphi 0, %s194
      %s209 = sphi 0, %s195
      %s215 = sphi 0, %s217
      %s218 = sphi 0, %s215
      %s219 = sphi 0, %s218
      %s235 = sphi 0, %s219
      %s241 = sphi 0, %s243
      %s244 = sphi 0, %s241
      %s245 = sphi 0, %s244
      %s261 = sphi 0, %s245
    $region4: #{tpu_custom_call.1} parent=1 // loop_header_branch
      %25 = sbr.rel (%p23) target = $region8
    $region5: #{tpu_custom_call.1} parent=1 // loop_body
      %s27 = ssub.s32 %s22, 1
      %s28 = ssub.s32 %s22, 2
      %s29 = sadd.s32 %s22, 1
      %s30 = ssub.s32 %s22, %s29
      %p31 = scmp.eq.s32.totalorder %s30, 0
      %s33 = sadd.s32 %s32, 1
      %s34 = scalar_select %p31, %s32, %s33
      %p37 = pneg %p31
      %p38 = scmp.eq.s32.totalorder %s22, 1
      %p39 = por %p37, %p38
      %p40 = scmp.ne.s32.totalorder %s32, %s35
      %p41 = scmp.eq.s32.totalorder %s22, 0
      %p42 = por %p40, %p41
      %p43 = scmp.ne.s32.totalorder %s32, %s35
      %p44 = scmp.eq.s32.totalorder %s27, 1
      %p45 = por %p43, %p44
      %p46 = scmp.ne.s32.totalorder %s35, %s36
      %p47 = scmp.eq.s32.totalorder %s27, 0
      %p48 = por %p46, %p47
      %p49 = scmp.ne.s32.totalorder %s35, %s36
      %p50 = scmp.eq.s32.totalorder %s28, 1
      %p51 = por %p49, %p50
      %p53 = scmp.ne.s32.totalorder %s36, %s52
      %p54 = scmp.eq.s32.totalorder %s28, 0
      %p55 = por %p53, %p54
      %s56 = ssub.s32 %s22, %s29
      %p57 = scmp.eq.s32.totalorder %s56, 0
      %s59 = sadd.s32 %s58, 1
      %s60 = scalar_select %p57, %s58, %s59
      %p63 = pneg %p57
      %p64 = scmp.eq.s32.totalorder %s22, 1
      %p65 = por %p63, %p64
      %p66 = scmp.ne.s32.totalorder %s58, %s61
      %p67 = scmp.eq.s32.totalorder %s22, 0
      %p68 = por %p66, %p67
      %p69 = scmp.ne.s32.totalorder %s58, %s61
      %p70 = scmp.eq.s32.totalorder %s27, 1
      %p71 = por %p69, %p70
      %p72 = scmp.ne.s32.totalorder %s61, %s62
      %p73 = scmp.eq.s32.totalorder %s27, 0
      %p74 = por %p72, %p73
      %p75 = scmp.ne.s32.totalorder %s61, %s62
      %p76 = scmp.eq.s32.totalorder %s28, 1
      %p77 = por %p75, %p76
      %p79 = scmp.ne.s32.totalorder %s62, %s78
      %p80 = scmp.eq.s32.totalorder %s28, 0
      %p81 = por %p79, %p80
      %s82 = ssub.s32 %s22, %s29
      %p83 = scmp.eq.s32.totalorder %s82, 0
      %s85 = sadd.s32 %s84, 1
      %s86 = scalar_select %p83, %s84, %s85
      %p89 = pneg %p83
      %p90 = scmp.eq.s32.totalorder %s22, 1
      %p91 = por %p89, %p90
      %p92 = scmp.ne.s32.totalorder %s84, %s87
      %p93 = scmp.eq.s32.totalorder %s22, 0
      %p94 = por %p92, %p93
      %p95 = scmp.ne.s32.totalorder %s84, %s87
      %p96 = scmp.eq.s32.totalorder %s27, 1
      %p97 = por %p95, %p96
      %p98 = scmp.ne.s32.totalorder %s87, %s88
      %p99 = scmp.eq.s32.totalorder %s27, 0
      %p100 = por %p98, %p99
      %p101 = scmp.ne.s32.totalorder %s87, %s88
      %p102 = scmp.eq.s32.totalorder %s28, 1
      %p103 = por %p101, %p102
      %p105 = scmp.ne.s32.totalorder %s88, %s104
      %p106 = scmp.eq.s32.totalorder %s28, 0
      %p107 = por %p105, %p106
      %s109 = sadd.s32 %s108, 1
      %p112 = scmp.eq.s32.totalorder %s22, 1
      %p113 = scmp.ne.s32.totalorder %s108, %s110
      %p114 = scmp.eq.s32.totalorder %s22, 0
      %p115 = por %p113, %p114
      %p116 = scmp.ne.s32.totalorder %s108, %s110
      %p117 = scmp.eq.s32.totalorder %s27, 1
      %p118 = por %p116, %p117
      %p119 = scmp.ne.s32.totalorder %s110, %s111
      %p120 = scmp.eq.s32.totalorder %s27, 0
      %p121 = por %p119, %p120
      %p122 = scmp.ne.s32.totalorder %s110, %s111
      %p123 = scmp.eq.s32.totalorder %s28, 1
      %p124 = por %p122, %p123
      %p126 = scmp.ne.s32.totalorder %s111, %s125
      %p127 = scmp.eq.s32.totalorder %s28, 0
      %p128 = por %p126, %p127
      %s130 = sadd.s32 %s129, 1
      %p133 = scmp.eq.s32.totalorder %s22, 1
      %p134 = scmp.ne.s32.totalorder %s129, %s131
      %p135 = scmp.eq.s32.totalorder %s22, 0
      %p136 = por %p134, %p135
      %p137 = scmp.ne.s32.totalorder %s129, %s131
      %p138 = scmp.eq.s32.totalorder %s27, 1
      %p139 = por %p137, %p138
      %p140 = scmp.ne.s32.totalorder %s131, %s132
      %p141 = scmp.eq.s32.totalorder %s27, 0
      %p142 = por %p140, %p141
      %p143 = scmp.ne.s32.totalorder %s131, %s132
      %p144 = scmp.eq.s32.totalorder %s28, 1
      %p145 = por %p143, %p144
      %p147 = scmp.ne.s32.totalorder %s132, %s146
      %p148 = scmp.eq.s32.totalorder %s28, 0
      %p149 = por %p147, %p148
      %s151 = sadd.s32 %s150, 1
      %p154 = scmp.eq.s32.totalorder %s22, 1
      %p155 = scmp.ne.s32.totalorder %s150, %s152
      %p156 = scmp.eq.s32.totalorder %s22, 0
      %p157 = por %p155, %p156
      %p158 = scmp.ne.s32.totalorder %s150, %s152
      %p159 = scmp.eq.s32.totalorder %s27, 1
      %p160 = por %p158, %p159
      %p161 = scmp.ne.s32.totalorder %s152, %s153
      %p162 = scmp.eq.s32.totalorder %s27, 0
      %p163 = por %p161, %p162
      %p164 = scmp.ne.s32.totalorder %s152, %s153
      %p165 = scmp.eq.s32.totalorder %s28, 1
      %p166 = por %p164, %p165
      %p168 = scmp.ne.s32.totalorder %s153, %s167
      %p169 = scmp.eq.s32.totalorder %s28, 0
      %p170 = por %p168, %p169
      %s172 = sadd.s32 %s171, 1
      %p175 = scmp.eq.s32.totalorder %s22, 1
      %p176 = scmp.ne.s32.totalorder %s171, %s173
      %p177 = scmp.eq.s32.totalorder %s22, 0
      %p178 = por %p176, %p177
      %p179 = scmp.ne.s32.totalorder %s171, %s173
      %p180 = scmp.eq.s32.totalorder %s27, 1
      %p181 = por %p179, %p180
      %p182 = scmp.ne.s32.totalorder %s173, %s174
      %p183 = scmp.eq.s32.totalorder %s27, 0
      %p184 = por %p182, %p183
      %p185 = scmp.ne.s32.totalorder %s173, %s174
      %p186 = scmp.eq.s32.totalorder %s28, 1
      %p187 = por %p185, %p186
      %p189 = scmp.ne.s32.totalorder %s174, %s188
      %p190 = scmp.eq.s32.totalorder %s28, 0
      %p191 = por %p189, %p190
      %s193 = sadd.s32 %s192, 1
      %p196 = scmp.eq.s32.totalorder %s22, 1
      %p197 = scmp.ne.s32.totalorder %s192, %s194
      %p198 = scmp.eq.s32.totalorder %s22, 0
      %p199 = por %p197, %p198
      %p200 = scmp.ne.s32.totalorder %s192, %s194
      %p201 = scmp.eq.s32.totalorder %s27, 1
      %p202 = por %p200, %p201
      %p203 = scmp.ne.s32.totalorder %s194, %s195
      %p204 = scmp.eq.s32.totalorder %s27, 0
      %p205 = por %p203, %p204
      %p206 = scmp.ne.s32.totalorder %s194, %s195
      %p207 = scmp.eq.s32.totalorder %s28, 1
      %p208 = por %p206, %p207
      %p210 = scmp.ne.s32.totalorder %s195, %s209
      %p211 = scmp.eq.s32.totalorder %s28, 0
      %p212 = por %p210, %p211
      %s213 = ssub.s32 %s22, %s29
      %p214 = scmp.eq.s32.totalorder %s213, 0
      %s216 = sadd.s32 %s215, 1
      %s217 = scalar_select %p214, %s215, %s216
      %p220 = pneg %p214
      %p221 = scmp.eq.s32.totalorder %s22, 1
      %p222 = por %p220, %p221
      %p223 = scmp.ne.s32.totalorder %s215, %s218
      %p224 = scmp.eq.s32.totalorder %s22, 0
      %p225 = por %p223, %p224
      %p226 = scmp.ne.s32.totalorder %s215, %s218
      %p227 = scmp.eq.s32.totalorder %s27, 1
      %p228 = por %p226, %p227
      %p229 = scmp.ne.s32.totalorder %s218, %s219
      %p230 = scmp.eq.s32.totalorder %s27, 0
      %p231 = por %p229, %p230
      %p232 = scmp.ne.s32.totalorder %s218, %s219
      %p233 = scmp.eq.s32.totalorder %s28, 1
      %p234 = por %p232, %p233
      %p236 = scmp.ne.s32.totalorder %s219, %s235
      %p237 = scmp.eq.s32.totalorder %s28, 0
      %p238 = por %p236, %p237
      %s239 = ssub.s32 %s22, %s29
      %p240 = scmp.eq.s32.totalorder %s239, 0
      %s242 = sadd.s32 %s241, 1
      %s243 = scalar_select %p240, %s241, %s242
      %p246 = pneg %p240
      %p247 = scmp.eq.s32.totalorder %s22, 1
      %p248 = por %p246, %p247
      %p249 = scmp.ne.s32.totalorder %s241, %s244
      %p250 = scmp.eq.s32.totalorder %s22, 0
      %p251 = por %p249, %p250
      %p252 = scmp.ne.s32.totalorder %s241, %s244
      %p253 = scmp.eq.s32.totalorder %s27, 1
      %p254 = por %p252, %p253
      %p255 = scmp.ne.s32.totalorder %s244, %s245
      %p256 = scmp.eq.s32.totalorder %s27, 0
      %p257 = por %p255, %p256
      %p258 = scmp.ne.s32.totalorder %s244, %s245
      %p259 = scmp.eq.s32.totalorder %s28, 1
      %p260 = por %p258, %p259
      %p262 = scmp.ne.s32.totalorder %s245, %s261
      %p263 = scmp.eq.s32.totalorder %s28, 0
      %p264 = por %p262, %p263
      %p265 = scmp.le.s32.totalorder 1, %s22
      %p266 = scmp.lt.s32.totalorder %s22, 3
      %p267 = pnand %p265, %p266
      %p268 = pneg %p267
      // Predicated region
      $region9: #{tpu_custom_call.1} parent=5 // pred_check
        _
      $region10: #{tpu_custom_call.1} parent=5 // pred_check_branch
        %270 = sbr.rel (%p267) target = $region12
      $region11: #{tpu_custom_call.1} parent=5 // pred_region
        %s271 = ssub.s32 %s22, 1
        // Predicated region
        $region13: #{tpu_custom_call.1} parent=11 // pred_check
          %p272 = pneg %p121
        $region14: #{tpu_custom_call.1} parent=11 // pred_check_branch
          %274 = sbr.rel (%p272) target = $region16
        $region15: #{tpu_custom_call.1} parent=11 // pred_region
          _
        $region16: #{tpu_custom_call.1} parent=11 // pred_fallthru
          _
        // Predicated region
        $region17: #{tpu_custom_call.1} parent=11 // pred_check
          %p275 = pneg %p142
        $region18: #{tpu_custom_call.1} parent=11 // pred_check_branch
          %277 = sbr.rel (%p275) target = $region20
        $region19: #{tpu_custom_call.1} parent=11 // pred_region
          %279 = vsyncadd [#allocation3], 0
          %s280 = sshll.u32 %s4, 4
          %s281 = int_to_ptr.hbm [resolvable:$true] %s280
          %s282 = sshll.u32 [#allocation2], 4
          %s283 = int_to_ptr.vmem [resolvable:$true] %s282
          %288 = dma.hbm_to_vmem [thread:$0]  %s281, 4608, %s283, [#allocation3], 1152, 1152, 72
        $region20: #{tpu_custom_call.1} parent=11 // pred_fallthru
          _
        // Predicated region
        $region21: #{tpu_custom_call.1} parent=11 // pred_check
          %p289 = pneg %p163
        $region22: #{tpu_custom_call.1} parent=11 // pred_check_branch
          %291 = sbr.rel (%p289) target = $region24
        $region23: #{tpu_custom_call.1} parent=11 // pred_region
          %293 = vsyncadd [#allocation6], 0
          %s294 = sshll.u32 %s5, 4
          %s295 = int_to_ptr.hbm [resolvable:$true] %s294
          %s296 = sshll.u32 [#allocation5], 4
          %s297 = int_to_ptr.vmem [resolvable:$true] %s296
          %302 = dma.hbm_to_vmem [thread:$0]  %s295, 16384, %s297, [#allocation6], 512, 512, 32
        $region24: #{tpu_custom_call.1} parent=11 // pred_fallthru
          _
        // Predicated region
        $region25: #{tpu_custom_call.1} parent=11 // pred_check
          %p303 = pneg %p184
        $region26: #{tpu_custom_call.1} parent=11 // pred_check_branch
          %305 = sbr.rel (%p303) target = $region28
        $region27: #{tpu_custom_call.1} parent=11 // pred_region
          _
        $region28: #{tpu_custom_call.1} parent=11 // pred_fallthru
          _
        // Predicated region
        $region29: #{tpu_custom_call.1} parent=11 // pred_check
          %p306 = pneg %p205
        $region30: #{tpu_custom_call.1} parent=11 // pred_check_branch
          %308 = sbr.rel (%p306) target = $region32
        $region31: #{tpu_custom_call.1} parent=11 // pred_region
          _
        $region32: #{tpu_custom_call.1} parent=11 // pred_fallthru
          _
      $region12: #{tpu_custom_call.1} parent=5 // pred_fallthru
        _
      %p309 = scmp.lt.s32.totalorder %s22, 2
      // Predicated region
      $region33: #{tpu_custom_call.1} parent=5 // pred_check
        %p310 = pneg %p309
      $region34: #{tpu_custom_call.1} parent=5 // pred_check_branch
        %312 = sbr.rel (%p310) target = $region36
      $region35: #{tpu_custom_call.1} parent=5 // pred_region
        // Predicated region
        $region37: #{tpu_custom_call.1} parent=35 // pred_check
          %p313 = pneg %p42
        $region38: #{tpu_custom_call.1} parent=35 // pred_check_branch
          %315 = sbr.rel (%p313) target = $region40
        $region39: #{tpu_custom_call.1} parent=35 // pred_region
          %p316 = scmp.lt.s32.totalorder %s22, 1
          %s317 = scalar_select %p316, %s22, 1
          %s318 = smul.addr %s317, 8
          %s319 = scalar_lea.vmem %s0, %s318
        $region40: #{tpu_custom_call.1} parent=35 // pred_fallthru
          _
        // Predicated region
        $region41: #{tpu_custom_call.1} parent=35 // pred_check
          %p320 = pneg %p68
        $region42: #{tpu_custom_call.1} parent=35 // pred_check_branch
          %322 = sbr.rel (%p320) target = $region44
        $region43: #{tpu_custom_call.1} parent=35 // pred_region
          %p323 = scmp.lt.s32.totalorder %s22, 1
          %s324 = scalar_select %p323, %s22, 1
          %s325 = smul.addr %s324, 8
          %s326 = scalar_lea.vmem %s1, %s325
        $region44: #{tpu_custom_call.1} parent=35 // pred_fallthru
          _
        // Predicated region
        $region45: #{tpu_custom_call.1} parent=35 // pred_check
          %p327 = pneg %p94
        $region46: #{tpu_custom_call.1} parent=35 // pred_check_branch
          %329 = sbr.rel (%p327) target = $region48
        $region47: #{tpu_custom_call.1} parent=35 // pred_region
          %p330 = scmp.lt.s32.totalorder %s22, 1
          %s331 = scalar_select %p330, %s22, 1
          %s332 = smul.addr %s331, 2
          %s333 = scalar_lea.vmem %s2, %s332
        $region48: #{tpu_custom_call.1} parent=35 // pred_fallthru
          _
      $region36: #{tpu_custom_call.1} parent=5 // pred_fallthru
        _
      %p334 = scmp.le.s32.totalorder 1, %s22
      %p335 = scmp.lt.s32.totalorder %s22, 3
      %p336 = pnand %p334, %p335
      %p337 = pneg %p336
      // Predicated region
      $region49: #{tpu_custom_call.1} parent=5 // pred_check
        _
      $region50: #{tpu_custom_call.1} parent=5 // pred_check_branch
        %339 = sbr.rel (%p336) target = $region52
      $region51: #{tpu_custom_call.1} parent=5 // pred_region
        %s340 = ssub.s32 %s22, 1
        // Predicated region
        $region53: #{tpu_custom_call.1} parent=51 // pred_check
          %p341 = pneg %p142
        $region54: #{tpu_custom_call.1} parent=51 // pred_check_branch
          %343 = sbr.rel (%p341) target = $region56
        $region55: #{tpu_custom_call.1} parent=51 // pred_region
          %345 = dma.done [#allocation3], 4608
        $region56: #{tpu_custom_call.1} parent=51 // pred_fallthru
          _
        // Predicated region
        $region57: #{tpu_custom_call.1} parent=51 // pred_check
          %p346 = pneg %p163
        $region58: #{tpu_custom_call.1} parent=51 // pred_check_branch
          %348 = sbr.rel (%p346) target = $region60
        $region59: #{tpu_custom_call.1} parent=51 // pred_region
          %350 = dma.done [#allocation6], 16384
        $region60: #{tpu_custom_call.1} parent=51 // pred_fallthru
          _
        %p351 = scmp.lt.s32.totalorder %s27, 1
        %s352 = scalar_select %p351, %s27, 1
        %s353 = smul.addr %s352, 8
        %s354 = scalar_lea.vmem %s0, %s353
        %p355 = pneg %p48
        %p356 = pneg %p45
        %p357 = scmp.lt.s32.totalorder %s27, 1
        %s358 = scalar_select %p357, %s27, 1
        %s359 = smul.addr %s358, 8
        %s360 = scalar_lea.vmem %s1, %s359
        %p361 = pneg %p74
        %p362 = pneg %p71
        %p363 = scmp.lt.s32.totalorder %s27, 1
        %s364 = scalar_select %p363, %s27, 1
        %s365 = smul.addr %s364, 2
        %s366 = scalar_lea.vmem %s2, %s365
        %p367 = pneg %p100
        %p368 = pneg %p97
        %p369 = pneg %p121
        %p370 = pneg %p118
        %p371 = pneg %p142
        %p372 = pneg %p139
        %p373 = pneg %p163
        %p374 = pneg %p160
        %p375 = pneg %p184
        %p376 = pneg %p181
        %p377 = pneg %p205
        %p378 = pneg %p202
        %p379 = pneg %p231
        %p380 = pneg %p228
        %s381 = sand.u32 %s218, 1
        %s382 = scalar_lea.sflag [#allocation4], %s381
        %s383 = sand.u32 %s218, 1
        %s384 = scalar_lea.vmem [#allocation7], %s383
        %p385 = pneg %p257
        %p386 = pneg %p254
        %p387 = scmp.lt.s32.totalorder %s27, 1
        %s388 = scalar_select %p387, %s27, 1
        %s389 = smul.addr %s388, 8
        %s390 = scalar_lea.vmem %s0, %s389
        %p391 = scmp.lt.s32.totalorder %s27, 1
        %s392 = scalar_select %p391, %s27, 1
        %s393 = smul.addr %s392, 8
        %s394 = scalar_lea.vmem %s1, %s393
        %p395 = scmp.lt.s32.totalorder %s27, 1
        %s396 = scalar_select %p395, %s27, 1
        %s397 = smul.addr %s396, 2
        %s398 = scalar_lea.vmem %s2, %s397
        %v399 = vld [vmem:[%s3] sm:$0xff]
        %v400 = vld [vmem:[%s3 + $0x8] sm:$0xff]
        %v401 = vld [vmem:[#allocation2] sm:$0xff]
        %v402 = vld [vmem:[#allocation2 + $0x8] sm:$0xff]
        %v403 = vld [vmem:[#allocation2 + $0x10] sm:$0xff]
        %v404 = vld [vmem:[#allocation2 + $0x18] sm:$0xff]
        %v405 = vld [vmem:[#allocation2 + $0x20] sm:$0xff]
        %v406 = vld [vmem:[#allocation2 + $0x28] sm:$0xff]
        %v407 = vld [vmem:[#allocation2 + $0x30] sm:$0xff]
        %v408 = vld [vmem:[#allocation2 + $0x38] sm:$0xff]
        %v409 = vld [vmem:[#allocation2 + $0x40] sm:$0xff]
        %v410 = vld [vmem:[#allocation2 + $0x48] sm:$0xff]
        %v411 = vld [vmem:[#allocation2 + $0x50] sm:$0xff]
        %v412 = vld [vmem:[#allocation2 + $0x58] sm:$0xff]
        %v413 = vld [vmem:[#allocation2 + $0x60] sm:$0xff]
        %v414 = vld [vmem:[#allocation2 + $0x68] sm:$0xff]
        %v415 = vld [vmem:[#allocation2 + $0x70] sm:$0xff]
        %v416 = vld [vmem:[#allocation2 + $0x78] sm:$0xff]
        %v417 = vld [vmem:[#allocation2 + $0x80] sm:$0xff]
        %v418 = vld [vmem:[#allocation2 + $0x88] sm:$0xff]
        %v419 = vld [vmem:[#allocation2 + $0x90] sm:$0xff]
        %v420 = vld [vmem:[#allocation2 + $0x98] sm:$0xff]
        %v421 = vld [vmem:[#allocation2 + $0xa0] sm:$0xff]
        %v422 = vld [vmem:[#allocation2 + $0xa8] sm:$0xff]
        %v423 = vld [vmem:[#allocation2 + $0xb0] sm:$0xff]
        %v424 = vld [vmem:[#allocation2 + $0xb8] sm:$0xff]
        %v425 = vld [vmem:[#allocation2 + $0xc0] sm:$0xff]
        %v426 = vld [vmem:[#allocation2 + $0xc8] sm:$0xff]
        %v427 = vld [vmem:[#allocation2 + $0xd0] sm:$0xff]
        %v428 = vld [vmem:[#allocation2 + $0xd8] sm:$0xff]
        %v429 = vld [vmem:[#allocation2 + $0xe0] sm:$0xff]
        %v430 = vld [vmem:[#allocation2 + $0xe8] sm:$0xff]
        %v431 = vld [vmem:[#allocation2 + $0xf0] sm:$0xff]
        %v432 = vld [vmem:[#allocation2 + $0xf8] sm:$0xff]
        %v433 = vld [vmem:[#allocation2 + $0x100] sm:$0xff]
        %v434 = vld [vmem:[#allocation2 + $0x108] sm:$0xff]
        %v435 = vld [vmem:[#allocation2 + $0x110] sm:$0xff]
        %v436 = vld [vmem:[#allocation2 + $0x118] sm:$0xff]
        %v437 = vld [vmem:[#allocation5] sm:$0xff]
        %v438 = vld [vmem:[#allocation5 + $0x8] sm:$0xff]
        %v439 = vld [vmem:[#allocation5 + $0x10] sm:$0xff]
        %v440 = vld [vmem:[#allocation5 + $0x18] sm:$0xff]
        %v441 = vld [vmem:[#allocation5 + $0x20] sm:$0xff]
        %v442 = vld [vmem:[#allocation5 + $0x28] sm:$0xff]
        %v443 = vld [vmem:[#allocation5 + $0x30] sm:$0xff]
        %v444 = vld [vmem:[#allocation5 + $0x38] sm:$0xff]
        %v445 = vld [vmem:[#allocation5 + $0x40] sm:$0xff]
        %v446 = vld [vmem:[#allocation5 + $0x48] sm:$0xff]
        %v447 = vld [vmem:[#allocation5 + $0x50] sm:$0xff]
        %v448 = vld [vmem:[#allocation5 + $0x58] sm:$0xff]
        %v449 = vld [vmem:[#allocation5 + $0x60] sm:$0xff]
        %v450 = vld [vmem:[#allocation5 + $0x68] sm:$0xff]
        %v451 = vld [vmem:[#allocation5 + $0x70] sm:$0xff]
        %v452 = vld [vmem:[#allocation5 + $0x78] sm:$0xff]
        %v453 = vld [vmem:[#allocation5 + $0x80] sm:$0xff]
        %v454 = vld [vmem:[#allocation5 + $0x88] sm:$0xff]
        %v455 = vld [vmem:[#allocation5 + $0x90] sm:$0xff]
        %v456 = vld [vmem:[#allocation5 + $0x98] sm:$0xff]
        %v457 = vld [vmem:[#allocation5 + $0xa0] sm:$0xff]
        %v458 = vld [vmem:[#allocation5 + $0xa8] sm:$0xff]
        %v459 = vld [vmem:[#allocation5 + $0xb0] sm:$0xff]
        %v460 = vld [vmem:[#allocation5 + $0xb8] sm:$0xff]
        %v461 = vld [vmem:[#allocation5 + $0xc0] sm:$0xff]
        %v462 = vld [vmem:[#allocation5 + $0xc8] sm:$0xff]
        %v463 = vld [vmem:[#allocation5 + $0xd0] sm:$0xff]
        %v464 = vld [vmem:[#allocation5 + $0xd8] sm:$0xff]
        %v465 = vld [vmem:[#allocation5 + $0xe0] sm:$0xff]
        %v466 = vld [vmem:[#allocation5 + $0xe8] sm:$0xff]
        %v467 = vld [vmem:[#allocation5 + $0xf0] sm:$0xff]
        %v468 = vld [vmem:[#allocation5 + $0xf8] sm:$0xff]
        %v469 = vld [vmem:[#allocation5 + $0x100] sm:$0xff]
        %v470 = vld [vmem:[#allocation5 + $0x108] sm:$0xff]
        %v471 = vld [vmem:[#allocation5 + $0x110] sm:$0xff]
        %v472 = vld [vmem:[#allocation5 + $0x118] sm:$0xff]
        %v473 = vld [vmem:[#allocation5 + $0x120] sm:$0xff]
        %v474 = vld [vmem:[#allocation5 + $0x128] sm:$0xff]
        %v475 = vld [vmem:[#allocation5 + $0x130] sm:$0xff]
        %v476 = vld [vmem:[#allocation5 + $0x138] sm:$0xff]
        %v477 = vld [vmem:[#allocation5 + $0x140] sm:$0xff]
        %v478 = vld [vmem:[#allocation5 + $0x148] sm:$0xff]
        %v479 = vld [vmem:[#allocation5 + $0x150] sm:$0xff]
        %v480 = vld [vmem:[#allocation5 + $0x158] sm:$0xff]
        %v481 = vld [vmem:[#allocation5 + $0x160] sm:$0xff]
        %v482 = vld [vmem:[#allocation5 + $0x168] sm:$0xff]
        %v483 = vld [vmem:[#allocation5 + $0x170] sm:$0xff]
        %v484 = vld [vmem:[#allocation5 + $0x178] sm:$0xff]
        %v485 = vld [vmem:[#allocation5 + $0x180] sm:$0xff]
        %v486 = vld [vmem:[#allocation5 + $0x188] sm:$0xff]
        %v487 = vld [vmem:[#allocation5 + $0x190] sm:$0xff]
        %v488 = vld [vmem:[#allocation5 + $0x198] sm:$0xff]
        %v489 = vld [vmem:[#allocation5 + $0x1a0] sm:$0xff]
        %v490 = vld [vmem:[#allocation5 + $0x1a8] sm:$0xff]
        %v491 = vld [vmem:[#allocation5 + $0x1b0] sm:$0xff]
        %v492 = vld [vmem:[#allocation5 + $0x1b8] sm:$0xff]
        %v493 = vld [vmem:[#allocation5 + $0x1c0] sm:$0xff]
        %v494 = vld [vmem:[#allocation5 + $0x1c8] sm:$0xff]
        %v495 = vld [vmem:[#allocation5 + $0x1d0] sm:$0xff]
        %v496 = vld [vmem:[#allocation5 + $0x1d8] sm:$0xff]
        %v497 = vld [vmem:[#allocation5 + $0x1e0] sm:$0xff]
        %v498 = vld [vmem:[#allocation5 + $0x1e8] sm:$0xff]
        %v499 = vld [vmem:[#allocation5 + $0x1f0] sm:$0xff]
        %v500 = vld [vmem:[#allocation5 + $0x1f8] sm:$0xff]
        %v501 = vld [vmem:[#allocation5 + $0x200] sm:$0xff]
        %v502 = vld [vmem:[#allocation5 + $0x208] sm:$0xff]
        %v503 = vld [vmem:[#allocation5 + $0x210] sm:$0xff]
        %v504 = vld [vmem:[#allocation5 + $0x218] sm:$0xff]
        %v505 = vld [vmem:[#allocation5 + $0x220] sm:$0xff]
        %v506 = vld [vmem:[#allocation5 + $0x228] sm:$0xff]
        %v507 = vld [vmem:[#allocation5 + $0x230] sm:$0xff]
        %v508 = vld [vmem:[#allocation5 + $0x238] sm:$0xff]
        %v509 = vld [vmem:[#allocation5 + $0x240] sm:$0xff]
        %v510 = vld [vmem:[#allocation5 + $0x248] sm:$0xff]
        %v511 = vld [vmem:[#allocation5 + $0x250] sm:$0xff]
        %v512 = vld [vmem:[#allocation5 + $0x258] sm:$0xff]
        %v513 = vld [vmem:[#allocation5 + $0x260] sm:$0xff]
        %v514 = vld [vmem:[#allocation5 + $0x268] sm:$0xff]
        %v515 = vld [vmem:[#allocation5 + $0x270] sm:$0xff]
        %v516 = vld [vmem:[#allocation5 + $0x278] sm:$0xff]
        %v517 = vld [vmem:[#allocation5 + $0x280] sm:$0xff]
        %v518 = vld [vmem:[#allocation5 + $0x288] sm:$0xff]
        %v519 = vld [vmem:[#allocation5 + $0x290] sm:$0xff]
        %v520 = vld [vmem:[#allocation5 + $0x298] sm:$0xff]
        %v521 = vld [vmem:[#allocation5 + $0x2a0] sm:$0xff]
        %v522 = vld [vmem:[#allocation5 + $0x2a8] sm:$0xff]
        %v523 = vld [vmem:[#allocation5 + $0x2b0] sm:$0xff]
        %v524 = vld [vmem:[#allocation5 + $0x2b8] sm:$0xff]
        %v525 = vld [vmem:[#allocation5 + $0x2c0] sm:$0xff]
        %v526 = vld [vmem:[#allocation5 + $0x2c8] sm:$0xff]
        %v527 = vld [vmem:[#allocation5 + $0x2d0] sm:$0xff]
        %v528 = vld [vmem:[#allocation5 + $0x2d8] sm:$0xff]
        %v529 = vld [vmem:[#allocation5 + $0x2e0] sm:$0xff]
        %v530 = vld [vmem:[#allocation5 + $0x2e8] sm:$0xff]
        %v531 = vld [vmem:[#allocation5 + $0x2f0] sm:$0xff]
        %v532 = vld [vmem:[#allocation5 + $0x2f8] sm:$0xff]
        %v533 = vld [vmem:[#allocation5 + $0x300] sm:$0xff]
        %v534 = vld [vmem:[#allocation5 + $0x308] sm:$0xff]
        %v535 = vld [vmem:[#allocation5 + $0x310] sm:$0xff]
        %v536 = vld [vmem:[#allocation5 + $0x318] sm:$0xff]
        %v537 = vld [vmem:[#allocation5 + $0x320] sm:$0xff]
        %v538 = vld [vmem:[#allocation5 + $0x328] sm:$0xff]
        %v539 = vld [vmem:[#allocation5 + $0x330] sm:$0xff]
        %v540 = vld [vmem:[#allocation5 + $0x338] sm:$0xff]
        %v541 = vld [vmem:[#allocation5 + $0x340] sm:$0xff]
        %v542 = vld [vmem:[#allocation5 + $0x348] sm:$0xff]
        %v543 = vld [vmem:[#allocation5 + $0x350] sm:$0xff]
        %v544 = vld [vmem:[#allocation5 + $0x358] sm:$0xff]
        %v545 = vld [vmem:[#allocation5 + $0x360] sm:$0xff]
        %v546 = vld [vmem:[#allocation5 + $0x368] sm:$0xff]
        %v547 = vld [vmem:[#allocation5 + $0x370] sm:$0xff]
        %v548 = vld [vmem:[#allocation5 + $0x378] sm:$0xff]
        %v549 = vld [vmem:[#allocation5 + $0x380] sm:$0xff]
        %v550 = vld [vmem:[#allocation5 + $0x388] sm:$0xff]
        %v551 = vld [vmem:[#allocation5 + $0x390] sm:$0xff]
        %v552 = vld [vmem:[#allocation5 + $0x398] sm:$0xff]
        %v553 = vld [vmem:[#allocation5 + $0x3a0] sm:$0xff]
        %v554 = vld [vmem:[#allocation5 + $0x3a8] sm:$0xff]
        %v555 = vld [vmem:[#allocation5 + $0x3b0] sm:$0xff]
        %v556 = vld [vmem:[#allocation5 + $0x3b8] sm:$0xff]
        %v557 = vld [vmem:[#allocation5 + $0x3c0] sm:$0xff]
        %v558 = vld [vmem:[#allocation5 + $0x3c8] sm:$0xff]
        %v559 = vld [vmem:[#allocation5 + $0x3d0] sm:$0xff]
        %v560 = vld [vmem:[#allocation5 + $0x3d8] sm:$0xff]
        %v561 = vld [vmem:[#allocation5 + $0x3e0] sm:$0xff]
        %v562 = vld [vmem:[#allocation5 + $0x3e8] sm:$0xff]
        %v563 = vld [vmem:[#allocation5 + $0x3f0] sm:$0xff]
        %v564 = vld [vmem:[#allocation5 + $0x3f8] sm:$0xff]
        %v565 = vld [vmem:[%s6] sm:$0xff]
        %v566 = vld [vmem:[%s6 + $0x8] sm:$0xff]
        %v567 = vld [vmem:[%s6 + $0x10] sm:$0xff]
        %v568 = vld [vmem:[%s6 + $0x18] sm:$0xff]
        %v569 = vld [vmem:[%s6 + $0x20] sm:$0xff]
        %v570 = vld [vmem:[%s6 + $0x28] sm:$0xff]
        %v571 = vld [vmem:[%s6 + $0x30] sm:$0xff]
        %v572 = vld [vmem:[%s6 + $0x38] sm:$0xff]
        %v573 = vld [vmem:[%s7] sm:$0xff]
        %v574 = vld [vmem:[%s7 + $0x8] sm:$0xff]
        %v575 = vld [vmem:[%s394] sm:$0xff]
        %v576 = vld [vmem:[%s398] sm:$0x3]
        %578 = vset.pattern.permute.xlu0 0
        %579 = vperm.xlu0 %578, %v575
        %v580 = vpop.permute.xlu0 %579
        %v583 = vperm.slane %v576, 0
        %v584 = vperm.slane %v576, 1
        %v587 = vmul.f32 %v580, %v583
        %v588 = vmul.f32 %v580, %v584
        %v589 = vld [vmem:[%s390] sm:$0xff]
        %v590 = vperm.slane %v573, 0
        %vm591 = vcmask 130048
        %v593 = vsel %vm591, %v589, 0
        %595 = vmatpush.msra.mxu0 0.0
        %596 = vmatpush.msra.mxu0 0.0
        %597 = vmatpush.msra.mxu0 0.0
        %598 = vmatpush.msra.mxu0 0.0
        %599 = vmatpush.msra.mxu0 0.0
        %600 = vmatpush.msra.mxu0 0.0
        %601 = vmatpush.msra.mxu0 0.0
        %602 = vmatpush.msra.mxu0 0.0
        %603 = vmatpush.msra.mxu0 0.0
        %604 = vmatpush.msra.mxu0 0.0
        %605 = vmatpush.msra.mxu0 0.0
        %606 = vmatpush.msra.mxu0 0.0
        %607 = vmatpush.msra.mxu0 0.0
        %608 = vmatpush.msra.mxu0 0.0
        %609 = vmatpush.msra.mxu0 %v400
        %610 = vmatpush.msra.mxu0 %v399
        %611 = vmatmul.f32.gmra.mxu0 %v593
        %v612 = vpop.f32.mrf.mxu0
        %v613 = vadd.f32 %v590, %v612
        %614 = vdwg.mxu0
        %vm615 = vcmask 261120
        %v617 = vsel %vm615, %v613, 0
        %619 = vmatpush.msra.mxu0 0.0
        %620 = vmatpush.msra.mxu0 0.0
        %621 = vmatpush.msra.mxu0 0.0
        %622 = vmatpush.msra.mxu0 0.0
        %623 = vmatpush.msra.mxu0 0.0
        %624 = vmatpush.msra.mxu0 0.0
        %625 = vmatpush.msra.mxu0 0.0
        %626 = vmatpush.msra.mxu0 0.0
        %627 = vmatpush.msra.mxu0 0.0
        %628 = vmatpush.msra.mxu0 0.0
        %629 = vmatpush.msra.mxu0 0.0
        %630 = vmatpush.msra.mxu0 0.0
        %631 = vmatpush.msra.mxu0 %v428
        %632 = vmatpush.msra.mxu0 %v419
        %633 = vmatpush.msra.mxu0 %v410
        %634 = vmatpush.msra.mxu0 %v401
        %635 = vmatmul.f32.gmra.mxu0 %v617
        %v636 = vpop.f32.mrf.mxu0
        %v637 = vadd.f32 0.0, %v636
        %638 = vdwg.mxu0
        %639 = vmatpush.msra.mxu0 0.0
        %640 = vmatpush.msra.mxu0 0.0
        %641 = vmatpush.msra.mxu0 0.0
        %642 = vmatpush.msra.mxu0 0.0
        %643 = vmatpush.msra.mxu0 0.0
        %644 = vmatpush.msra.mxu0 0.0
        %645 = vmatpush.msra.mxu0 0.0
        %646 = vmatpush.msra.mxu0 0.0
        %647 = vmatpush.msra.mxu0 0.0
        %648 = vmatpush.msra.mxu0 0.0
        %649 = vmatpush.msra.mxu0 0.0
        %650 = vmatpush.msra.mxu0 0.0
        %651 = vmatpush.msra.mxu0 %v429
        %652 = vmatpush.msra.mxu0 %v420
        %653 = vmatpush.msra.mxu0 %v411
        %654 = vmatpush.msra.mxu0 %v402
        %655 = vmatmul.f32.gmra.mxu0 %v617
        %v656 = vpop.f32.mrf.mxu0
        %v657 = vadd.f32 0.0, %v656
        %658 = vdwg.mxu0
        %659 = vmatpush.msra.mxu0 0.0
        %660 = vmatpush.msra.mxu0 0.0
        %661 = vmatpush.msra.mxu0 0.0
        %662 = vmatpush.msra.mxu0 0.0
        %663 = vmatpush.msra.mxu0 0.0
        %664 = vmatpush.msra.mxu0 0.0
        %665 = vmatpush.msra.mxu0 0.0
        %666 = vmatpush.msra.mxu0 0.0
        %667 = vmatpush.msra.mxu0 0.0
        %668 = vmatpush.msra.mxu0 0.0
        %669 = vmatpush.msra.mxu0 0.0
        %670 = vmatpush.msra.mxu0 0.0
        %671 = vmatpush.msra.mxu0 %v430
        %672 = vmatpush.msra.mxu0 %v421
        %673 = vmatpush.msra.mxu0 %v412
        %674 = vmatpush.msra.mxu0 %v403
        %675 = vmatmul.f32.gmra.mxu0 %v617
        %v676 = vpop.f32.mrf.mxu0
        %v677 = vadd.f32 0.0, %v676
        %678 = vdwg.mxu0
        %v680 = vrot.slane %v677, 1
        %681 = vrot.lane.b32.xlu0 %v680, 32
        %v682 = vpop.permute.xlu0 %681
        %v684 = vrot.slane %v677, 2
        %685 = vrot.lane.b32.xlu0 %v684, 64
        %v686 = vpop.permute.xlu0 %685
        %v688 = vrot.slane %v677, 3
        %689 = vrot.lane.b32.xlu0 %v688, 96
        %v690 = vpop.permute.xlu0 %689
        %v692 = vrot.slane %v677, 4
        %v694 = vrot.slane %v677, 5
        %695 = vrot.lane.b32.xlu0 %v694, 32
        %v696 = vpop.permute.xlu0 %695
        %v698 = vrot.slane %v677, 6
        %699 = vrot.lane.b32.xlu0 %v698, 64
        %v700 = vpop.permute.xlu0 %699
        %v702 = vrot.slane %v677, 7
        %703 = vrot.lane.b32.xlu0 %v702, 96
        %v704 = vpop.permute.xlu0 %703
        %v706 = vsel %vm615, %v677, %v682
        %vm707 = vcmask 523264
        %v708 = vsel %vm707, %v706, %v686
        %vm709 = vcmask 785408
        %v710 = vsel %vm709, %v708, %v690
        %v711 = vsel %vm615, %v692, %v696
        %v712 = vsel %vm707, %v711, %v700
        %v713 = vsel %vm709, %v712, %v704
        %v714 = vperm.slane %v710, 0
        %v715 = vperm.slane %v713, 0
        %v716 = vadd.f32 %v637, %v714
        %v717 = vadd.f32 %v657, %v715
        %v718 = vperm.slane %v573, 1
        %v719 = vperm.slane %v574, 1
        %v720 = vadd.f32 %v716, %v718
        %v721 = vadd.f32 %v717, %v719
        loop: start=0, step=1, limit=3
        $region61: #{tpu_custom_call.1} parent=51 // loop_pre_header
          _
        $region62: #{tpu_custom_call.1} parent=51 // loop_header
          %s723 = sphi 0, %s727
          %p724 = scmp.ge.s32.totalorder %s723, 3
          %v728 = vphi %v613, %v1436
          %v729 = vphi %v720, %v1239
          %v730 = vphi %v721, %v1240
        $region63: #{tpu_custom_call.1} parent=51 // loop_header_branch
          %726 = sbr.rel (%p724) target = $region67
        $region64: #{tpu_custom_call.1} parent=51 // loop_body
          %759 = vrot.lane.b32.xlu0 %v403, 96
          %v760 = vpop.permute.xlu0 %759
          %761 = vrot.lane.b32.xlu0 %v404, 96
          %v762 = vpop.permute.xlu0 %761
          %763 = vrot.lane.b32.xlu0 %v405, 96
          %v764 = vpop.permute.xlu0 %763
          %765 = vrot.lane.b32.xlu0 %v406, 96
          %v766 = vpop.permute.xlu0 %765
          %767 = vrot.lane.b32.xlu0 %v407, 96
          %v768 = vpop.permute.xlu0 %767
          %769 = vrot.lane.b32.xlu0 %v408, 96
          %v770 = vpop.permute.xlu0 %769
          %771 = vrot.lane.b32.xlu0 %v409, 96
          %v772 = vpop.permute.xlu0 %771
          %773 = vrot.lane.b32.xlu0 %v412, 96
          %v774 = vpop.permute.xlu0 %773
          %775 = vrot.lane.b32.xlu0 %v413, 96
          %v776 = vpop.permute.xlu0 %775
          %777 = vrot.lane.b32.xlu0 %v414, 96
          %v778 = vpop.permute.xlu0 %777
          %779 = vrot.lane.b32.xlu0 %v415, 96
          %v780 = vpop.permute.xlu0 %779
          %781 = vrot.lane.b32.xlu0 %v416, 96
          %v782 = vpop.permute.xlu0 %781
          %783 = vrot.lane.b32.xlu0 %v417, 96
          %v784 = vpop.permute.xlu0 %783
          %785 = vrot.lane.b32.xlu0 %v418, 96
          %v786 = vpop.permute.xlu0 %785
          %787 = vrot.lane.b32.xlu0 %v421, 96
          %v788 = vpop.permute.xlu0 %787
          %789 = vrot.lane.b32.xlu0 %v422, 96
          %v790 = vpop.permute.xlu0 %789
          %791 = vrot.lane.b32.xlu0 %v423, 96
          %v792 = vpop.permute.xlu0 %791
          %793 = vrot.lane.b32.xlu0 %v424, 96
          %v794 = vpop.permute.xlu0 %793
          %795 = vrot.lane.b32.xlu0 %v425, 96
          %v796 = vpop.permute.xlu0 %795
          %797 = vrot.lane.b32.xlu0 %v426, 96
          %v798 = vpop.permute.xlu0 %797
          %799 = vrot.lane.b32.xlu0 %v427, 96
          %v800 = vpop.permute.xlu0 %799
          %801 = vrot.lane.b32.xlu0 %v430, 96
          %v802 = vpop.permute.xlu0 %801
          %803 = vrot.lane.b32.xlu0 %v431, 96
          %v804 = vpop.permute.xlu0 %803
          %805 = vrot.lane.b32.xlu0 %v432, 96
          %v806 = vpop.permute.xlu0 %805
          %807 = vrot.lane.b32.xlu0 %v433, 96
          %v808 = vpop.permute.xlu0 %807
          %809 = vrot.lane.b32.xlu0 %v434, 96
          %v810 = vpop.permute.xlu0 %809
          %811 = vrot.lane.b32.xlu0 %v435, 96
          %v812 = vpop.permute.xlu0 %811
          %813 = vrot.lane.b32.xlu0 %v436, 96
          %v814 = vpop.permute.xlu0 %813
          %v815 = vsel %vm709, %v760, %v762
          %v816 = vsel %vm709, %v762, %v764
          %v817 = vsel %vm709, %v764, %v766
          %v818 = vsel %vm709, %v766, %v768
          %v819 = vsel %vm709, %v768, %v770
          %v820 = vsel %vm709, %v770, %v772
          %v821 = vsel %vm709, %v774, %v776
          %v822 = vsel %vm709, %v776, %v778
          %v823 = vsel %vm709, %v778, %v780
          %v824 = vsel %vm709, %v780, %v782
          %v825 = vsel %vm709, %v782, %v784
          %v826 = vsel %vm709, %v784, %v786
          %v827 = vsel %vm709, %v788, %v790
          %v828 = vsel %vm709, %v790, %v792
          %v829 = vsel %vm709, %v792, %v794
          %v830 = vsel %vm709, %v794, %v796
          %v831 = vsel %vm709, %v796, %v798
          %v832 = vsel %vm709, %v798, %v800
          %v833 = vsel %vm709, %v802, %v804
          %v834 = vsel %vm709, %v804, %v806
          %v835 = vsel %vm709, %v806, %v808
          %v836 = vsel %vm709, %v808, %v810
          %v837 = vsel %vm709, %v810, %v812
          %v838 = vsel %vm709, %v812, %v814
          %v868 = vsel %vm615, %v728, 0
          %870 = vmatpush.msra.mxu0 0.0
          %871 = vmatpush.msra.mxu0 0.0
          %872 = vmatpush.msra.mxu0 0.0
          %873 = vmatpush.msra.mxu0 0.0
          %874 = vmatpush.msra.mxu0 0.0
          %875 = vmatpush.msra.mxu0 0.0
          %876 = vmatpush.msra.mxu0 0.0
          %877 = vmatpush.msra.mxu0 0.0
          %878 = vmatpush.msra.mxu0 0.0
          %879 = vmatpush.msra.mxu0 0.0
          %880 = vmatpush.msra.mxu0 0.0
          %881 = vmatpush.msra.mxu0 0.0
          %882 = vmatpush.msra.mxu0 %v833
          %883 = vmatpush.msra.mxu0 %v827
          %884 = vmatpush.msra.mxu0 %v821
          %885 = vmatpush.msra.mxu0 %v815
          %886 = vmatmul.f32.gmra.mxu0 %v868
          %v887 = vpop.f32.mrf.mxu0
          %v888 = vadd.f32 0.0, %v887
          %889 = vdwg.mxu0
          %890 = vmatpush.msra.mxu0 0.0
          %891 = vmatpush.msra.mxu0 0.0
          %892 = vmatpush.msra.mxu0 0.0
          %893 = vmatpush.msra.mxu0 0.0
          %894 = vmatpush.msra.mxu0 0.0
          %895 = vmatpush.msra.mxu0 0.0
          %896 = vmatpush.msra.mxu0 0.0
          %897 = vmatpush.msra.mxu0 0.0
          %898 = vmatpush.msra.mxu0 0.0
          %899 = vmatpush.msra.mxu0 0.0
          %900 = vmatpush.msra.mxu0 0.0
          %901 = vmatpush.msra.mxu0 0.0
          %902 = vmatpush.msra.mxu0 %v834
          %903 = vmatpush.msra.mxu0 %v828
          %904 = vmatpush.msra.mxu0 %v822
          %905 = vmatpush.msra.mxu0 %v816
          %906 = vmatmul.f32.gmra.mxu0 %v868
          %v907 = vpop.f32.mrf.mxu0
          %v908 = vadd.f32 0.0, %v907
          %909 = vdwg.mxu0
          %910 = vmatpush.msra.mxu0 0.0
          %911 = vmatpush.msra.mxu0 0.0
          %912 = vmatpush.msra.mxu0 0.0
          %913 = vmatpush.msra.mxu0 0.0
          %914 = vmatpush.msra.mxu0 0.0
          %915 = vmatpush.msra.mxu0 0.0
          %916 = vmatpush.msra.mxu0 0.0
          %917 = vmatpush.msra.mxu0 0.0
          %918 = vmatpush.msra.mxu0 0.0
          %919 = vmatpush.msra.mxu0 0.0
          %920 = vmatpush.msra.mxu0 0.0
          %921 = vmatpush.msra.mxu0 0.0
          %922 = vmatpush.msra.mxu0 %v835
          %923 = vmatpush.msra.mxu0 %v829
          %924 = vmatpush.msra.mxu0 %v823
          %925 = vmatpush.msra.mxu0 %v817
          %926 = vmatmul.f32.gmra.mxu0 %v868
          %v927 = vpop.f32.mrf.mxu0
          %v928 = vadd.f32 0.0, %v927
          %929 = vdwg.mxu0
          %930 = vmatpush.msra.mxu0 0.0
          %931 = vmatpush.msra.mxu0 0.0
          %932 = vmatpush.msra.mxu0 0.0
          %933 = vmatpush.msra.mxu0 0.0
          %934 = vmatpush.msra.mxu0 0.0
          %935 = vmatpush.msra.mxu0 0.0
          %936 = vmatpush.msra.mxu0 0.0
          %937 = vmatpush.msra.mxu0 0.0
          %938 = vmatpush.msra.mxu0 0.0
          %939 = vmatpush.msra.mxu0 0.0
          %940 = vmatpush.msra.mxu0 0.0
          %941 = vmatpush.msra.mxu0 0.0
          %942 = vmatpush.msra.mxu0 %v836
          %943 = vmatpush.msra.mxu0 %v830
          %944 = vmatpush.msra.mxu0 %v824
          %945 = vmatpush.msra.mxu0 %v818
          %946 = vmatmul.f32.gmra.mxu0 %v868
          %v947 = vpop.f32.mrf.mxu0
          %v948 = vadd.f32 0.0, %v947
          %949 = vdwg.mxu0
          %950 = vmatpush.msra.mxu0 0.0
          %951 = vmatpush.msra.mxu0 0.0
          %952 = vmatpush.msra.mxu0 0.0
          %953 = vmatpush.msra.mxu0 0.0
          %954 = vmatpush.msra.mxu0 0.0
          %955 = vmatpush.msra.mxu0 0.0
          %956 = vmatpush.msra.mxu0 0.0
          %957 = vmatpush.msra.mxu0 0.0
          %958 = vmatpush.msra.mxu0 0.0
          %959 = vmatpush.msra.mxu0 0.0
          %960 = vmatpush.msra.mxu0 0.0
          %961 = vmatpush.msra.mxu0 0.0
          %962 = vmatpush.msra.mxu0 %v837
          %963 = vmatpush.msra.mxu0 %v831
          %964 = vmatpush.msra.mxu0 %v825
          %965 = vmatpush.msra.mxu0 %v819
          %966 = vmatmul.f32.gmra.mxu0 %v868
          %v967 = vpop.f32.mrf.mxu0
          %v968 = vadd.f32 0.0, %v967
          %969 = vdwg.mxu0
          %970 = vmatpush.msra.mxu0 0.0
          %971 = vmatpush.msra.mxu0 0.0
          %972 = vmatpush.msra.mxu0 0.0
          %973 = vmatpush.msra.mxu0 0.0
          %974 = vmatpush.msra.mxu0 0.0
          %975 = vmatpush.msra.mxu0 0.0
          %976 = vmatpush.msra.mxu0 0.0
          %977 = vmatpush.msra.mxu0 0.0
          %978 = vmatpush.msra.mxu0 0.0
          %979 = vmatpush.msra.mxu0 0.0
          %980 = vmatpush.msra.mxu0 0.0
          %981 = vmatpush.msra.mxu0 0.0
          %982 = vmatpush.msra.mxu0 %v838
          %983 = vmatpush.msra.mxu0 %v832
          %984 = vmatpush.msra.mxu0 %v826
          %985 = vmatpush.msra.mxu0 %v820
          %986 = vmatmul.f32.gmra.mxu0 %v868
          %v987 = vpop.f32.mrf.mxu0
          %v988 = vadd.f32 0.0, %v987
          %989 = vdwg.mxu0
          %990 = vmatpush.msra.mxu0 0.0
          %991 = vmatpush.msra.mxu0 0.0
          %992 = vmatpush.msra.mxu0 0.0
          %993 = vmatpush.msra.mxu0 0.0
          %994 = vmatpush.msra.mxu0 0.0
          %995 = vmatpush.msra.mxu0 0.0
          %996 = vmatpush.msra.mxu0 0.0
          %997 = vmatpush.msra.mxu0 0.0
          %998 = vmatpush.msra.mxu0 0.0
          %999 = vmatpush.msra.mxu0 0.0
          %1000 = vmatpush.msra.mxu0 0.0
          %1001 = vmatpush.msra.mxu0 0.0
          %1002 = vmatpush.msra.mxu0 %v814
          %1003 = vmatpush.msra.mxu0 %v800
          %1004 = vmatpush.msra.mxu0 %v786
          %1005 = vmatpush.msra.mxu0 %v772
          %1006 = vmatmul.f32.gmra.mxu0 %v868
          %v1007 = vpop.f32.mrf.mxu0
          %v1008 = vadd.f32 0.0, %v1007
          %1009 = vdwg.mxu0
          %v1011 = vrot.slane %v1008, 1
          %1012 = vrot.lane.b32.xlu0 %v1011, 32
          %v1013 = vpop.permute.xlu0 %1012
          %v1015 = vrot.slane %v1008, 2
          %1016 = vrot.lane.b32.xlu0 %v1015, 64
          %v1017 = vpop.permute.xlu0 %1016
          %v1019 = vrot.slane %v1008, 3
          %1020 = vrot.lane.b32.xlu0 %v1019, 96
          %v1021 = vpop.permute.xlu0 %1020
          %v1023 = vrot.slane %v1008, 4
          %v1025 = vrot.slane %v1008, 5
          %1026 = vrot.lane.b32.xlu0 %v1025, 32
          %v1027 = vpop.permute.xlu0 %1026
          %v1029 = vrot.slane %v1008, 6
          %1030 = vrot.lane.b32.xlu0 %v1029, 64
          %v1031 = vpop.permute.xlu0 %1030
          %v1033 = vrot.slane %v1008, 7
          %1034 = vrot.lane.b32.xlu0 %v1033, 96
          %v1035 = vpop.permute.xlu0 %1034
          %v1037 = vsel %vm615, %v1008, %v1013
          %v1038 = vsel %vm707, %v1037, %v1017
          %v1039 = vsel %vm709, %v1038, %v1021
          %v1040 = vsel %vm615, %v1023, %v1027
          %v1041 = vsel %vm707, %v1040, %v1031
          %v1042 = vsel %vm709, %v1041, %v1035
          %1043 = vrot.lane.b32.xlu0 %v1008, 96
          %v1044 = vpop.permute.xlu0 %1043
          %1047 = vrot.lane.b32.xlu0 %v1015, 32
          %v1048 = vpop.permute.xlu0 %1047
          %1050 = vrot.lane.b32.xlu0 %v1019, 64
          %v1051 = vpop.permute.xlu0 %1050
          %1053 = vrot.lane.b32.xlu0 %v1023, 96
          %v1054 = vpop.permute.xlu0 %1053
          %1057 = vrot.lane.b32.xlu0 %v1029, 32
          %v1058 = vpop.permute.xlu0 %1057
          %1060 = vrot.lane.b32.xlu0 %v1033, 64
          %v1061 = vpop.permute.xlu0 %1060
          %v1063 = vsel %vm615, %v1044, %v1011
          %v1064 = vsel %vm707, %v1063, %v1048
          %v1065 = vsel %vm709, %v1064, %v1051
          %v1066 = vsel %vm615, %v1054, %v1025
          %v1067 = vsel %vm707, %v1066, %v1058
          %v1068 = vsel %vm709, %v1067, %v1061
          %1069 = vmatpush.msra.mxu0 %v497
          %1070 = vmatpush.msra.mxu0 %v493
          %1071 = vmatpush.msra.mxu0 %v489
          %1072 = vmatpush.msra.mxu0 %v485
          %1073 = vmatpush.msra.mxu0 %v481
          %1074 = vmatpush.msra.mxu0 %v477
          %1075 = vmatpush.msra.mxu0 %v473
          %1076 = vmatpush.msra.mxu0 %v469
          %1077 = vmatpush.msra.mxu0 %v465
          %1078 = vmatpush.msra.mxu0 %v461
          %1079 = vmatpush.msra.mxu0 %v457
          %1080 = vmatpush.msra.mxu0 %v453
          %1081 = vmatpush.msra.mxu0 %v449
          %1082 = vmatpush.msra.mxu0 %v445
          %1083 = vmatpush.msra.mxu0 %v441
          %1084 = vmatpush.msra.mxu0 %v437
          %1085 = vmatmul.f32.gmra.mxu0 %v729
          %v1086 = vpop.f32.mrf.mxu0
          %v1087 = vadd.f32 0.0, %v1086
          %1088 = vdwg.mxu0
          %1089 = vmatpush.msra.mxu0 %v561
          %1090 = vmatpush.msra.mxu0 %v557
          %1091 = vmatpush.msra.mxu0 %v553
          %1092 = vmatpush.msra.mxu0 %v549
          %1093 = vmatpush.msra.mxu0 %v545
          %1094 = vmatpush.msra.mxu0 %v541
          %1095 = vmatpush.msra.mxu0 %v537
          %1096 = vmatpush.msra.mxu0 %v533
          %1097 = vmatpush.msra.mxu0 %v529
          %1098 = vmatpush.msra.mxu0 %v525
          %1099 = vmatpush.msra.mxu0 %v521
          %1100 = vmatpush.msra.mxu0 %v517
          %1101 = vmatpush.msra.mxu0 %v513
          %1102 = vmatpush.msra.mxu0 %v509
          %1103 = vmatpush.msra.mxu0 %v505
          %1104 = vmatpush.msra.mxu0 %v501
          %1105 = vmatmul.f32.gmra.mxu0 %v730
          %v1106 = vpop.f32.mrf.mxu0
          %v1107 = vadd.f32 %v1087, %v1106
          %1108 = vdwg.mxu0
          %1109 = vmatpush.msra.mxu0 %v498
          %1110 = vmatpush.msra.mxu0 %v494
          %1111 = vmatpush.msra.mxu0 %v490
          %1112 = vmatpush.msra.mxu0 %v486
          %1113 = vmatpush.msra.mxu0 %v482
          %1114 = vmatpush.msra.mxu0 %v478
          %1115 = vmatpush.msra.mxu0 %v474
          %1116 = vmatpush.msra.mxu0 %v470
          %1117 = vmatpush.msra.mxu0 %v466
          %1118 = vmatpush.msra.mxu0 %v462
          %1119 = vmatpush.msra.mxu0 %v458
          %1120 = vmatpush.msra.mxu0 %v454
          %1121 = vmatpush.msra.mxu0 %v450
          %1122 = vmatpush.msra.mxu0 %v446
          %1123 = vmatpush.msra.mxu0 %v442
          %1124 = vmatpush.msra.mxu0 %v438
          %1125 = vmatmul.f32.gmra.mxu0 %v729
          %v1126 = vpop.f32.mrf.mxu0
          %v1127 = vadd.f32 0.0, %v1126
          %1128 = vdwg.mxu0
          %1129 = vmatpush.msra.mxu0 %v562
          %1130 = vmatpush.msra.mxu0 %v558
          %1131 = vmatpush.msra.mxu0 %v554
          %1132 = vmatpush.msra.mxu0 %v550
          %1133 = vmatpush.msra.mxu0 %v546
          %1134 = vmatpush.msra.mxu0 %v542
          %1135 = vmatpush.msra.mxu0 %v538
          %1136 = vmatpush.msra.mxu0 %v534
          %1137 = vmatpush.msra.mxu0 %v530
          %1138 = vmatpush.msra.mxu0 %v526
          %1139 = vmatpush.msra.mxu0 %v522
          %1140 = vmatpush.msra.mxu0 %v518
          %1141 = vmatpush.msra.mxu0 %v514
          %1142 = vmatpush.msra.mxu0 %v510
          %1143 = vmatpush.msra.mxu0 %v506
          %1144 = vmatpush.msra.mxu0 %v502
          %1145 = vmatmul.f32.gmra.mxu0 %v730
          %v1146 = vpop.f32.mrf.mxu0
          %v1147 = vadd.f32 %v1127, %v1146
          %1148 = vdwg.mxu0
          %1149 = vmatpush.msra.mxu0 %v499
          %1150 = vmatpush.msra.mxu0 %v495
          %1151 = vmatpush.msra.mxu0 %v491
          %1152 = vmatpush.msra.mxu0 %v487
          %1153 = vmatpush.msra.mxu0 %v483
          %1154 = vmatpush.msra.mxu0 %v479
          %1155 = vmatpush.msra.mxu0 %v475
          %1156 = vmatpush.msra.mxu0 %v471
          %1157 = vmatpush.msra.mxu0 %v467
          %1158 = vmatpush.msra.mxu0 %v463
          %1159 = vmatpush.msra.mxu0 %v459
          %1160 = vmatpush.msra.mxu0 %v455
          %1161 = vmatpush.msra.mxu0 %v451
          %1162 = vmatpush.msra.mxu0 %v447
          %1163 = vmatpush.msra.mxu0 %v443
          %1164 = vmatpush.msra.mxu0 %v439
          %1165 = vmatmul.f32.gmra.mxu0 %v729
          %v1166 = vpop.f32.mrf.mxu0
          %v1167 = vadd.f32 0.0, %v1166
          %1168 = vdwg.mxu0
          %1169 = vmatpush.msra.mxu0 %v563
          %1170 = vmatpush.msra.mxu0 %v559
          %1171 = vmatpush.msra.mxu0 %v555
          %1172 = vmatpush.msra.mxu0 %v551
          %1173 = vmatpush.msra.mxu0 %v547
          %1174 = vmatpush.msra.mxu0 %v543
          %1175 = vmatpush.msra.mxu0 %v539
          %1176 = vmatpush.msra.mxu0 %v535
          %1177 = vmatpush.msra.mxu0 %v531
          %1178 = vmatpush.msra.mxu0 %v527
          %1179 = vmatpush.msra.mxu0 %v523
          %1180 = vmatpush.msra.mxu0 %v519
          %1181 = vmatpush.msra.mxu0 %v515
          %1182 = vmatpush.msra.mxu0 %v511
          %1183 = vmatpush.msra.mxu0 %v507
          %1184 = vmatpush.msra.mxu0 %v503
          %1185 = vmatmul.f32.gmra.mxu0 %v730
          %v1186 = vpop.f32.mrf.mxu0
          %v1187 = vadd.f32 %v1167, %v1186
          %1188 = vdwg.mxu0
          %1189 = vmatpush.msra.mxu0 %v500
          %1190 = vmatpush.msra.mxu0 %v496
          %1191 = vmatpush.msra.mxu0 %v492
          %1192 = vmatpush.msra.mxu0 %v488
          %1193 = vmatpush.msra.mxu0 %v484
          %1194 = vmatpush.msra.mxu0 %v480
          %1195 = vmatpush.msra.mxu0 %v476
          %1196 = vmatpush.msra.mxu0 %v472
          %1197 = vmatpush.msra.mxu0 %v468
          %1198 = vmatpush.msra.mxu0 %v464
          %1199 = vmatpush.msra.mxu0 %v460
          %1200 = vmatpush.msra.mxu0 %v456
          %1201 = vmatpush.msra.mxu0 %v452
          %1202 = vmatpush.msra.mxu0 %v448
          %1203 = vmatpush.msra.mxu0 %v444
          %1204 = vmatpush.msra.mxu0 %v440
          %1205 = vmatmul.f32.gmra.mxu0 %v729
          %v1206 = vpop.f32.mrf.mxu0
          %v1207 = vadd.f32 0.0, %v1206
          %1208 = vdwg.mxu0
          %1209 = vmatpush.msra.mxu0 %v564
          %1210 = vmatpush.msra.mxu0 %v560
          %1211 = vmatpush.msra.mxu0 %v556
          %1212 = vmatpush.msra.mxu0 %v552
          %1213 = vmatpush.msra.mxu0 %v548
          %1214 = vmatpush.msra.mxu0 %v544
          %1215 = vmatpush.msra.mxu0 %v540
          %1216 = vmatpush.msra.mxu0 %v536
          %1217 = vmatpush.msra.mxu0 %v532
          %1218 = vmatpush.msra.mxu0 %v528
          %1219 = vmatpush.msra.mxu0 %v524
          %1220 = vmatpush.msra.mxu0 %v520
          %1221 = vmatpush.msra.mxu0 %v516
          %1222 = vmatpush.msra.mxu0 %v512
          %1223 = vmatpush.msra.mxu0 %v508
          %1224 = vmatpush.msra.mxu0 %v504
          %1225 = vmatmul.f32.gmra.mxu0 %v730
          %v1226 = vpop.f32.mrf.mxu0
          %v1227 = vadd.f32 %v1207, %v1226
          %1228 = vdwg.mxu0
          %v1229 = vperm.slane %v1039, 0
          %v1230 = vperm.slane %v1042, 0
          %v1231 = vadd.f32 %v888, %v1229
          %v1232 = vadd.f32 %v908, %v1230
          %v1233 = vadd.f32 %v1231, %v1107
          %v1234 = vadd.f32 %v1232, %v1147
          %v1235 = vperm.slane %v573, 2
          %v1236 = vperm.slane %v574, 2
          %v1237 = vadd.f32 %v1233, %v1235
          %v1238 = vadd.f32 %v1234, %v1236
          %v1239 = vmul.f32 %v1237, %v587
          %v1240 = vmul.f32 %v1238, %v588
          %v1241 = vperm.slane %v1065, 0
          %v1242 = vperm.slane %v1068, 0
          %v1243 = vadd.f32 %v928, %v1241
          %v1244 = vadd.f32 %v948, %v1242
          %v1245 = vadd.f32 %v1243, %v1187
          %v1246 = vadd.f32 %v1244, %v1227
          %v1247 = vperm.slane %v573, 3
          %v1248 = vperm.slane %v574, 3
          %v1249 = vadd.f32 %v1245, %v1247
          %v1250 = vadd.f32 %v1246, %v1248
          %v1251 = vmul.f32 %v1249, %v587
          %v1252 = vmul.f32 %v1250, %v588
          %v1253 = vperm.slane %v573, 4
          %v1254 = vperm.slane %v574, 4
          %v1255 = vadd.f32 %v1251, %v1253
          %v1256 = vadd.f32 %v1252, %v1254
          %v1257 = vrot.slane %v1255, 4
          %v1258 = vmax.f32 %v1255, %v1257
          %v1259 = vrot.slane %v1258, 2
          %v1260 = vmax.f32 %v1258, %v1259
          %v1261 = vrot.slane %v1260, 1
          %v1262 = vmax.f32 %v1260, %v1261
          %v1263 = vrot.slane %v1256, 4
          %v1264 = vmax.f32 %v1256, %v1263
          %v1265 = vrot.slane %v1264, 2
          %v1266 = vmax.f32 %v1264, %v1265
          %v1267 = vrot.slane %v1266, 1
          %v1268 = vmax.f32 %v1266, %v1267
          %v1269 = vsub.f32 %v1255, %v1262
          %v1270 = vsub.f32 %v1256, %v1268
          %v1271 = vmul.f32 %v1269, 1.442695
          %v1272 = vpow.pop %v1271
          %v1273 = vmul.f32 %v1270, 1.442695
          %v1274 = vpow.pop %v1273
          %v1275 = vmul.f32 %v580, %v968
          %v1276 = vmul.f32 %v580, %v988
          %v1277 = vperm.slane %v573, 5
          %v1278 = vperm.slane %v574, 5
          %v1279 = vadd.f32 %v1275, %v1277
          %v1280 = vadd.f32 %v1276, %v1278
          %v1281 = vmul.f32 %v1272, %v1279
          %v1282 = vmul.f32 %v1274, %v1280
          %v1283 = vrot.slane %v1281, 4
          %v1284 = vadd.f32 %v1281, %v1283
          %v1285 = vrot.slane %v1284, 2
          %v1286 = vadd.f32 %v1284, %v1285
          %v1287 = vrot.slane %v1286, 1
          %v1288 = vadd.f32 %v1286, %v1287
          %v1289 = vrot.slane %v1282, 4
          %v1290 = vadd.f32 %v1282, %v1289
          %v1291 = vrot.slane %v1290, 2
          %v1292 = vadd.f32 %v1290, %v1291
          %v1293 = vrot.slane %v1292, 1
          %v1294 = vadd.f32 %v1292, %v1293
          %v1295 = vrot.slane %v1272, 4
          %v1296 = vadd.f32 %v1272, %v1295
          %v1297 = vrot.slane %v1296, 2
          %v1298 = vadd.f32 %v1296, %v1297
          %v1299 = vrot.slane %v1298, 1
          %v1300 = vadd.f32 %v1298, %v1299
          %v1301 = vrot.slane %v1274, 4
          %v1302 = vadd.f32 %v1274, %v1301
          %v1303 = vrot.slane %v1302, 2
          %v1304 = vadd.f32 %v1302, %v1303
          %v1305 = vrot.slane %v1304, 1
          %v1306 = vadd.f32 %v1304, %v1305
          %v1307 = vrcp.pop %v1300
          %v1308 = vmul.f32 %v1300, %v1307
          %v1309 = vsub.f32 1.0, %v1308
          %v1310 = vmul.f32 %v1307, %v1309
          %v1311 = vadd.f32 %v1307, %v1310
          %vm1312 = vweird.f32 %v1300
          %vm1313 = vweird.f32 %v1307
          %vm1314 = vmor %vm1312, %vm1313
          %v1315 = vsel %vm1314, %v1307, %v1311
          %v1316 = vand.u32 2147483647, %v1300
          %vm1317 = vcmp.eq.f32.partialorder %v1316, 8.507059e+37
          %v1318 = vand.u32 %v1300, 2147483648
          %v1319 = vor.u32 1.1754944e-38, %v1318
          %v1320 = vsel %vm1317, %v1319, %v1315
          %v1321 = vmul.f32 %v1288, %v1320
          %v1322 = vrcp.pop %v1306
          %v1323 = vmul.f32 %v1306, %v1322
          %v1324 = vsub.f32 1.0, %v1323
          %v1325 = vmul.f32 %v1322, %v1324
          %v1326 = vadd.f32 %v1322, %v1325
          %vm1327 = vweird.f32 %v1306
          %vm1328 = vweird.f32 %v1322
          %vm1329 = vmor %vm1327, %vm1328
          %v1330 = vsel %vm1329, %v1322, %v1326
          %v1331 = vand.u32 2147483647, %v1306
          %vm1332 = vcmp.eq.f32.partialorder %v1331, 8.507059e+37
          %v1333 = vand.u32 %v1306, 2147483648
          %v1334 = vor.u32 1.1754944e-38, %v1333
          %v1335 = vsel %vm1332, %v1334, %v1330
          %v1336 = vmul.f32 %v1294, %v1335
          %v1337 = vxor.u32 %v1321, 2147483648
          %v1338 = vxor.u32 %v1336, 2147483648
          %v1339 = vmul.f32 %v1337, 1.442695
          %v1340 = vpow.pop %v1339
          %v1341 = vmul.f32 %v1338, 1.442695
          %v1342 = vpow.pop %v1341
          %v1343 = vadd.f32 %v1340, 1.0
          %v1344 = vadd.f32 %v1342, 1.0
          %v1345 = vrcp.pop %v1343
          %v1346 = vmul.f32 %v1343, %v1345
          %v1347 = vsub.f32 1.0, %v1346
          %v1348 = vmul.f32 %v1345, %v1347
          %v1349 = vadd.f32 %v1345, %v1348
          %vm1350 = vweird.f32 %v1343
          %vm1351 = vweird.f32 %v1345
          %vm1352 = vmor %vm1350, %vm1351
          %v1353 = vsel %vm1352, %v1345, %v1349
          %v1354 = vand.u32 2147483647, %v1343
          %vm1355 = vcmp.eq.f32.partialorder %v1354, 8.507059e+37
          %v1356 = vand.u32 %v1343, 2147483648
          %v1357 = vor.u32 1.1754944e-38, %v1356
          %v1358 = vsel %vm1355, %v1357, %v1353
          %v1359 = vmul.f32 1.0, %v1358
          %v1360 = vrcp.pop %v1344
          %v1361 = vmul.f32 %v1344, %v1360
          %v1362 = vsub.f32 1.0, %v1361
          %v1363 = vmul.f32 %v1360, %v1362
          %v1364 = vadd.f32 %v1360, %v1363
          %vm1365 = vweird.f32 %v1344
          %vm1366 = vweird.f32 %v1360
          %vm1367 = vmor %vm1365, %vm1366
          %v1368 = vsel %vm1367, %v1360, %v1364
          %v1369 = vand.u32 2147483647, %v1344
          %vm1370 = vcmp.eq.f32.partialorder %v1369, 8.507059e+37
          %v1371 = vand.u32 %v1344, 2147483648
          %v1372 = vor.u32 1.1754944e-38, %v1371
          %v1373 = vsel %vm1370, %v1372, %v1368
          %v1374 = vmul.f32 1.0, %v1373
          %1376 = vrot.lane.b32.xlu0 %v1359, 96
          %v1377 = vpop.permute.xlu0 %1376
          %1379 = vrot.lane.b32.xlu0 %v1359, 64
          %v1380 = vpop.permute.xlu0 %1379
          %1382 = vrot.lane.b32.xlu0 %v1359, 32
          %v1383 = vpop.permute.xlu0 %1382
          %1386 = vrot.lane.b32.xlu0 %v1374, 96
          %v1387 = vpop.permute.xlu0 %1386
          %1389 = vrot.lane.b32.xlu0 %v1374, 64
          %v1390 = vpop.permute.xlu0 %1389
          %1392 = vrot.lane.b32.xlu0 %v1374, 32
          %v1393 = vpop.permute.xlu0 %1392
          %vm1395 = vcmask 1040384
          %v1396 = vsel %vm1395, %v1359, %v1377
          %vm1397 = vcmask 1041408
          %v1398 = vsel %vm1397, %v1396, %v1380
          %vm1399 = vcmask 1042432
          %v1400 = vsel %vm1399, %v1398, %v1383
          %vm1401 = vcmask 1043456
          %v1402 = vsel %vm1401, %v1400, %v1374
          %vm1403 = vcmask 1044480
          %v1404 = vsel %vm1403, %v1402, %v1387
          %vm1405 = vcmask 1045504
          %v1406 = vsel %vm1405, %v1404, %v1390
          %vm1407 = vcmask 1046528
          %v1408 = vsel %vm1407, %v1406, %v1393
          %1410 = vrot.lane.b32.xlu0 %v1408, 32
          %v1411 = vpop.permute.xlu0 %1410
          %v1413 = vsel %vm615, %v1279, %v1411
          %v1414 = vperm.slane %v573, 6
          %v1416 = vsel %vm707, %v1413, 0
          %1418 = vmatpush.msra.mxu0 0.0
          %1419 = vmatpush.msra.mxu0 0.0
          %1420 = vmatpush.msra.mxu0 0.0
          %1421 = vmatpush.msra.mxu0 0.0
          %1422 = vmatpush.msra.mxu0 0.0
          %1423 = vmatpush.msra.mxu0 0.0
          %1424 = vmatpush.msra.mxu0 0.0
          %1425 = vmatpush.msra.mxu0 0.0
          %1426 = vmatpush.msra.mxu0 %v572
          %1427 = vmatpush.msra.mxu0 %v571
          %1428 = vmatpush.msra.mxu0 %v570
          %1429 = vmatpush.msra.mxu0 %v569
          %1430 = vmatpush.msra.mxu0 %v568
          %1431 = vmatpush.msra.mxu0 %v567
          %1432 = vmatpush.msra.mxu0 %v566
          %1433 = vmatpush.msra.mxu0 %v565
          %1434 = vmatmul.f32.gmra.mxu0 %v1416
          %v1435 = vpop.f32.mrf.mxu0
          %v1436 = vadd.f32 %v1414, %v1435
          %1437 = vdwg.mxu0
        $region65: #{tpu_custom_call.1} parent=51 // loop_footer
          %s727 = sadd.s32 1, %s723
        $region66: #{tpu_custom_call.1} parent=51 // loop_footer_branch
          %722 = sbr.rel target = $region62
        $region67: #{tpu_custom_call.1} parent=51 // loop_exit
          _
        %v1438 = vperm.slane %v573, 7
        %1443 = vrot.lane.b32.xlu0 %v409, 32
        %v1444 = vpop.permute.xlu0 %1443
        %1445 = vrot.lane.b32.xlu0 %v418, 32
        %v1446 = vpop.permute.xlu0 %1445
        %1447 = vrot.lane.b32.xlu0 %v427, 32
        %v1448 = vpop.permute.xlu0 %1447
        %1449 = vrot.lane.b32.xlu0 %v436, 32
        %v1450 = vpop.permute.xlu0 %1449
        %v1456 = vsel %vm615, %v728, 0
        %1458 = vmatpush.msra.mxu0 0.0
        %1459 = vmatpush.msra.mxu0 0.0
        %1460 = vmatpush.msra.mxu0 0.0
        %1461 = vmatpush.msra.mxu0 0.0
        %1462 = vmatpush.msra.mxu0 0.0
        %1463 = vmatpush.msra.mxu0 0.0
        %1464 = vmatpush.msra.mxu0 0.0
        %1465 = vmatpush.msra.mxu0 0.0
        %1466 = vmatpush.msra.mxu0 0.0
        %1467 = vmatpush.msra.mxu0 0.0
        %1468 = vmatpush.msra.mxu0 0.0
        %1469 = vmatpush.msra.mxu0 0.0
        %1470 = vmatpush.msra.mxu0 %v1450
        %1471 = vmatpush.msra.mxu0 %v1448
        %1472 = vmatpush.msra.mxu0 %v1446
        %1473 = vmatpush.msra.mxu0 %v1444
        %1474 = vmatmul.f32.gmra.mxu0 %v1456
        %v1475 = vpop.f32.mrf.mxu0
        %v1476 = vadd.f32 %v1438, %v1475
        %1477 = vdwg.mxu0
        %v1479 = vrot.slane %v1476, 1
        %1480 = vrot.lane.b32.xlu0 %v1479, 16
        %v1481 = vpop.permute.xlu0 %1480
        %v1483 = vrot.slane %v1476, 2
        %1484 = vrot.lane.b32.xlu0 %v1483, 32
        %v1485 = vpop.permute.xlu0 %1484
        %v1487 = vrot.slane %v1476, 3
        %1488 = vrot.lane.b32.xlu0 %v1487, 48
        %v1489 = vpop.permute.xlu0 %1488
        %v1491 = vrot.slane %v1476, 4
        %1492 = vrot.lane.b32.xlu0 %v1491, 64
        %v1493 = vpop.permute.xlu0 %1492
        %v1495 = vrot.slane %v1476, 5
        %1496 = vrot.lane.b32.xlu0 %v1495, 80
        %v1497 = vpop.permute.xlu0 %1496
        %v1499 = vrot.slane %v1476, 6
        %1500 = vrot.lane.b32.xlu0 %v1499, 96
        %v1501 = vpop.permute.xlu0 %1500
        %v1503 = vrot.slane %v1476, 7
        %1504 = vrot.lane.b32.xlu0 %v1503, 112
        %v1505 = vpop.permute.xlu0 %1504
        %v1507 = vsel %vm591, %v1476, %v1481
        %v1508 = vsel %vm615, %v1507, %v1485
        %vm1509 = vcmask 392192
        %v1510 = vsel %vm1509, %v1508, %v1489
        %v1511 = vsel %vm707, %v1510, %v1493
        %vm1512 = vcmask 654336
        %v1513 = vsel %vm1512, %v1511, %v1497
        %v1514 = vsel %vm709, %v1513, %v1501
        %vm1515 = vcmask 916480
        %v1516 = vsel %vm1515, %v1514, %v1505
        %1517 = vst [vmem:[%s384] sm:$0x1] %v1516
        %1518 = vst [vmem:[#allocation8] sm:$0xff] %v729
        %1519 = vst [vmem:[#allocation8 + $0x8] sm:$0xff] %v730
        %s1520 = sand.u32 %s218, 1
        %s1521 = scalar_lea.sflag [#allocation4], %s1520
        %s1522 = sand.u32 %s218, 1
        %s1523 = scalar_lea.vmem [#allocation7], %s1522
        // Predicated region
        $region68: #{tpu_custom_call.1} parent=51 // pred_check
          %p1524 = pneg %p228
        $region69: #{tpu_custom_call.1} parent=51 // pred_check_branch
          %1526 = sbr.rel (%p1524) target = $region71
        $region70: #{tpu_custom_call.1} parent=51 // pred_region
          %1528 = vsyncadd %s1521, 0
          %s1529 = scalar_lea.hbm %s8, %s27
          %s1531 = sshll.u32 %s1523, 4
          %s1532 = int_to_ptr.vmem [resolvable:$true] %s1531
          %s1533 = sshll.u32 %s1529, 4
          %s1534 = int_to_ptr.hbm [resolvable:$true] %s1533
          %1536 = dma.vmem_to_hbm [thread:$0]  %s1532, 16, %s1534, %s1521
        $region71: #{tpu_custom_call.1} parent=51 // pred_fallthru
          _
        // Predicated region
        $region72: #{tpu_custom_call.1} parent=51 // pred_check
          %p1537 = pneg %p254
        $region73: #{tpu_custom_call.1} parent=51 // pred_check_branch
          %1539 = sbr.rel (%p1537) target = $region75
        $region74: #{tpu_custom_call.1} parent=51 // pred_region
          %1541 = vsyncadd [#allocation9], 0
          %s1542 = smul.addr %s27, 2
          %s1543 = smul.addr %s1542, 8
          %s1544 = scalar_lea.hbm %s9, %s1543
          %s1546 = sshll.u32 [#allocation8], 4
          %s1547 = int_to_ptr.vmem [resolvable:$true] %s1546
          %s1548 = sshll.u32 %s1544, 4
          %s1549 = int_to_ptr.hbm [resolvable:$true] %s1548
          %1551 = dma.vmem_to_hbm [thread:$0]  %s1547, 256, %s1549, [#allocation9]
        $region75: #{tpu_custom_call.1} parent=51 // pred_fallthru
          _
        // Predicated region
        $region76: #{tpu_custom_call.1} parent=51 // pred_check
          %p1552 = pneg %p254
        $region77: #{tpu_custom_call.1} parent=51 // pred_check_branch
          %1554 = sbr.rel (%p1552) target = $region79
        $region78: #{tpu_custom_call.1} parent=51 // pred_region
          %1556 = dma.done [#allocation9], 256
        $region79: #{tpu_custom_call.1} parent=51 // pred_fallthru
          _
      $region52: #{tpu_custom_call.1} parent=5 // pred_fallthru
        _
      %p1557 = scmp.le.s32.totalorder 2, %s22
      // Predicated region
      $region80: #{tpu_custom_call.1} parent=5 // pred_check
        %p1558 = pneg %p1557
      $region81: #{tpu_custom_call.1} parent=5 // pred_check_branch
        %1560 = sbr.rel (%p1558) target = $region83
      $region82: #{tpu_custom_call.1} parent=5 // pred_region
        %s1561 = ssub.s32 %s22, 2
        // Predicated region
        $region84: #{tpu_custom_call.1} parent=82 // pred_check
          %p1562 = pneg %p234
        $region85: #{tpu_custom_call.1} parent=82 // pred_check_branch
          %1564 = sbr.rel (%p1562) target = $region87
        $region86: #{tpu_custom_call.1} parent=82 // pred_region
          %s1565 = sand.u32 %s219, 1
          %s1566 = scalar_lea.sflag [#allocation4], %s1565
          %s1567 = sand.u32 %s219, 1
          %s1568 = scalar_lea.vmem [#allocation7], %s1567
          %1570 = dma.done %s1566, 16
        $region87: #{tpu_custom_call.1} parent=82 // pred_fallthru
          _
      $region83: #{tpu_custom_call.1} parent=5 // pred_fallthru
        _
    $region6: #{tpu_custom_call.1} parent=1 // loop_footer
      %s26 = sadd.s32 1, %s22
    $region7: #{tpu_custom_call.1} parent=1 // loop_footer_branch
      %21 = sbr.rel target = $region3
    $region8: #{tpu_custom_call.1} parent=1 // loop_exit
      _
    %1571 = vsyncpa [#allocation3], 1
    %s1572 = scalar_lea.sflag [#allocation3], 1
    %1573 = vsyncpa %s1572, 1
    %1574 = vsyncpa [#allocation6], 1
    %1575 = vsyncpa [#allocation4], 1
    %s1576 = scalar_lea.sflag [#allocation4], 1
    %1577 = vsyncpa %s1576, 1
    %1578 = vsyncpa [#allocation9], 1

// kernel: tpu_custom_call.1
$region0: #{tpu_custom_call.1}
  #allocation0 [shape = 'u32[]', space=smem, size = 0x4, offset = 0x4, fixed_abs, tag = 'smem constant byte address 0x4 - core index']
  #allocation1 [shape = 'u32[72,128]{1,0:T(1,128)}', space=vmem, size = 0x9000, scoped, tag = 'internal scratch']
  %s0 = inlined_call_operand.vmem [shape: f32[2,8,16], index: 0, kind: input, shape index: {}]
  %s1 = inlined_call_operand.vmem [shape: f32[2,8,1], index: 1, kind: input, shape index: {}]
  %s2 = inlined_call_operand.vmem [shape: f32[2,1,256], index: 2, kind: input, shape index: {}]
  %s3 = inlined_call_operand.vmem [shape: f32[16,32], index: 3, kind: input, shape index: {}]
  %s4 = inlined_call_operand.hbm [shape: f32[32,1136], index: 4, kind: input, shape index: {}]
  %s5 = inlined_call_operand.hbm [shape: f32[256,512], index: 5, kind: input, shape index: {}]
  %s6 = inlined_call_operand.vmem [shape: f32[64,32], index: 6, kind: input, shape index: {}]
  %s7 = inlined_call_operand.vmem [shape: f32[8,256], index: 7, kind: input, shape index: {}]
  %s8 = inlined_call_operand.hbm [shape: f32[2,1,128], index: 8, kind: output, shape index: {0}]
  %s9 = inlined_call_operand.hbm [shape: f32[2,8,256], index: 9, kind: output, shape index: {1}]
  %10 = xla_tuple %s8, %s9
  %s11 = sld [smem:[#allocation0]]
  $region88: #{tpu_custom_call.1} parent=0
    _
  %s13 = ssub.s32 1, %s11
  %s14 = scalar_select 0, %s13, %s11
  $region1: #{tpu_custom_call.1} parent=0
    #allocation2 [shape = 'u8[147456]{0}', space=vmem, size = 0x24000, scoped, tag = 'input window, operand 4, single buffered']
    #allocation3 [shape = 's32[2]{0}', space=sflag, size = 0x8, scoped, tag = 'scoped memory for tpu_custom_call.1']
    #allocation4 [shape = 's32[2]{0}', space=sflag, size = 0x8, scoped, tag = 'scoped memory for tpu_custom_call.1']
    #allocation5 [shape = 'u8[524288]{0}', space=vmem, size = 0x80000, scoped, tag = 'input window, operand 5, single buffered']
    #allocation6 [shape = 's32[1]{0}', space=sflag, size = 0x4, scoped, tag = 'scoped memory for tpu_custom_call.1']
    #allocation7 [shape = 'u8[1024]{0}', space=vmem, size = 0x400, scoped, tag = 'output window, operand 0']
    #allocation8 [shape = 'u8[16384]{0}', space=vmem, size = 0x4000, scoped, tag = 'output window, operand 1']
    #allocation9 [shape = 's32[2]{0}', space=sflag, size = 0x8, scoped, tag = 'scoped memory for tpu_custom_call.1']
    %15 = vsyncpa [#allocation3], 0
    %16 = vsyncpa [#allocation6], 0
    %17 = vsyncpa [#allocation4], 0
    %s18 = scalar_lea.sflag [#allocation4], 1
    %19 = vsyncpa %s18, 0
    %20 = vsyncpa [#allocation9], 0
    %s21 = scalar_lea.sflag [#allocation9], 1
    %22 = vsyncpa %s21, 0
    loop: start=0, step=1, limit=4
    $region2: #{tpu_custom_call.1} parent=1 // loop_pre_header
      _
    $region3: #{tpu_custom_call.1} parent=1 // loop_header
      %s24 = sphi 0, %s28
      %p25 = scmp.ge.s32.totalorder %s24, 4
      %s34 = sphi 0, %s36
      %s37 = sphi 0, %s34
      %s38 = sphi 0, %s37
      %s54 = sphi 0, %s38
      %s60 = sphi 0, %s62
      %s63 = sphi 0, %s60
      %s64 = sphi 0, %s63
      %s80 = sphi 0, %s64
      %s86 = sphi 0, %s88
      %s89 = sphi 0, %s86
      %s90 = sphi 0, %s89
      %s106 = sphi 0, %s90
      %s110 = sphi 0, %s110
      %s112 = sphi 0, %s110
      %s113 = sphi 0, %s112
      %s127 = sphi 0, %s113
      %s131 = sphi 0, %s131
      %s133 = sphi 0, %s131
      %s134 = sphi 0, %s133
      %s148 = sphi 0, %s134
      %s152 = sphi 0, %s152
      %s154 = sphi 0, %s152
      %s155 = sphi 0, %s154
      %s169 = sphi 0, %s155
      %s173 = sphi 0, %s173
      %s175 = sphi 0, %s173
      %s176 = sphi 0, %s175
      %s190 = sphi 0, %s176
      %s194 = sphi 0, %s194
      %s196 = sphi 0, %s194
      %s197 = sphi 0, %s196
      %s211 = sphi 0, %s197
      %s217 = sphi 0, %s219
      %s220 = sphi 0, %s217
      %s221 = sphi 0, %s220
      %s237 = sphi 0, %s221
      %s243 = sphi 0, %s245
      %s246 = sphi 0, %s243
      %s247 = sphi 0, %s246
      %s263 = sphi 0, %s247
    $region4: #{tpu_custom_call.1} parent=1 // loop_header_branch
      %27 = sbr.rel (%p25) target = $region8
    $region5: #{tpu_custom_call.1} parent=1 // loop_body
      %s29 = ssub.s32 %s24, 1
      %s30 = ssub.s32 %s24, 2
      %s31 = sadd.s32 %s24, 1
      %s32 = ssub.s32 %s24, %s31
      %p33 = scmp.eq.s32.totalorder %s32, 0
      %s35 = sadd.s32 %s34, 1
      %s36 = scalar_select %p33, %s34, %s35
      %p39 = pneg %p33
      %p40 = scmp.eq.s32.totalorder %s24, 1
      %p41 = por %p39, %p40
      %p42 = scmp.ne.s32.totalorder %s34, %s37
      %p43 = scmp.eq.s32.totalorder %s24, 0
      %p44 = por %p42, %p43
      %p45 = scmp.ne.s32.totalorder %s34, %s37
      %p46 = scmp.eq.s32.totalorder %s29, 1
      %p47 = por %p45, %p46
      %p48 = scmp.ne.s32.totalorder %s37, %s38
      %p49 = scmp.eq.s32.totalorder %s29, 0
      %p50 = por %p48, %p49
      %p51 = scmp.ne.s32.totalorder %s37, %s38
      %p52 = scmp.eq.s32.totalorder %s30, 1
      %p53 = por %p51, %p52
      %p55 = scmp.ne.s32.totalorder %s38, %s54
      %p56 = scmp.eq.s32.totalorder %s30, 0
      %p57 = por %p55, %p56
      %s58 = ssub.s32 %s24, %s31
      %p59 = scmp.eq.s32.totalorder %s58, 0
      %s61 = sadd.s32 %s60, 1
      %s62 = scalar_select %p59, %s60, %s61
      %p65 = pneg %p59
      %p66 = scmp.eq.s32.totalorder %s24, 1
      %p67 = por %p65, %p66
      %p68 = scmp.ne.s32.totalorder %s60, %s63
      %p69 = scmp.eq.s32.totalorder %s24, 0
      %p70 = por %p68, %p69
      %p71 = scmp.ne.s32.totalorder %s60, %s63
      %p72 = scmp.eq.s32.totalorder %s29, 1
      %p73 = por %p71, %p72
      %p74 = scmp.ne.s32.totalorder %s63, %s64
      %p75 = scmp.eq.s32.totalorder %s29, 0
      %p76 = por %p74, %p75
      %p77 = scmp.ne.s32.totalorder %s63, %s64
      %p78 = scmp.eq.s32.totalorder %s30, 1
      %p79 = por %p77, %p78
      %p81 = scmp.ne.s32.totalorder %s64, %s80
      %p82 = scmp.eq.s32.totalorder %s30, 0
      %p83 = por %p81, %p82
      %s84 = ssub.s32 %s24, %s31
      %p85 = scmp.eq.s32.totalorder %s84, 0
      %s87 = sadd.s32 %s86, 1
      %s88 = scalar_select %p85, %s86, %s87
      %p91 = pneg %p85
      %p92 = scmp.eq.s32.totalorder %s24, 1
      %p93 = por %p91, %p92
      %p94 = scmp.ne.s32.totalorder %s86, %s89
      %p95 = scmp.eq.s32.totalorder %s24, 0
      %p96 = por %p94, %p95
      %p97 = scmp.ne.s32.totalorder %s86, %s89
      %p98 = scmp.eq.s32.totalorder %s29, 1
      %p99 = por %p97, %p98
      %p100 = scmp.ne.s32.totalorder %s89, %s90
      %p101 = scmp.eq.s32.totalorder %s29, 0
      %p102 = por %p100, %p101
      %p103 = scmp.ne.s32.totalorder %s89, %s90
      %p104 = scmp.eq.s32.totalorder %s30, 1
      %p105 = por %p103, %p104
      %p107 = scmp.ne.s32.totalorder %s90, %s106
      %p108 = scmp.eq.s32.totalorder %s30, 0
      %p109 = por %p107, %p108
      %s111 = sadd.s32 %s110, 1
      %p114 = scmp.eq.s32.totalorder %s24, 1
      %p115 = scmp.ne.s32.totalorder %s110, %s112
      %p116 = scmp.eq.s32.totalorder %s24, 0
      %p117 = por %p115, %p116
      %p118 = scmp.ne.s32.totalorder %s110, %s112
      %p119 = scmp.eq.s32.totalorder %s29, 1
      %p120 = por %p118, %p119
      %p121 = scmp.ne.s32.totalorder %s112, %s113
      %p122 = scmp.eq.s32.totalorder %s29, 0
      %p123 = por %p121, %p122
      %p124 = scmp.ne.s32.totalorder %s112, %s113
      %p125 = scmp.eq.s32.totalorder %s30, 1
      %p126 = por %p124, %p125
      %p128 = scmp.ne.s32.totalorder %s113, %s127
      %p129 = scmp.eq.s32.totalorder %s30, 0
      %p130 = por %p128, %p129
      %s132 = sadd.s32 %s131, 1
      %p135 = scmp.eq.s32.totalorder %s24, 1
      %p136 = scmp.ne.s32.totalorder %s131, %s133
      %p137 = scmp.eq.s32.totalorder %s24, 0
      %p138 = por %p136, %p137
      %p139 = scmp.ne.s32.totalorder %s131, %s133
      %p140 = scmp.eq.s32.totalorder %s29, 1
      %p141 = por %p139, %p140
      %p142 = scmp.ne.s32.totalorder %s133, %s134
      %p143 = scmp.eq.s32.totalorder %s29, 0
      %p144 = por %p142, %p143
      %p145 = scmp.ne.s32.totalorder %s133, %s134
      %p146 = scmp.eq.s32.totalorder %s30, 1
      %p147 = por %p145, %p146
      %p149 = scmp.ne.s32.totalorder %s134, %s148
      %p150 = scmp.eq.s32.totalorder %s30, 0
      %p151 = por %p149, %p150
      %s153 = sadd.s32 %s152, 1
      %p156 = scmp.eq.s32.totalorder %s24, 1
      %p157 = scmp.ne.s32.totalorder %s152, %s154
      %p158 = scmp.eq.s32.totalorder %s24, 0
      %p159 = por %p157, %p158
      %p160 = scmp.ne.s32.totalorder %s152, %s154
      %p161 = scmp.eq.s32.totalorder %s29, 1
      %p162 = por %p160, %p161
      %p163 = scmp.ne.s32.totalorder %s154, %s155
      %p164 = scmp.eq.s32.totalorder %s29, 0
      %p165 = por %p163, %p164
      %p166 = scmp.ne.s32.totalorder %s154, %s155
      %p167 = scmp.eq.s32.totalorder %s30, 1
      %p168 = por %p166, %p167
      %p170 = scmp.ne.s32.totalorder %s155, %s169
      %p171 = scmp.eq.s32.totalorder %s30, 0
      %p172 = por %p170, %p171
      %s174 = sadd.s32 %s173, 1
      %p177 = scmp.eq.s32.totalorder %s24, 1
      %p178 = scmp.ne.s32.totalorder %s173, %s175
      %p179 = scmp.eq.s32.totalorder %s24, 0
      %p180 = por %p178, %p179
      %p181 = scmp.ne.s32.totalorder %s173, %s175
      %p182 = scmp.eq.s32.totalorder %s29, 1
      %p183 = por %p181, %p182
      %p184 = scmp.ne.s32.totalorder %s175, %s176
      %p185 = scmp.eq.s32.totalorder %s29, 0
      %p186 = por %p184, %p185
      %p187 = scmp.ne.s32.totalorder %s175, %s176
      %p188 = scmp.eq.s32.totalorder %s30, 1
      %p189 = por %p187, %p188
      %p191 = scmp.ne.s32.totalorder %s176, %s190
      %p192 = scmp.eq.s32.totalorder %s30, 0
      %p193 = por %p191, %p192
      %s195 = sadd.s32 %s194, 1
      %p198 = scmp.eq.s32.totalorder %s24, 1
      %p199 = scmp.ne.s32.totalorder %s194, %s196
      %p200 = scmp.eq.s32.totalorder %s24, 0
      %p201 = por %p199, %p200
      %p202 = scmp.ne.s32.totalorder %s194, %s196
      %p203 = scmp.eq.s32.totalorder %s29, 1
      %p204 = por %p202, %p203
      %p205 = scmp.ne.s32.totalorder %s196, %s197
      %p206 = scmp.eq.s32.totalorder %s29, 0
      %p207 = por %p205, %p206
      %p208 = scmp.ne.s32.totalorder %s196, %s197
      %p209 = scmp.eq.s32.totalorder %s30, 1
      %p210 = por %p208, %p209
      %p212 = scmp.ne.s32.totalorder %s197, %s211
      %p213 = scmp.eq.s32.totalorder %s30, 0
      %p214 = por %p212, %p213
      %s215 = ssub.s32 %s24, %s31
      %p216 = scmp.eq.s32.totalorder %s215, 0
      %s218 = sadd.s32 %s217, 1
      %s219 = scalar_select %p216, %s217, %s218
      %p222 = pneg %p216
      %p223 = scmp.eq.s32.totalorder %s24, 1
      %p224 = por %p222, %p223
      %p225 = scmp.ne.s32.totalorder %s217, %s220
      %p226 = scmp.eq.s32.totalorder %s24, 0
      %p227 = por %p225, %p226
      %p228 = scmp.ne.s32.totalorder %s217, %s220
      %p229 = scmp.eq.s32.totalorder %s29, 1
      %p230 = por %p228, %p229
      %p231 = scmp.ne.s32.totalorder %s220, %s221
      %p232 = scmp.eq.s32.totalorder %s29, 0
      %p233 = por %p231, %p232
      %p234 = scmp.ne.s32.totalorder %s220, %s221
      %p235 = scmp.eq.s32.totalorder %s30, 1
      %p236 = por %p234, %p235
      %p238 = scmp.ne.s32.totalorder %s221, %s237
      %p239 = scmp.eq.s32.totalorder %s30, 0
      %p240 = por %p238, %p239
      %s241 = ssub.s32 %s24, %s31
      %p242 = scmp.eq.s32.totalorder %s241, 0
      %s244 = sadd.s32 %s243, 1
      %s245 = scalar_select %p242, %s243, %s244
      %p248 = pneg %p242
      %p249 = scmp.eq.s32.totalorder %s24, 1
      %p250 = por %p248, %p249
      %p251 = scmp.ne.s32.totalorder %s243, %s246
      %p252 = scmp.eq.s32.totalorder %s24, 0
      %p253 = por %p251, %p252
      %p254 = scmp.ne.s32.totalorder %s243, %s246
      %p255 = scmp.eq.s32.totalorder %s29, 1
      %p256 = por %p254, %p255
      %p257 = scmp.ne.s32.totalorder %s246, %s247
      %p258 = scmp.eq.s32.totalorder %s29, 0
      %p259 = por %p257, %p258
      %p260 = scmp.ne.s32.totalorder %s246, %s247
      %p261 = scmp.eq.s32.totalorder %s30, 1
      %p262 = por %p260, %p261
      %p264 = scmp.ne.s32.totalorder %s247, %s263
      %p265 = scmp.eq.s32.totalorder %s30, 0
      %p266 = por %p264, %p265
      %p267 = scmp.le.s32.totalorder 1, %s24
      %p268 = scmp.lt.s32.totalorder %s24, 3
      %p269 = pnand %p267, %p268
      %p270 = pneg %p269
      // Predicated region
      $region9: #{tpu_custom_call.1} parent=5 // pred_check
        _
      $region10: #{tpu_custom_call.1} parent=5 // pred_check_branch
        %272 = sbr.rel (%p269) target = $region12
      $region11: #{tpu_custom_call.1} parent=5 // pred_region
        %s273 = ssub.s32 %s24, 1
        // Predicated region
        $region13: #{tpu_custom_call.1} parent=11 // pred_check
          %p274 = pneg %p123
        $region14: #{tpu_custom_call.1} parent=11 // pred_check_branch
          %276 = sbr.rel (%p274) target = $region16
        $region15: #{tpu_custom_call.1} parent=11 // pred_region
          _
        $region16: #{tpu_custom_call.1} parent=11 // pred_fallthru
          _
        // Predicated region
        $region17: #{tpu_custom_call.1} parent=11 // pred_check
          %p277 = pneg %p144
        $region18: #{tpu_custom_call.1} parent=11 // pred_check_branch
          %279 = sbr.rel (%p277) target = $region20
        $region19: #{tpu_custom_call.1} parent=11 // pred_region
          %281 = vsyncadd [#allocation3], 0
          %s282 = sshll.u32 %s4, 4
          %s283 = int_to_ptr.hbm [resolvable:$true] %s282
          %s284 = sshll.u32 [#allocation2], 4
          %s285 = int_to_ptr.vmem [resolvable:$true] %s284
          %290 = dma.hbm_to_vmem [thread:$0]  %s283, 4608, %s285, [#allocation3], 1152, 1152, 72
        $region20: #{tpu_custom_call.1} parent=11 // pred_fallthru
          _
        // Predicated region
        $region21: #{tpu_custom_call.1} parent=11 // pred_check
          %p291 = pneg %p165
        $region22: #{tpu_custom_call.1} parent=11 // pred_check_branch
          %293 = sbr.rel (%p291) target = $region24
        $region23: #{tpu_custom_call.1} parent=11 // pred_region
          %295 = vsyncadd [#allocation6], 0
          %s296 = sshll.u32 %s5, 4
          %s297 = int_to_ptr.hbm [resolvable:$true] %s296
          %s298 = sshll.u32 [#allocation5], 4
          %s299 = int_to_ptr.vmem [resolvable:$true] %s298
          %304 = dma.hbm_to_vmem [thread:$0]  %s297, 16384, %s299, [#allocation6], 512, 512, 32
        $region24: #{tpu_custom_call.1} parent=11 // pred_fallthru
          _
        // Predicated region
        $region25: #{tpu_custom_call.1} parent=11 // pred_check
          %p305 = pneg %p186
        $region26: #{tpu_custom_call.1} parent=11 // pred_check_branch
          %307 = sbr.rel (%p305) target = $region28
        $region27: #{tpu_custom_call.1} parent=11 // pred_region
          _
        $region28: #{tpu_custom_call.1} parent=11 // pred_fallthru
          _
        // Predicated region
        $region29: #{tpu_custom_call.1} parent=11 // pred_check
          %p308 = pneg %p207
        $region30: #{tpu_custom_call.1} parent=11 // pred_check_branch
          %310 = sbr.rel (%p308) target = $region32
        $region31: #{tpu_custom_call.1} parent=11 // pred_region
          _
        $region32: #{tpu_custom_call.1} parent=11 // pred_fallthru
          _
      $region12: #{tpu_custom_call.1} parent=5 // pred_fallthru
        _
      %p311 = scmp.lt.s32.totalorder %s24, 2
      // Predicated region
      $region33: #{tpu_custom_call.1} parent=5 // pred_check
        %p312 = pneg %p311
      $region34: #{tpu_custom_call.1} parent=5 // pred_check_branch
        %314 = sbr.rel (%p312) target = $region36
      $region35: #{tpu_custom_call.1} parent=5 // pred_region
        // Predicated region
        $region37: #{tpu_custom_call.1} parent=35 // pred_check
          %p315 = pneg %p44
        $region38: #{tpu_custom_call.1} parent=35 // pred_check_branch
          %317 = sbr.rel (%p315) target = $region40
        $region39: #{tpu_custom_call.1} parent=35 // pred_region
          %p318 = scmp.lt.s32.totalorder %s24, 1
          %s319 = scalar_select %p318, %s24, 1
          %s320 = smul.addr %s319, 8
          %s321 = scalar_lea.vmem %s0, %s320
        $region40: #{tpu_custom_call.1} parent=35 // pred_fallthru
          _
        // Predicated region
        $region41: #{tpu_custom_call.1} parent=35 // pred_check
          %p322 = pneg %p70
        $region42: #{tpu_custom_call.1} parent=35 // pred_check_branch
          %324 = sbr.rel (%p322) target = $region44
        $region43: #{tpu_custom_call.1} parent=35 // pred_region
          %p325 = scmp.lt.s32.totalorder %s24, 1
          %s326 = scalar_select %p325, %s24, 1
          %s327 = smul.addr %s326, 8
          %s328 = scalar_lea.vmem %s1, %s327
        $region44: #{tpu_custom_call.1} parent=35 // pred_fallthru
          _
        // Predicated region
        $region45: #{tpu_custom_call.1} parent=35 // pred_check
          %p329 = pneg %p96
        $region46: #{tpu_custom_call.1} parent=35 // pred_check_branch
          %331 = sbr.rel (%p329) target = $region48
        $region47: #{tpu_custom_call.1} parent=35 // pred_region
          %p332 = scmp.lt.s32.totalorder %s24, 1
          %s333 = scalar_select %p332, %s24, 1
          %s334 = smul.addr %s333, 2
          %s335 = scalar_lea.vmem %s2, %s334
        $region48: #{tpu_custom_call.1} parent=35 // pred_fallthru
          _
      $region36: #{tpu_custom_call.1} parent=5 // pred_fallthru
        _
      %p336 = scmp.le.s32.totalorder 1, %s24
      %p337 = scmp.lt.s32.totalorder %s24, 3
      %p338 = pnand %p336, %p337
      %p339 = pneg %p338
      // Predicated region
      $region49: #{tpu_custom_call.1} parent=5 // pred_check
        _
      $region50: #{tpu_custom_call.1} parent=5 // pred_check_branch
        %341 = sbr.rel (%p338) target = $region52
      $region51: #{tpu_custom_call.1} parent=5 // pred_region
        %s342 = ssub.s32 %s24, 1
        // Predicated region
        $region53: #{tpu_custom_call.1} parent=51 // pred_check
          %p343 = pneg %p144
        $region54: #{tpu_custom_call.1} parent=51 // pred_check_branch
          %345 = sbr.rel (%p343) target = $region56
        $region55: #{tpu_custom_call.1} parent=51 // pred_region
          %347 = dma.done [#allocation3], 4608
        $region56: #{tpu_custom_call.1} parent=51 // pred_fallthru
          _
        // Predicated region
        $region57: #{tpu_custom_call.1} parent=51 // pred_check
          %p348 = pneg %p165
        $region58: #{tpu_custom_call.1} parent=51 // pred_check_branch
          %350 = sbr.rel (%p348) target = $region60
        $region59: #{tpu_custom_call.1} parent=51 // pred_region
          %352 = dma.done [#allocation6], 16384
        $region60: #{tpu_custom_call.1} parent=51 // pred_fallthru
          _
        %p353 = scmp.lt.s32.totalorder %s29, 1
        %s354 = scalar_select %p353, %s29, 1
        %s355 = smul.addr %s354, 8
        %s356 = scalar_lea.vmem %s0, %s355
        %p357 = pneg %p50
        %p358 = pneg %p47
        %p359 = scmp.lt.s32.totalorder %s29, 1
        %s360 = scalar_select %p359, %s29, 1
        %s361 = smul.addr %s360, 8
        %s362 = scalar_lea.vmem %s1, %s361
        %p363 = pneg %p76
        %p364 = pneg %p73
        %p365 = scmp.lt.s32.totalorder %s29, 1
        %s366 = scalar_select %p365, %s29, 1
        %s367 = smul.addr %s366, 2
        %s368 = scalar_lea.vmem %s2, %s367
        %p369 = pneg %p102
        %p370 = pneg %p99
        %p371 = pneg %p123
        %p372 = pneg %p120
        %p373 = pneg %p144
        %p374 = pneg %p141
        %p375 = pneg %p165
        %p376 = pneg %p162
        %p377 = pneg %p186
        %p378 = pneg %p183
        %p379 = pneg %p207
        %p380 = pneg %p204
        %p381 = pneg %p233
        %p382 = pneg %p230
        %s383 = sand.u32 %s220, 1
        %s384 = scalar_lea.sflag [#allocation4], %s383
        %s385 = sand.u32 %s220, 1
        %s386 = scalar_lea.vmem [#allocation7], %s385
        %p387 = pneg %p259
        %p388 = pneg %p256
        %s389 = sand.u32 %s246, 1
        %s390 = scalar_lea.sflag [#allocation9], %s389
        %s391 = sand.u32 %s246, 1
        %s392 = smul.addr %s391, 16
        %s393 = scalar_lea.vmem [#allocation8], %s392
        %p394 = scmp.lt.s32.totalorder %s29, 1
        %s395 = scalar_select %p394, %s29, 1
        %s396 = smul.addr %s395, 8
        %s397 = scalar_lea.vmem %s0, %s396
        %p398 = scmp.lt.s32.totalorder %s29, 1
        %s399 = scalar_select %p398, %s29, 1
        %s400 = smul.addr %s399, 8
        %s401 = scalar_lea.vmem %s1, %s400
        %p402 = scmp.lt.s32.totalorder %s29, 1
        %s403 = scalar_select %p402, %s29, 1
        %s404 = smul.addr %s403, 2
        %s405 = scalar_lea.vmem %s2, %s404
        %v406 = vld [vmem:[%s3] sm:$0xff]
        %v407 = vld [vmem:[%s3 + $0x8] sm:$0xff]
        %v408 = vld [vmem:[#allocation2] sm:$0xff]
        %v409 = vld [vmem:[#allocation2 + $0x8] sm:$0xff]
        %v410 = vld [vmem:[#allocation2 + $0x10] sm:$0xff]
        %v411 = vld [vmem:[#allocation2 + $0x18] sm:$0xff]
        %v412 = vld [vmem:[#allocation2 + $0x20] sm:$0xff]
        %v413 = vld [vmem:[#allocation2 + $0x28] sm:$0xff]
        %v414 = vld [vmem:[#allocation2 + $0x30] sm:$0xff]
        %v415 = vld [vmem:[#allocation2 + $0x38] sm:$0xff]
        %v416 = vld [vmem:[#allocation2 + $0x40] sm:$0xff]
        %v417 = vld [vmem:[#allocation2 + $0x48] sm:$0xff]
        %v418 = vld [vmem:[#allocation2 + $0x50] sm:$0xff]
        %v419 = vld [vmem:[#allocation2 + $0x58] sm:$0xff]
        %v420 = vld [vmem:[#allocation2 + $0x60] sm:$0xff]
        %v421 = vld [vmem:[#allocation2 + $0x68] sm:$0xff]
        %v422 = vld [vmem:[#allocation2 + $0x70] sm:$0xff]
        %v423 = vld [vmem:[#allocation2 + $0x78] sm:$0xff]
        %v424 = vld [vmem:[#allocation2 + $0x80] sm:$0xff]
        %v425 = vld [vmem:[#allocation2 + $0x88] sm:$0xff]
        %v426 = vld [vmem:[#allocation2 + $0x90] sm:$0xff]
        %v427 = vld [vmem:[#allocation2 + $0x98] sm:$0xff]
        %v428 = vld [vmem:[#allocation2 + $0xa0] sm:$0xff]
        %v429 = vld [vmem:[#allocation2 + $0xa8] sm:$0xff]
        %v430 = vld [vmem:[#allocation2 + $0xb0] sm:$0xff]
        %v431 = vld [vmem:[#allocation2 + $0xb8] sm:$0xff]
        %v432 = vld [vmem:[#allocation2 + $0xc0] sm:$0xff]
        %v433 = vld [vmem:[#allocation2 + $0xc8] sm:$0xff]
        %v434 = vld [vmem:[#allocation2 + $0xd0] sm:$0xff]
        %v435 = vld [vmem:[#allocation2 + $0xd8] sm:$0xff]
        %v436 = vld [vmem:[#allocation2 + $0xe0] sm:$0xff]
        %v437 = vld [vmem:[#allocation2 + $0xe8] sm:$0xff]
        %v438 = vld [vmem:[#allocation2 + $0xf0] sm:$0xff]
        %v439 = vld [vmem:[#allocation2 + $0xf8] sm:$0xff]
        %v440 = vld [vmem:[#allocation2 + $0x100] sm:$0xff]
        %v441 = vld [vmem:[#allocation2 + $0x108] sm:$0xff]
        %v442 = vld [vmem:[#allocation2 + $0x110] sm:$0xff]
        %v443 = vld [vmem:[#allocation2 + $0x118] sm:$0xff]
        %v444 = vld [vmem:[#allocation5] sm:$0xff]
        %v445 = vld [vmem:[#allocation5 + $0x8] sm:$0xff]
        %v446 = vld [vmem:[#allocation5 + $0x10] sm:$0xff]
        %v447 = vld [vmem:[#allocation5 + $0x18] sm:$0xff]
        %v448 = vld [vmem:[#allocation5 + $0x20] sm:$0xff]
        %v449 = vld [vmem:[#allocation5 + $0x28] sm:$0xff]
        %v450 = vld [vmem:[#allocation5 + $0x30] sm:$0xff]
        %v451 = vld [vmem:[#allocation5 + $0x38] sm:$0xff]
        %v452 = vld [vmem:[#allocation5 + $0x40] sm:$0xff]
        %v453 = vld [vmem:[#allocation5 + $0x48] sm:$0xff]
        %v454 = vld [vmem:[#allocation5 + $0x50] sm:$0xff]
        %v455 = vld [vmem:[#allocation5 + $0x58] sm:$0xff]
        %v456 = vld [vmem:[#allocation5 + $0x60] sm:$0xff]
        %v457 = vld [vmem:[#allocation5 + $0x68] sm:$0xff]
        %v458 = vld [vmem:[#allocation5 + $0x70] sm:$0xff]
        %v459 = vld [vmem:[#allocation5 + $0x78] sm:$0xff]
        %v460 = vld [vmem:[#allocation5 + $0x80] sm:$0xff]
        %v461 = vld [vmem:[#allocation5 + $0x88] sm:$0xff]
        %v462 = vld [vmem:[#allocation5 + $0x90] sm:$0xff]
        %v463 = vld [vmem:[#allocation5 + $0x98] sm:$0xff]
        %v464 = vld [vmem:[#allocation5 + $0xa0] sm:$0xff]
        %v465 = vld [vmem:[#allocation5 + $0xa8] sm:$0xff]
        %v466 = vld [vmem:[#allocation5 + $0xb0] sm:$0xff]
        %v467 = vld [vmem:[#allocation5 + $0xb8] sm:$0xff]
        %v468 = vld [vmem:[#allocation5 + $0xc0] sm:$0xff]
        %v469 = vld [vmem:[#allocation5 + $0xc8] sm:$0xff]
        %v470 = vld [vmem:[#allocation5 + $0xd0] sm:$0xff]
        %v471 = vld [vmem:[#allocation5 + $0xd8] sm:$0xff]
        %v472 = vld [vmem:[#allocation5 + $0xe0] sm:$0xff]
        %v473 = vld [vmem:[#allocation5 + $0xe8] sm:$0xff]
        %v474 = vld [vmem:[#allocation5 + $0xf0] sm:$0xff]
        %v475 = vld [vmem:[#allocation5 + $0xf8] sm:$0xff]
        %v476 = vld [vmem:[#allocation5 + $0x100] sm:$0xff]
        %v477 = vld [vmem:[#allocation5 + $0x108] sm:$0xff]
        %v478 = vld [vmem:[#allocation5 + $0x110] sm:$0xff]
        %v479 = vld [vmem:[#allocation5 + $0x118] sm:$0xff]
        %v480 = vld [vmem:[#allocation5 + $0x120] sm:$0xff]
        %v481 = vld [vmem:[#allocation5 + $0x128] sm:$0xff]
        %v482 = vld [vmem:[#allocation5 + $0x130] sm:$0xff]
        %v483 = vld [vmem:[#allocation5 + $0x138] sm:$0xff]
        %v484 = vld [vmem:[#allocation5 + $0x140] sm:$0xff]
        %v485 = vld [vmem:[#allocation5 + $0x148] sm:$0xff]
        %v486 = vld [vmem:[#allocation5 + $0x150] sm:$0xff]
        %v487 = vld [vmem:[#allocation5 + $0x158] sm:$0xff]
        %v488 = vld [vmem:[#allocation5 + $0x160] sm:$0xff]
        %v489 = vld [vmem:[#allocation5 + $0x168] sm:$0xff]
        %v490 = vld [vmem:[#allocation5 + $0x170] sm:$0xff]
        %v491 = vld [vmem:[#allocation5 + $0x178] sm:$0xff]
        %v492 = vld [vmem:[#allocation5 + $0x180] sm:$0xff]
        %v493 = vld [vmem:[#allocation5 + $0x188] sm:$0xff]
        %v494 = vld [vmem:[#allocation5 + $0x190] sm:$0xff]
        %v495 = vld [vmem:[#allocation5 + $0x198] sm:$0xff]
        %v496 = vld [vmem:[#allocation5 + $0x1a0] sm:$0xff]
        %v497 = vld [vmem:[#allocation5 + $0x1a8] sm:$0xff]
        %v498 = vld [vmem:[#allocation5 + $0x1b0] sm:$0xff]
        %v499 = vld [vmem:[#allocation5 + $0x1b8] sm:$0xff]
        %v500 = vld [vmem:[#allocation5 + $0x1c0] sm:$0xff]
        %v501 = vld [vmem:[#allocation5 + $0x1c8] sm:$0xff]
        %v502 = vld [vmem:[#allocation5 + $0x1d0] sm:$0xff]
        %v503 = vld [vmem:[#allocation5 + $0x1d8] sm:$0xff]
        %v504 = vld [vmem:[#allocation5 + $0x1e0] sm:$0xff]
        %v505 = vld [vmem:[#allocation5 + $0x1e8] sm:$0xff]
        %v506 = vld [vmem:[#allocation5 + $0x1f0] sm:$0xff]
        %v507 = vld [vmem:[#allocation5 + $0x1f8] sm:$0xff]
        %v508 = vld [vmem:[#allocation5 + $0x200] sm:$0xff]
        %v509 = vld [vmem:[#allocation5 + $0x208] sm:$0xff]
        %v510 = vld [vmem:[#allocation5 + $0x210] sm:$0xff]
        %v511 = vld [vmem:[#allocation5 + $0x218] sm:$0xff]
        %v512 = vld [vmem:[#allocation5 + $0x220] sm:$0xff]
        %v513 = vld [vmem:[#allocation5 + $0x228] sm:$0xff]
        %v514 = vld [vmem:[#allocation5 + $0x230] sm:$0xff]
        %v515 = vld [vmem:[#allocation5 + $0x238] sm:$0xff]
        %v516 = vld [vmem:[#allocation5 + $0x240] sm:$0xff]
        %v517 = vld [vmem:[#allocation5 + $0x248] sm:$0xff]
        %v518 = vld [vmem:[#allocation5 + $0x250] sm:$0xff]
        %v519 = vld [vmem:[#allocation5 + $0x258] sm:$0xff]
        %v520 = vld [vmem:[#allocation5 + $0x260] sm:$0xff]
        %v521 = vld [vmem:[#allocation5 + $0x268] sm:$0xff]
        %v522 = vld [vmem:[#allocation5 + $0x270] sm:$0xff]
        %v523 = vld [vmem:[#allocation5 + $0x278] sm:$0xff]
        %v524 = vld [vmem:[#allocation5 + $0x280] sm:$0xff]
        %v525 = vld [vmem:[#allocation5 + $0x288] sm:$0xff]
        %v526 = vld [vmem:[#allocation5 + $0x290] sm:$0xff]
        %v527 = vld [vmem:[#allocation5 + $0x298] sm:$0xff]
        %v528 = vld [vmem:[#allocation5 + $0x2a0] sm:$0xff]
        %v529 = vld [vmem:[#allocation5 + $0x2a8] sm:$0xff]
        %v530 = vld [vmem:[#allocation5 + $0x2b0] sm:$0xff]
        %v531 = vld [vmem:[#allocation5 + $0x2b8] sm:$0xff]
        %v532 = vld [vmem:[#allocation5 + $0x2c0] sm:$0xff]
        %v533 = vld [vmem:[#allocation5 + $0x2c8] sm:$0xff]
        %v534 = vld [vmem:[#allocation5 + $0x2d0] sm:$0xff]
        %v535 = vld [vmem:[#allocation5 + $0x2d8] sm:$0xff]
        %v536 = vld [vmem:[#allocation5 + $0x2e0] sm:$0xff]
        %v537 = vld [vmem:[#allocation5 + $0x2e8] sm:$0xff]
        %v538 = vld [vmem:[#allocation5 + $0x2f0] sm:$0xff]
        %v539 = vld [vmem:[#allocation5 + $0x2f8] sm:$0xff]
        %v540 = vld [vmem:[#allocation5 + $0x300] sm:$0xff]
        %v541 = vld [vmem:[#allocation5 + $0x308] sm:$0xff]
        %v542 = vld [vmem:[#allocation5 + $0x310] sm:$0xff]
        %v543 = vld [vmem:[#allocation5 + $0x318] sm:$0xff]
        %v544 = vld [vmem:[#allocation5 + $0x320] sm:$0xff]
        %v545 = vld [vmem:[#allocation5 + $0x328] sm:$0xff]
        %v546 = vld [vmem:[#allocation5 + $0x330] sm:$0xff]
        %v547 = vld [vmem:[#allocation5 + $0x338] sm:$0xff]
        %v548 = vld [vmem:[#allocation5 + $0x340] sm:$0xff]
        %v549 = vld [vmem:[#allocation5 + $0x348] sm:$0xff]
        %v550 = vld [vmem:[#allocation5 + $0x350] sm:$0xff]
        %v551 = vld [vmem:[#allocation5 + $0x358] sm:$0xff]
        %v552 = vld [vmem:[#allocation5 + $0x360] sm:$0xff]
        %v553 = vld [vmem:[#allocation5 + $0x368] sm:$0xff]
        %v554 = vld [vmem:[#allocation5 + $0x370] sm:$0xff]
        %v555 = vld [vmem:[#allocation5 + $0x378] sm:$0xff]
        %v556 = vld [vmem:[#allocation5 + $0x380] sm:$0xff]
        %v557 = vld [vmem:[#allocation5 + $0x388] sm:$0xff]
        %v558 = vld [vmem:[#allocation5 + $0x390] sm:$0xff]
        %v559 = vld [vmem:[#allocation5 + $0x398] sm:$0xff]
        %v560 = vld [vmem:[#allocation5 + $0x3a0] sm:$0xff]
        %v561 = vld [vmem:[#allocation5 + $0x3a8] sm:$0xff]
        %v562 = vld [vmem:[#allocation5 + $0x3b0] sm:$0xff]
        %v563 = vld [vmem:[#allocation5 + $0x3b8] sm:$0xff]
        %v564 = vld [vmem:[#allocation5 + $0x3c0] sm:$0xff]
        %v565 = vld [vmem:[#allocation5 + $0x3c8] sm:$0xff]
        %v566 = vld [vmem:[#allocation5 + $0x3d0] sm:$0xff]
        %v567 = vld [vmem:[#allocation5 + $0x3d8] sm:$0xff]
        %v568 = vld [vmem:[#allocation5 + $0x3e0] sm:$0xff]
        %v569 = vld [vmem:[#allocation5 + $0x3e8] sm:$0xff]
        %v570 = vld [vmem:[#allocation5 + $0x3f0] sm:$0xff]
        %v571 = vld [vmem:[#allocation5 + $0x3f8] sm:$0xff]
        %v572 = vld [vmem:[%s6] sm:$0xff]
        %v573 = vld [vmem:[%s6 + $0x8] sm:$0xff]
        %v574 = vld [vmem:[%s6 + $0x10] sm:$0xff]
        %v575 = vld [vmem:[%s6 + $0x18] sm:$0xff]
        %v576 = vld [vmem:[%s6 + $0x20] sm:$0xff]
        %v577 = vld [vmem:[%s6 + $0x28] sm:$0xff]
        %v578 = vld [vmem:[%s6 + $0x30] sm:$0xff]
        %v579 = vld [vmem:[%s6 + $0x38] sm:$0xff]
        %v580 = vld [vmem:[%s7] sm:$0xff]
        %v581 = vld [vmem:[%s7 + $0x8] sm:$0xff]
        %v582 = vld [vmem:[%s401] sm:$0xff]
        %v583 = vld [vmem:[%s405] sm:$0x3]
        %585 = vset.pattern.permute.xlu0 0
        %586 = vperm.xlu0 %585, %v582
        %v587 = vpop.permute.xlu0 %586
        %v590 = vperm.slane %v583, 0
        %v591 = vperm.slane %v583, 1
        %v594 = vmul.f32 %v587, %v590
        %v595 = vmul.f32 %v587, %v591
        %v596 = vld [vmem:[%s397] sm:$0xff]
        %v597 = vperm.slane %v580, 0
        %vm598 = vcmask 130048
        %v600 = vsel %vm598, %v596, 0
        %602 = vmatpush.msra.mxu0 0.0
        %603 = vmatpush.msra.mxu0 0.0
        %604 = vmatpush.msra.mxu0 0.0
        %605 = vmatpush.msra.mxu0 0.0
        %606 = vmatpush.msra.mxu0 0.0
        %607 = vmatpush.msra.mxu0 0.0
        %608 = vmatpush.msra.mxu0 0.0
        %609 = vmatpush.msra.mxu0 0.0
        %610 = vmatpush.msra.mxu0 0.0
        %611 = vmatpush.msra.mxu0 0.0
        %612 = vmatpush.msra.mxu0 0.0
        %613 = vmatpush.msra.mxu0 0.0
        %614 = vmatpush.msra.mxu0 0.0
        %615 = vmatpush.msra.mxu0 0.0
        %616 = vmatpush.msra.mxu0 %v407
        %617 = vmatpush.msra.mxu0 %v406
        %618 = vmatmul.f32.gmra.mxu0 %v600
        %v619 = vpop.f32.mrf.mxu0
        %v620 = vadd.f32 %v597, %v619
        %621 = vdwg.mxu0
        %vm622 = vcmask 261120
        %v624 = vsel %vm622, %v620, 0
        %626 = vmatpush.msra.mxu0 0.0
        %627 = vmatpush.msra.mxu0 0.0
        %628 = vmatpush.msra.mxu0 0.0
        %629 = vmatpush.msra.mxu0 0.0
        %630 = vmatpush.msra.mxu0 0.0
        %631 = vmatpush.msra.mxu0 0.0
        %632 = vmatpush.msra.mxu0 0.0
        %633 = vmatpush.msra.mxu0 0.0
        %634 = vmatpush.msra.mxu0 0.0
        %635 = vmatpush.msra.mxu0 0.0
        %636 = vmatpush.msra.mxu0 0.0
        %637 = vmatpush.msra.mxu0 0.0
        %638 = vmatpush.msra.mxu0 %v435
        %639 = vmatpush.msra.mxu0 %v426
        %640 = vmatpush.msra.mxu0 %v417
        %641 = vmatpush.msra.mxu0 %v408
        %642 = vmatmul.f32.gmra.mxu0 %v624
        %v643 = vpop.f32.mrf.mxu0
        %v644 = vadd.f32 0.0, %v643
        %645 = vdwg.mxu0
        %646 = vmatpush.msra.mxu0 0.0
        %647 = vmatpush.msra.mxu0 0.0
        %648 = vmatpush.msra.mxu0 0.0
        %649 = vmatpush.msra.mxu0 0.0
        %650 = vmatpush.msra.mxu0 0.0
        %651 = vmatpush.msra.mxu0 0.0
        %652 = vmatpush.msra.mxu0 0.0
        %653 = vmatpush.msra.mxu0 0.0
        %654 = vmatpush.msra.mxu0 0.0
        %655 = vmatpush.msra.mxu0 0.0
        %656 = vmatpush.msra.mxu0 0.0
        %657 = vmatpush.msra.mxu0 0.0
        %658 = vmatpush.msra.mxu0 %v436
        %659 = vmatpush.msra.mxu0 %v427
        %660 = vmatpush.msra.mxu0 %v418
        %661 = vmatpush.msra.mxu0 %v409
        %662 = vmatmul.f32.gmra.mxu0 %v624
        %v663 = vpop.f32.mrf.mxu0
        %v664 = vadd.f32 0.0, %v663
        %665 = vdwg.mxu0
        %666 = vmatpush.msra.mxu0 0.0
        %667 = vmatpush.msra.mxu0 0.0
        %668 = vmatpush.msra.mxu0 0.0
        %669 = vmatpush.msra.mxu0 0.0
        %670 = vmatpush.msra.mxu0 0.0
        %671 = vmatpush.msra.mxu0 0.0
        %672 = vmatpush.msra.mxu0 0.0
        %673 = vmatpush.msra.mxu0 0.0
        %674 = vmatpush.msra.mxu0 0.0
        %675 = vmatpush.msra.mxu0 0.0
        %676 = vmatpush.msra.mxu0 0.0
        %677 = vmatpush.msra.mxu0 0.0
        %678 = vmatpush.msra.mxu0 %v437
        %679 = vmatpush.msra.mxu0 %v428
        %680 = vmatpush.msra.mxu0 %v419
        %681 = vmatpush.msra.mxu0 %v410
        %682 = vmatmul.f32.gmra.mxu0 %v624
        %v683 = vpop.f32.mrf.mxu0
        %v684 = vadd.f32 0.0, %v683
        %685 = vdwg.mxu0
        %v687 = vrot.slane %v684, 1
        %688 = vrot.lane.b32.xlu0 %v687, 32
        %v689 = vpop.permute.xlu0 %688
        %v691 = vrot.slane %v684, 2
        %692 = vrot.lane.b32.xlu0 %v691, 64
        %v693 = vpop.permute.xlu0 %692
        %v695 = vrot.slane %v684, 3
        %696 = vrot.lane.b32.xlu0 %v695, 96
        %v697 = vpop.permute.xlu0 %696
        %v699 = vrot.slane %v684, 4
        %v701 = vrot.slane %v684, 5
        %702 = vrot.lane.b32.xlu0 %v701, 32
        %v703 = vpop.permute.xlu0 %702
        %v705 = vrot.slane %v684, 6
        %706 = vrot.lane.b32.xlu0 %v705, 64
        %v707 = vpop.permute.xlu0 %706
        %v709 = vrot.slane %v684, 7
        %710 = vrot.lane.b32.xlu0 %v709, 96
        %v711 = vpop.permute.xlu0 %710
        %v713 = vsel %vm622, %v684, %v689
        %vm714 = vcmask 523264
        %v715 = vsel %vm714, %v713, %v693
        %vm716 = vcmask 785408
        %v717 = vsel %vm716, %v715, %v697
        %v718 = vsel %vm622, %v699, %v703
        %v719 = vsel %vm714, %v718, %v707
        %v720 = vsel %vm716, %v719, %v711
        %v721 = vperm.slane %v717, 0
        %v722 = vperm.slane %v720, 0
        %v723 = vadd.f32 %v644, %v721
        %v724 = vadd.f32 %v664, %v722
        %v725 = vperm.slane %v580, 1
        %v726 = vperm.slane %v581, 1
        %v727 = vadd.f32 %v723, %v725
        %v728 = vadd.f32 %v724, %v726
        loop: start=0, step=1, limit=3
        $region61: #{tpu_custom_call.1} parent=51 // loop_pre_header
          _
        $region62: #{tpu_custom_call.1} parent=51 // loop_header
          %s730 = sphi 0, %s734
          %p731 = scmp.ge.s32.totalorder %s730, 3
          %v735 = vphi %v620, %v1443
          %v736 = vphi %v727, %v1246
          %v737 = vphi %v728, %v1247
        $region63: #{tpu_custom_call.1} parent=51 // loop_header_branch
          %733 = sbr.rel (%p731) target = $region67
        $region64: #{tpu_custom_call.1} parent=51 // loop_body
          %766 = vrot.lane.b32.xlu0 %v410, 96
          %v767 = vpop.permute.xlu0 %766
          %768 = vrot.lane.b32.xlu0 %v411, 96
          %v769 = vpop.permute.xlu0 %768
          %770 = vrot.lane.b32.xlu0 %v412, 96
          %v771 = vpop.permute.xlu0 %770
          %772 = vrot.lane.b32.xlu0 %v413, 96
          %v773 = vpop.permute.xlu0 %772
          %774 = vrot.lane.b32.xlu0 %v414, 96
          %v775 = vpop.permute.xlu0 %774
          %776 = vrot.lane.b32.xlu0 %v415, 96
          %v777 = vpop.permute.xlu0 %776
          %778 = vrot.lane.b32.xlu0 %v416, 96
          %v779 = vpop.permute.xlu0 %778
          %780 = vrot.lane.b32.xlu0 %v419, 96
          %v781 = vpop.permute.xlu0 %780
          %782 = vrot.lane.b32.xlu0 %v420, 96
          %v783 = vpop.permute.xlu0 %782
          %784 = vrot.lane.b32.xlu0 %v421, 96
          %v785 = vpop.permute.xlu0 %784
          %786 = vrot.lane.b32.xlu0 %v422, 96
          %v787 = vpop.permute.xlu0 %786
          %788 = vrot.lane.b32.xlu0 %v423, 96
          %v789 = vpop.permute.xlu0 %788
          %790 = vrot.lane.b32.xlu0 %v424, 96
          %v791 = vpop.permute.xlu0 %790
          %792 = vrot.lane.b32.xlu0 %v425, 96
          %v793 = vpop.permute.xlu0 %792
          %794 = vrot.lane.b32.xlu0 %v428, 96
          %v795 = vpop.permute.xlu0 %794
          %796 = vrot.lane.b32.xlu0 %v429, 96
          %v797 = vpop.permute.xlu0 %796
          %798 = vrot.lane.b32.xlu0 %v430, 96
          %v799 = vpop.permute.xlu0 %798
          %800 = vrot.lane.b32.xlu0 %v431, 96
          %v801 = vpop.permute.xlu0 %800
          %802 = vrot.lane.b32.xlu0 %v432, 96
          %v803 = vpop.permute.xlu0 %802
          %804 = vrot.lane.b32.xlu0 %v433, 96
          %v805 = vpop.permute.xlu0 %804
          %806 = vrot.lane.b32.xlu0 %v434, 96
          %v807 = vpop.permute.xlu0 %806
          %808 = vrot.lane.b32.xlu0 %v437, 96
          %v809 = vpop.permute.xlu0 %808
          %810 = vrot.lane.b32.xlu0 %v438, 96
          %v811 = vpop.permute.xlu0 %810
          %812 = vrot.lane.b32.xlu0 %v439, 96
          %v813 = vpop.permute.xlu0 %812
          %814 = vrot.lane.b32.xlu0 %v440, 96
          %v815 = vpop.permute.xlu0 %814
          %816 = vrot.lane.b32.xlu0 %v441, 96
          %v817 = vpop.permute.xlu0 %816
          %818 = vrot.lane.b32.xlu0 %v442, 96
          %v819 = vpop.permute.xlu0 %818
          %820 = vrot.lane.b32.xlu0 %v443, 96
          %v821 = vpop.permute.xlu0 %820
          %v822 = vsel %vm716, %v767, %v769
          %v823 = vsel %vm716, %v769, %v771
          %v824 = vsel %vm716, %v771, %v773
          %v825 = vsel %vm716, %v773, %v775
          %v826 = vsel %vm716, %v775, %v777
          %v827 = vsel %vm716, %v777, %v779
          %v828 = vsel %vm716, %v781, %v783
          %v829 = vsel %vm716, %v783, %v785
          %v830 = vsel %vm716, %v785, %v787
          %v831 = vsel %vm716, %v787, %v789
          %v832 = vsel %vm716, %v789, %v791
          %v833 = vsel %vm716, %v791, %v793
          %v834 = vsel %vm716, %v795, %v797
          %v835 = vsel %vm716, %v797, %v799
          %v836 = vsel %vm716, %v799, %v801
          %v837 = vsel %vm716, %v801, %v803
          %v838 = vsel %vm716, %v803, %v805
          %v839 = vsel %vm716, %v805, %v807
          %v840 = vsel %vm716, %v809, %v811
          %v841 = vsel %vm716, %v811, %v813
          %v842 = vsel %vm716, %v813, %v815
          %v843 = vsel %vm716, %v815, %v817
          %v844 = vsel %vm716, %v817, %v819
          %v845 = vsel %vm716, %v819, %v821
          %v875 = vsel %vm622, %v735, 0
          %877 = vmatpush.msra.mxu0 0.0
          %878 = vmatpush.msra.mxu0 0.0
          %879 = vmatpush.msra.mxu0 0.0
          %880 = vmatpush.msra.mxu0 0.0
          %881 = vmatpush.msra.mxu0 0.0
          %882 = vmatpush.msra.mxu0 0.0
          %883 = vmatpush.msra.mxu0 0.0
          %884 = vmatpush.msra.mxu0 0.0
          %885 = vmatpush.msra.mxu0 0.0
          %886 = vmatpush.msra.mxu0 0.0
          %887 = vmatpush.msra.mxu0 0.0
          %888 = vmatpush.msra.mxu0 0.0
          %889 = vmatpush.msra.mxu0 %v840
          %890 = vmatpush.msra.mxu0 %v834
          %891 = vmatpush.msra.mxu0 %v828
          %892 = vmatpush.msra.mxu0 %v822
          %893 = vmatmul.f32.gmra.mxu0 %v875
          %v894 = vpop.f32.mrf.mxu0
          %v895 = vadd.f32 0.0, %v894
          %896 = vdwg.mxu0
          %897 = vmatpush.msra.mxu0 0.0
          %898 = vmatpush.msra.mxu0 0.0
          %899 = vmatpush.msra.mxu0 0.0
          %900 = vmatpush.msra.mxu0 0.0
          %901 = vmatpush.msra.mxu0 0.0
          %902 = vmatpush.msra.mxu0 0.0
          %903 = vmatpush.msra.mxu0 0.0
          %904 = vmatpush.msra.mxu0 0.0
          %905 = vmatpush.msra.mxu0 0.0
          %906 = vmatpush.msra.mxu0 0.0
          %907 = vmatpush.msra.mxu0 0.0
          %908 = vmatpush.msra.mxu0 0.0
          %909 = vmatpush.msra.mxu0 %v841
          %910 = vmatpush.msra.mxu0 %v835
          %911 = vmatpush.msra.mxu0 %v829
          %912 = vmatpush.msra.mxu0 %v823
          %913 = vmatmul.f32.gmra.mxu0 %v875
          %v914 = vpop.f32.mrf.mxu0
          %v915 = vadd.f32 0.0, %v914
          %916 = vdwg.mxu0
          %917 = vmatpush.msra.mxu0 0.0
          %918 = vmatpush.msra.mxu0 0.0
          %919 = vmatpush.msra.mxu0 0.0
          %920 = vmatpush.msra.mxu0 0.0
          %921 = vmatpush.msra.mxu0 0.0
          %922 = vmatpush.msra.mxu0 0.0
          %923 = vmatpush.msra.mxu0 0.0
          %924 = vmatpush.msra.mxu0 0.0
          %925 = vmatpush.msra.mxu0 0.0
          %926 = vmatpush.msra.mxu0 0.0
          %927 = vmatpush.msra.mxu0 0.0
          %928 = vmatpush.msra.mxu0 0.0
          %929 = vmatpush.msra.mxu0 %v842
          %930 = vmatpush.msra.mxu0 %v836
          %931 = vmatpush.msra.mxu0 %v830
          %932 = vmatpush.msra.mxu0 %v824
          %933 = vmatmul.f32.gmra.mxu0 %v875
          %v934 = vpop.f32.mrf.mxu0
          %v935 = vadd.f32 0.0, %v934
          %936 = vdwg.mxu0
          %937 = vmatpush.msra.mxu0 0.0
          %938 = vmatpush.msra.mxu0 0.0
          %939 = vmatpush.msra.mxu0 0.0
          %940 = vmatpush.msra.mxu0 0.0
          %941 = vmatpush.msra.mxu0 0.0
          %942 = vmatpush.msra.mxu0 0.0
          %943 = vmatpush.msra.mxu0 0.0
          %944 = vmatpush.msra.mxu0 0.0
          %945 = vmatpush.msra.mxu0 0.0
          %946 = vmatpush.msra.mxu0 0.0
          %947 = vmatpush.msra.mxu0 0.0
          %948 = vmatpush.msra.mxu0 0.0
          %949 = vmatpush.msra.mxu0 %v843
          %950 = vmatpush.msra.mxu0 %v837
          %951 = vmatpush.msra.mxu0 %v831
          %952 = vmatpush.msra.mxu0 %v825
          %953 = vmatmul.f32.gmra.mxu0 %v875
          %v954 = vpop.f32.mrf.mxu0
          %v955 = vadd.f32 0.0, %v954
          %956 = vdwg.mxu0
          %957 = vmatpush.msra.mxu0 0.0
          %958 = vmatpush.msra.mxu0 0.0
          %959 = vmatpush.msra.mxu0 0.0
          %960 = vmatpush.msra.mxu0 0.0
          %961 = vmatpush.msra.mxu0 0.0
          %962 = vmatpush.msra.mxu0 0.0
          %963 = vmatpush.msra.mxu0 0.0
          %964 = vmatpush.msra.mxu0 0.0
          %965 = vmatpush.msra.mxu0 0.0
          %966 = vmatpush.msra.mxu0 0.0
          %967 = vmatpush.msra.mxu0 0.0
          %968 = vmatpush.msra.mxu0 0.0
          %969 = vmatpush.msra.mxu0 %v844
          %970 = vmatpush.msra.mxu0 %v838
          %971 = vmatpush.msra.mxu0 %v832
          %972 = vmatpush.msra.mxu0 %v826
          %973 = vmatmul.f32.gmra.mxu0 %v875
          %v974 = vpop.f32.mrf.mxu0
          %v975 = vadd.f32 0.0, %v974
          %976 = vdwg.mxu0
          %977 = vmatpush.msra.mxu0 0.0
          %978 = vmatpush.msra.mxu0 0.0
          %979 = vmatpush.msra.mxu0 0.0
          %980 = vmatpush.msra.mxu0 0.0
          %981 = vmatpush.msra.mxu0 0.0
          %982 = vmatpush.msra.mxu0 0.0
          %983 = vmatpush.msra.mxu0 0.0
          %984 = vmatpush.msra.mxu0 0.0
          %985 = vmatpush.msra.mxu0 0.0
          %986 = vmatpush.msra.mxu0 0.0
          %987 = vmatpush.msra.mxu0 0.0
          %988 = vmatpush.msra.mxu0 0.0
          %989 = vmatpush.msra.mxu0 %v845
          %990 = vmatpush.msra.mxu0 %v839
          %991 = vmatpush.msra.mxu0 %v833
          %992 = vmatpush.msra.mxu0 %v827
          %993 = vmatmul.f32.gmra.mxu0 %v875
          %v994 = vpop.f32.mrf.mxu0
          %v995 = vadd.f32 0.0, %v994
          %996 = vdwg.mxu0
          %997 = vmatpush.msra.mxu0 0.0
          %998 = vmatpush.msra.mxu0 0.0
          %999 = vmatpush.msra.mxu0 0.0
          %1000 = vmatpush.msra.mxu0 0.0
          %1001 = vmatpush.msra.mxu0 0.0
          %1002 = vmatpush.msra.mxu0 0.0
          %1003 = vmatpush.msra.mxu0 0.0
          %1004 = vmatpush.msra.mxu0 0.0
          %1005 = vmatpush.msra.mxu0 0.0
          %1006 = vmatpush.msra.mxu0 0.0
          %1007 = vmatpush.msra.mxu0 0.0
          %1008 = vmatpush.msra.mxu0 0.0
          %1009 = vmatpush.msra.mxu0 %v821
          %1010 = vmatpush.msra.mxu0 %v807
          %1011 = vmatpush.msra.mxu0 %v793
          %1012 = vmatpush.msra.mxu0 %v779
          %1013 = vmatmul.f32.gmra.mxu0 %v875
          %v1014 = vpop.f32.mrf.mxu0
          %v1015 = vadd.f32 0.0, %v1014
          %1016 = vdwg.mxu0
          %v1018 = vrot.slane %v1015, 1
          %1019 = vrot.lane.b32.xlu0 %v1018, 32
          %v1020 = vpop.permute.xlu0 %1019
          %v1022 = vrot.slane %v1015, 2
          %1023 = vrot.lane.b32.xlu0 %v1022, 64
          %v1024 = vpop.permute.xlu0 %1023
          %v1026 = vrot.slane %v1015, 3
          %1027 = vrot.lane.b32.xlu0 %v1026, 96
          %v1028 = vpop.permute.xlu0 %1027
          %v1030 = vrot.slane %v1015, 4
          %v1032 = vrot.slane %v1015, 5
          %1033 = vrot.lane.b32.xlu0 %v1032, 32
          %v1034 = vpop.permute.xlu0 %1033
          %v1036 = vrot.slane %v1015, 6
          %1037 = vrot.lane.b32.xlu0 %v1036, 64
          %v1038 = vpop.permute.xlu0 %1037
          %v1040 = vrot.slane %v1015, 7
          %1041 = vrot.lane.b32.xlu0 %v1040, 96
          %v1042 = vpop.permute.xlu0 %1041
          %v1044 = vsel %vm622, %v1015, %v1020
          %v1045 = vsel %vm714, %v1044, %v1024
          %v1046 = vsel %vm716, %v1045, %v1028
          %v1047 = vsel %vm622, %v1030, %v1034
          %v1048 = vsel %vm714, %v1047, %v1038
          %v1049 = vsel %vm716, %v1048, %v1042
          %1050 = vrot.lane.b32.xlu0 %v1015, 96
          %v1051 = vpop.permute.xlu0 %1050
          %1054 = vrot.lane.b32.xlu0 %v1022, 32
          %v1055 = vpop.permute.xlu0 %1054
          %1057 = vrot.lane.b32.xlu0 %v1026, 64
          %v1058 = vpop.permute.xlu0 %1057
          %1060 = vrot.lane.b32.xlu0 %v1030, 96
          %v1061 = vpop.permute.xlu0 %1060
          %1064 = vrot.lane.b32.xlu0 %v1036, 32
          %v1065 = vpop.permute.xlu0 %1064
          %1067 = vrot.lane.b32.xlu0 %v1040, 64
          %v1068 = vpop.permute.xlu0 %1067
          %v1070 = vsel %vm622, %v1051, %v1018
          %v1071 = vsel %vm714, %v1070, %v1055
          %v1072 = vsel %vm716, %v1071, %v1058
          %v1073 = vsel %vm622, %v1061, %v1032
          %v1074 = vsel %vm714, %v1073, %v1065
          %v1075 = vsel %vm716, %v1074, %v1068
          %1076 = vmatpush.msra.mxu0 %v504
          %1077 = vmatpush.msra.mxu0 %v500
          %1078 = vmatpush.msra.mxu0 %v496
          %1079 = vmatpush.msra.mxu0 %v492
          %1080 = vmatpush.msra.mxu0 %v488
          %1081 = vmatpush.msra.mxu0 %v484
          %1082 = vmatpush.msra.mxu0 %v480
          %1083 = vmatpush.msra.mxu0 %v476
          %1084 = vmatpush.msra.mxu0 %v472
          %1085 = vmatpush.msra.mxu0 %v468
          %1086 = vmatpush.msra.mxu0 %v464
          %1087 = vmatpush.msra.mxu0 %v460
          %1088 = vmatpush.msra.mxu0 %v456
          %1089 = vmatpush.msra.mxu0 %v452
          %1090 = vmatpush.msra.mxu0 %v448
          %1091 = vmatpush.msra.mxu0 %v444
          %1092 = vmatmul.f32.gmra.mxu0 %v736
          %v1093 = vpop.f32.mrf.mxu0
          %v1094 = vadd.f32 0.0, %v1093
          %1095 = vdwg.mxu0
          %1096 = vmatpush.msra.mxu0 %v568
          %1097 = vmatpush.msra.mxu0 %v564
          %1098 = vmatpush.msra.mxu0 %v560
          %1099 = vmatpush.msra.mxu0 %v556
          %1100 = vmatpush.msra.mxu0 %v552
          %1101 = vmatpush.msra.mxu0 %v548
          %1102 = vmatpush.msra.mxu0 %v544
          %1103 = vmatpush.msra.mxu0 %v540
          %1104 = vmatpush.msra.mxu0 %v536
          %1105 = vmatpush.msra.mxu0 %v532
          %1106 = vmatpush.msra.mxu0 %v528
          %1107 = vmatpush.msra.mxu0 %v524
          %1108 = vmatpush.msra.mxu0 %v520
          %1109 = vmatpush.msra.mxu0 %v516
          %1110 = vmatpush.msra.mxu0 %v512
          %1111 = vmatpush.msra.mxu0 %v508
          %1112 = vmatmul.f32.gmra.mxu0 %v737
          %v1113 = vpop.f32.mrf.mxu0
          %v1114 = vadd.f32 %v1094, %v1113
          %1115 = vdwg.mxu0
          %1116 = vmatpush.msra.mxu0 %v505
          %1117 = vmatpush.msra.mxu0 %v501
          %1118 = vmatpush.msra.mxu0 %v497
          %1119 = vmatpush.msra.mxu0 %v493
          %1120 = vmatpush.msra.mxu0 %v489
          %1121 = vmatpush.msra.mxu0 %v485
          %1122 = vmatpush.msra.mxu0 %v481
          %1123 = vmatpush.msra.mxu0 %v477
          %1124 = vmatpush.msra.mxu0 %v473
          %1125 = vmatpush.msra.mxu0 %v469
          %1126 = vmatpush.msra.mxu0 %v465
          %1127 = vmatpush.msra.mxu0 %v461
          %1128 = vmatpush.msra.mxu0 %v457
          %1129 = vmatpush.msra.mxu0 %v453
          %1130 = vmatpush.msra.mxu0 %v449
          %1131 = vmatpush.msra.mxu0 %v445
          %1132 = vmatmul.f32.gmra.mxu0 %v736
          %v1133 = vpop.f32.mrf.mxu0
          %v1134 = vadd.f32 0.0, %v1133
          %1135 = vdwg.mxu0
          %1136 = vmatpush.msra.mxu0 %v569
          %1137 = vmatpush.msra.mxu0 %v565
          %1138 = vmatpush.msra.mxu0 %v561
          %1139 = vmatpush.msra.mxu0 %v557
          %1140 = vmatpush.msra.mxu0 %v553
          %1141 = vmatpush.msra.mxu0 %v549
          %1142 = vmatpush.msra.mxu0 %v545
          %1143 = vmatpush.msra.mxu0 %v541
          %1144 = vmatpush.msra.mxu0 %v537
          %1145 = vmatpush.msra.mxu0 %v533
          %1146 = vmatpush.msra.mxu0 %v529
          %1147 = vmatpush.msra.mxu0 %v525
          %1148 = vmatpush.msra.mxu0 %v521
          %1149 = vmatpush.msra.mxu0 %v517
          %1150 = vmatpush.msra.mxu0 %v513
          %1151 = vmatpush.msra.mxu0 %v509
          %1152 = vmatmul.f32.gmra.mxu0 %v737
          %v1153 = vpop.f32.mrf.mxu0
          %v1154 = vadd.f32 %v1134, %v1153
          %1155 = vdwg.mxu0
          %1156 = vmatpush.msra.mxu0 %v506
          %1157 = vmatpush.msra.mxu0 %v502
          %1158 = vmatpush.msra.mxu0 %v498
          %1159 = vmatpush.msra.mxu0 %v494
          %1160 = vmatpush.msra.mxu0 %v490
          %1161 = vmatpush.msra.mxu0 %v486
          %1162 = vmatpush.msra.mxu0 %v482
          %1163 = vmatpush.msra.mxu0 %v478
          %1164 = vmatpush.msra.mxu0 %v474
          %1165 = vmatpush.msra.mxu0 %v470
          %1166 = vmatpush.msra.mxu0 %v466
          %1167 = vmatpush.msra.mxu0 %v462
          %1168 = vmatpush.msra.mxu0 %v458
          %1169 = vmatpush.msra.mxu0 %v454
          %1170 = vmatpush.msra.mxu0 %v450
          %1171 = vmatpush.msra.mxu0 %v446
          %1172 = vmatmul.f32.gmra.mxu0 %v736
          %v1173 = vpop.f32.mrf.mxu0
          %v1174 = vadd.f32 0.0, %v1173
          %1175 = vdwg.mxu0
          %1176 = vmatpush.msra.mxu0 %v570
          %1177 = vmatpush.msra.mxu0 %v566
          %1178 = vmatpush.msra.mxu0 %v562
          %1179 = vmatpush.msra.mxu0 %v558
          %1180 = vmatpush.msra.mxu0 %v554
          %1181 = vmatpush.msra.mxu0 %v550
          %1182 = vmatpush.msra.mxu0 %v546
          %1183 = vmatpush.msra.mxu0 %v542
          %1184 = vmatpush.msra.mxu0 %v538
          %1185 = vmatpush.msra.mxu0 %v534
          %1186 = vmatpush.msra.mxu0 %v530
          %1187 = vmatpush.msra.mxu0 %v526
          %1188 = vmatpush.msra.mxu0 %v522
          %1189 = vmatpush.msra.mxu0 %v518
          %1190 = vmatpush.msra.mxu0 %v514
          %1191 = vmatpush.msra.mxu0 %v510
          %1192 = vmatmul.f32.gmra.mxu0 %v737
          %v1193 = vpop.f32.mrf.mxu0
          %v1194 = vadd.f32 %v1174, %v1193
          %1195 = vdwg.mxu0
          %1196 = vmatpush.msra.mxu0 %v507
          %1197 = vmatpush.msra.mxu0 %v503
          %1198 = vmatpush.msra.mxu0 %v499
          %1199 = vmatpush.msra.mxu0 %v495
          %1200 = vmatpush.msra.mxu0 %v491
          %1201 = vmatpush.msra.mxu0 %v487
          %1202 = vmatpush.msra.mxu0 %v483
          %1203 = vmatpush.msra.mxu0 %v479
          %1204 = vmatpush.msra.mxu0 %v475
          %1205 = vmatpush.msra.mxu0 %v471
          %1206 = vmatpush.msra.mxu0 %v467
          %1207 = vmatpush.msra.mxu0 %v463
          %1208 = vmatpush.msra.mxu0 %v459
          %1209 = vmatpush.msra.mxu0 %v455
          %1210 = vmatpush.msra.mxu0 %v451
          %1211 = vmatpush.msra.mxu0 %v447
          %1212 = vmatmul.f32.gmra.mxu0 %v736
          %v1213 = vpop.f32.mrf.mxu0
          %v1214 = vadd.f32 0.0, %v1213
          %1215 = vdwg.mxu0
          %1216 = vmatpush.msra.mxu0 %v571
          %1217 = vmatpush.msra.mxu0 %v567
          %1218 = vmatpush.msra.mxu0 %v563
          %1219 = vmatpush.msra.mxu0 %v559
          %1220 = vmatpush.msra.mxu0 %v555
          %1221 = vmatpush.msra.mxu0 %v551
          %1222 = vmatpush.msra.mxu0 %v547
          %1223 = vmatpush.msra.mxu0 %v543
          %1224 = vmatpush.msra.mxu0 %v539
          %1225 = vmatpush.msra.mxu0 %v535
          %1226 = vmatpush.msra.mxu0 %v531
          %1227 = vmatpush.msra.mxu0 %v527
          %1228 = vmatpush.msra.mxu0 %v523
          %1229 = vmatpush.msra.mxu0 %v519
          %1230 = vmatpush.msra.mxu0 %v515
          %1231 = vmatpush.msra.mxu0 %v511
          %1232 = vmatmul.f32.gmra.mxu0 %v737
          %v1233 = vpop.f32.mrf.mxu0
          %v1234 = vadd.f32 %v1214, %v1233
          %1235 = vdwg.mxu0
          %v1236 = vperm.slane %v1046, 0
          %v1237 = vperm.slane %v1049, 0
          %v1238 = vadd.f32 %v895, %v1236
          %v1239 = vadd.f32 %v915, %v1237
          %v1240 = vadd.f32 %v1238, %v1114
          %v1241 = vadd.f32 %v1239, %v1154
          %v1242 = vperm.slane %v580, 2
          %v1243 = vperm.slane %v581, 2
          %v1244 = vadd.f32 %v1240, %v1242
          %v1245 = vadd.f32 %v1241, %v1243
          %v1246 = vmul.f32 %v1244, %v594
          %v1247 = vmul.f32 %v1245, %v595
          %v1248 = vperm.slane %v1072, 0
          %v1249 = vperm.slane %v1075, 0
          %v1250 = vadd.f32 %v935, %v1248
          %v1251 = vadd.f32 %v955, %v1249
          %v1252 = vadd.f32 %v1250, %v1194
          %v1253 = vadd.f32 %v1251, %v1234
          %v1254 = vperm.slane %v580, 3
          %v1255 = vperm.slane %v581, 3
          %v1256 = vadd.f32 %v1252, %v1254
          %v1257 = vadd.f32 %v1253, %v1255
          %v1258 = vmul.f32 %v1256, %v594
          %v1259 = vmul.f32 %v1257, %v595
          %v1260 = vperm.slane %v580, 4
          %v1261 = vperm.slane %v581, 4
          %v1262 = vadd.f32 %v1258, %v1260
          %v1263 = vadd.f32 %v1259, %v1261
          %v1264 = vrot.slane %v1262, 4
          %v1265 = vmax.f32 %v1262, %v1264
          %v1266 = vrot.slane %v1265, 2
          %v1267 = vmax.f32 %v1265, %v1266
          %v1268 = vrot.slane %v1267, 1
          %v1269 = vmax.f32 %v1267, %v1268
          %v1270 = vrot.slane %v1263, 4
          %v1271 = vmax.f32 %v1263, %v1270
          %v1272 = vrot.slane %v1271, 2
          %v1273 = vmax.f32 %v1271, %v1272
          %v1274 = vrot.slane %v1273, 1
          %v1275 = vmax.f32 %v1273, %v1274
          %v1276 = vsub.f32 %v1262, %v1269
          %v1277 = vsub.f32 %v1263, %v1275
          %v1278 = vmul.f32 %v1276, 1.442695
          %v1279 = vpow.pop %v1278
          %v1280 = vmul.f32 %v1277, 1.442695
          %v1281 = vpow.pop %v1280
          %v1282 = vmul.f32 %v587, %v975
          %v1283 = vmul.f32 %v587, %v995
          %v1284 = vperm.slane %v580, 5
          %v1285 = vperm.slane %v581, 5
          %v1286 = vadd.f32 %v1282, %v1284
          %v1287 = vadd.f32 %v1283, %v1285
          %v1288 = vmul.f32 %v1279, %v1286
          %v1289 = vmul.f32 %v1281, %v1287
          %v1290 = vrot.slane %v1288, 4
          %v1291 = vadd.f32 %v1288, %v1290
          %v1292 = vrot.slane %v1291, 2
          %v1293 = vadd.f32 %v1291, %v1292
          %v1294 = vrot.slane %v1293, 1
          %v1295 = vadd.f32 %v1293, %v1294
          %v1296 = vrot.slane %v1289, 4
          %v1297 = vadd.f32 %v1289, %v1296
          %v1298 = vrot.slane %v1297, 2
          %v1299 = vadd.f32 %v1297, %v1298
          %v1300 = vrot.slane %v1299, 1
          %v1301 = vadd.f32 %v1299, %v1300
          %v1302 = vrot.slane %v1279, 4
          %v1303 = vadd.f32 %v1279, %v1302
          %v1304 = vrot.slane %v1303, 2
          %v1305 = vadd.f32 %v1303, %v1304
          %v1306 = vrot.slane %v1305, 1
          %v1307 = vadd.f32 %v1305, %v1306
          %v1308 = vrot.slane %v1281, 4
          %v1309 = vadd.f32 %v1281, %v1308
          %v1310 = vrot.slane %v1309, 2
          %v1311 = vadd.f32 %v1309, %v1310
          %v1312 = vrot.slane %v1311, 1
          %v1313 = vadd.f32 %v1311, %v1312
          %v1314 = vrcp.pop %v1307
          %v1315 = vmul.f32 %v1307, %v1314
          %v1316 = vsub.f32 1.0, %v1315
          %v1317 = vmul.f32 %v1314, %v1316
          %v1318 = vadd.f32 %v1314, %v1317
          %vm1319 = vweird.f32 %v1307
          %vm1320 = vweird.f32 %v1314
          %vm1321 = vmor %vm1319, %vm1320
          %v1322 = vsel %vm1321, %v1314, %v1318
          %v1323 = vand.u32 2147483647, %v1307
          %vm1324 = vcmp.eq.f32.partialorder %v1323, 8.507059e+37
          %v1325 = vand.u32 %v1307, 2147483648
          %v1326 = vor.u32 1.1754944e-38, %v1325
          %v1327 = vsel %vm1324, %v1326, %v1322
          %v1328 = vmul.f32 %v1295, %v1327
          %v1329 = vrcp.pop %v1313
          %v1330 = vmul.f32 %v1313, %v1329
          %v1331 = vsub.f32 1.0, %v1330
          %v1332 = vmul.f32 %v1329, %v1331
          %v1333 = vadd.f32 %v1329, %v1332
          %vm1334 = vweird.f32 %v1313
          %vm1335 = vweird.f32 %v1329
          %vm1336 = vmor %vm1334, %vm1335
          %v1337 = vsel %vm1336, %v1329, %v1333
          %v1338 = vand.u32 2147483647, %v1313
          %vm1339 = vcmp.eq.f32.partialorder %v1338, 8.507059e+37
          %v1340 = vand.u32 %v1313, 2147483648
          %v1341 = vor.u32 1.1754944e-38, %v1340
          %v1342 = vsel %vm1339, %v1341, %v1337
          %v1343 = vmul.f32 %v1301, %v1342
          %v1344 = vxor.u32 %v1328, 2147483648
          %v1345 = vxor.u32 %v1343, 2147483648
          %v1346 = vmul.f32 %v1344, 1.442695
          %v1347 = vpow.pop %v1346
          %v1348 = vmul.f32 %v1345, 1.442695
          %v1349 = vpow.pop %v1348
          %v1350 = vadd.f32 %v1347, 1.0
          %v1351 = vadd.f32 %v1349, 1.0
          %v1352 = vrcp.pop %v1350
          %v1353 = vmul.f32 %v1350, %v1352
          %v1354 = vsub.f32 1.0, %v1353
          %v1355 = vmul.f32 %v1352, %v1354
          %v1356 = vadd.f32 %v1352, %v1355
          %vm1357 = vweird.f32 %v1350
          %vm1358 = vweird.f32 %v1352
          %vm1359 = vmor %vm1357, %vm1358
          %v1360 = vsel %vm1359, %v1352, %v1356
          %v1361 = vand.u32 2147483647, %v1350
          %vm1362 = vcmp.eq.f32.partialorder %v1361, 8.507059e+37
          %v1363 = vand.u32 %v1350, 2147483648
          %v1364 = vor.u32 1.1754944e-38, %v1363
          %v1365 = vsel %vm1362, %v1364, %v1360
          %v1366 = vmul.f32 1.0, %v1365
          %v1367 = vrcp.pop %v1351
          %v1368 = vmul.f32 %v1351, %v1367
          %v1369 = vsub.f32 1.0, %v1368
          %v1370 = vmul.f32 %v1367, %v1369
          %v1371 = vadd.f32 %v1367, %v1370
          %vm1372 = vweird.f32 %v1351
          %vm1373 = vweird.f32 %v1367
          %vm1374 = vmor %vm1372, %vm1373
          %v1375 = vsel %vm1374, %v1367, %v1371
          %v1376 = vand.u32 2147483647, %v1351
          %vm1377 = vcmp.eq.f32.partialorder %v1376, 8.507059e+37
          %v1378 = vand.u32 %v1351, 2147483648
          %v1379 = vor.u32 1.1754944e-38, %v1378
          %v1380 = vsel %vm1377, %v1379, %v1375
          %v1381 = vmul.f32 1.0, %v1380
          %1383 = vrot.lane.b32.xlu0 %v1366, 96
          %v1384 = vpop.permute.xlu0 %1383
          %1386 = vrot.lane.b32.xlu0 %v1366, 64
          %v1387 = vpop.permute.xlu0 %1386
          %1389 = vrot.lane.b32.xlu0 %v1366, 32
          %v1390 = vpop.permute.xlu0 %1389
          %1393 = vrot.lane.b32.xlu0 %v1381, 96
          %v1394 = vpop.permute.xlu0 %1393
          %1396 = vrot.lane.b32.xlu0 %v1381, 64
          %v1397 = vpop.permute.xlu0 %1396
          %1399 = vrot.lane.b32.xlu0 %v1381, 32
          %v1400 = vpop.permute.xlu0 %1399
          %vm1402 = vcmask 1040384
          %v1403 = vsel %vm1402, %v1366, %v1384
          %vm1404 = vcmask 1041408
          %v1405 = vsel %vm1404, %v1403, %v1387
          %vm1406 = vcmask 1042432
          %v1407 = vsel %vm1406, %v1405, %v1390
          %vm1408 = vcmask 1043456
          %v1409 = vsel %vm1408, %v1407, %v1381
          %vm1410 = vcmask 1044480
          %v1411 = vsel %vm1410, %v1409, %v1394
          %vm1412 = vcmask 1045504
          %v1413 = vsel %vm1412, %v1411, %v1397
          %vm1414 = vcmask 1046528
          %v1415 = vsel %vm1414, %v1413, %v1400
          %1417 = vrot.lane.b32.xlu0 %v1415, 32
          %v1418 = vpop.permute.xlu0 %1417
          %v1420 = vsel %vm622, %v1286, %v1418
          %v1421 = vperm.slane %v580, 6
          %v1423 = vsel %vm714, %v1420, 0
          %1425 = vmatpush.msra.mxu0 0.0
          %1426 = vmatpush.msra.mxu0 0.0
          %1427 = vmatpush.msra.mxu0 0.0
          %1428 = vmatpush.msra.mxu0 0.0
          %1429 = vmatpush.msra.mxu0 0.0
          %1430 = vmatpush.msra.mxu0 0.0
          %1431 = vmatpush.msra.mxu0 0.0
          %1432 = vmatpush.msra.mxu0 0.0
          %1433 = vmatpush.msra.mxu0 %v579
          %1434 = vmatpush.msra.mxu0 %v578
          %1435 = vmatpush.msra.mxu0 %v577
          %1436 = vmatpush.msra.mxu0 %v576
          %1437 = vmatpush.msra.mxu0 %v575
          %1438 = vmatpush.msra.mxu0 %v574
          %1439 = vmatpush.msra.mxu0 %v573
          %1440 = vmatpush.msra.mxu0 %v572
          %1441 = vmatmul.f32.gmra.mxu0 %v1423
          %v1442 = vpop.f32.mrf.mxu0
          %v1443 = vadd.f32 %v1421, %v1442
          %1444 = vdwg.mxu0
        $region65: #{tpu_custom_call.1} parent=51 // loop_footer
          %s734 = sadd.s32 1, %s730
        $region66: #{tpu_custom_call.1} parent=51 // loop_footer_branch
          %729 = sbr.rel target = $region62
        $region67: #{tpu_custom_call.1} parent=51 // loop_exit
          _
        %v1445 = vperm.slane %v580, 7
        %1450 = vrot.lane.b32.xlu0 %v416, 32
        %v1451 = vpop.permute.xlu0 %1450
        %1452 = vrot.lane.b32.xlu0 %v425, 32
        %v1453 = vpop.permute.xlu0 %1452
        %1454 = vrot.lane.b32.xlu0 %v434, 32
        %v1455 = vpop.permute.xlu0 %1454
        %1456 = vrot.lane.b32.xlu0 %v443, 32
        %v1457 = vpop.permute.xlu0 %1456
        %v1463 = vsel %vm622, %v735, 0
        %1465 = vmatpush.msra.mxu0 0.0
        %1466 = vmatpush.msra.mxu0 0.0
        %1467 = vmatpush.msra.mxu0 0.0
        %1468 = vmatpush.msra.mxu0 0.0
        %1469 = vmatpush.msra.mxu0 0.0
        %1470 = vmatpush.msra.mxu0 0.0
        %1471 = vmatpush.msra.mxu0 0.0
        %1472 = vmatpush.msra.mxu0 0.0
        %1473 = vmatpush.msra.mxu0 0.0
        %1474 = vmatpush.msra.mxu0 0.0
        %1475 = vmatpush.msra.mxu0 0.0
        %1476 = vmatpush.msra.mxu0 0.0
        %1477 = vmatpush.msra.mxu0 %v1457
        %1478 = vmatpush.msra.mxu0 %v1455
        %1479 = vmatpush.msra.mxu0 %v1453
        %1480 = vmatpush.msra.mxu0 %v1451
        %1481 = vmatmul.f32.gmra.mxu0 %v1463
        %v1482 = vpop.f32.mrf.mxu0
        %v1483 = vadd.f32 %v1445, %v1482
        %1484 = vdwg.mxu0
        %v1486 = vrot.slane %v1483, 1
        %1487 = vrot.lane.b32.xlu0 %v1486, 16
        %v1488 = vpop.permute.xlu0 %1487
        %v1490 = vrot.slane %v1483, 2
        %1491 = vrot.lane.b32.xlu0 %v1490, 32
        %v1492 = vpop.permute.xlu0 %1491
        %v1494 = vrot.slane %v1483, 3
        %1495 = vrot.lane.b32.xlu0 %v1494, 48
        %v1496 = vpop.permute.xlu0 %1495
        %v1498 = vrot.slane %v1483, 4
        %1499 = vrot.lane.b32.xlu0 %v1498, 64
        %v1500 = vpop.permute.xlu0 %1499
        %v1502 = vrot.slane %v1483, 5
        %1503 = vrot.lane.b32.xlu0 %v1502, 80
        %v1504 = vpop.permute.xlu0 %1503
        %v1506 = vrot.slane %v1483, 6
        %1507 = vrot.lane.b32.xlu0 %v1506, 96
        %v1508 = vpop.permute.xlu0 %1507
        %v1510 = vrot.slane %v1483, 7
        %1511 = vrot.lane.b32.xlu0 %v1510, 112
        %v1512 = vpop.permute.xlu0 %1511
        %v1514 = vsel %vm598, %v1483, %v1488
        %v1515 = vsel %vm622, %v1514, %v1492
        %vm1516 = vcmask 392192
        %v1517 = vsel %vm1516, %v1515, %v1496
        %v1518 = vsel %vm714, %v1517, %v1500
        %vm1519 = vcmask 654336
        %v1520 = vsel %vm1519, %v1518, %v1504
        %v1521 = vsel %vm716, %v1520, %v1508
        %vm1522 = vcmask 916480
        %v1523 = vsel %vm1522, %v1521, %v1512
        %1524 = vst [vmem:[%s386] sm:$0x1] %v1523
        %1525 = vst [vmem:[%s393] sm:$0xff] %v736
        %1526 = vst [vmem:[%s393 + $0x8] sm:$0xff] %v737
        %s1527 = sand.u32 %s220, 1
        %s1528 = scalar_lea.sflag [#allocation4], %s1527
        %s1529 = sand.u32 %s220, 1
        %s1530 = scalar_lea.vmem [#allocation7], %s1529
        %s1531 = sand.u32 %s246, 1
        %s1532 = scalar_lea.sflag [#allocation9], %s1531
        %s1533 = sand.u32 %s246, 1
        %s1534 = smul.addr %s1533, 16
        %s1535 = scalar_lea.vmem [#allocation8], %s1534
        // Predicated region
        $region68: #{tpu_custom_call.1} parent=51 // pred_check
          %p1536 = pneg %p230
        $region69: #{tpu_custom_call.1} parent=51 // pred_check_branch
          %1538 = sbr.rel (%p1536) target = $region71
        $region70: #{tpu_custom_call.1} parent=51 // pred_region
          %1540 = vsyncadd %s1528, 0
          %s1541 = scalar_lea.hbm %s8, %s29
          %s1543 = sshll.u32 %s1530, 4
          %s1544 = int_to_ptr.vmem [resolvable:$true] %s1543
          %s1545 = sshll.u32 %s1541, 4
          %s1546 = int_to_ptr.hbm [resolvable:$true] %s1545
          %1548 = dma.vmem_to_hbm [thread:$0]  %s1544, 16, %s1546, %s1528
        $region71: #{tpu_custom_call.1} parent=51 // pred_fallthru
          _
        // Predicated region
        $region72: #{tpu_custom_call.1} parent=51 // pred_check
          %p1549 = pneg %p256
        $region73: #{tpu_custom_call.1} parent=51 // pred_check_branch
          %1551 = sbr.rel (%p1549) target = $region75
        $region74: #{tpu_custom_call.1} parent=51 // pred_region
          %1553 = vsyncadd %s1532, 0
          %s1554 = smul.addr %s29, 2
          %s1555 = smul.addr %s1554, 8
          %s1556 = scalar_lea.hbm %s9, %s1555
          %s1558 = sshll.u32 %s1535, 4
          %s1559 = int_to_ptr.vmem [resolvable:$true] %s1558
          %s1560 = sshll.u32 %s1556, 4
          %s1561 = int_to_ptr.hbm [resolvable:$true] %s1560
          %1563 = dma.vmem_to_hbm [thread:$0]  %s1559, 256, %s1561, %s1532
        $region75: #{tpu_custom_call.1} parent=51 // pred_fallthru
          _
      $region52: #{tpu_custom_call.1} parent=5 // pred_fallthru
        _
      %p1564 = scmp.le.s32.totalorder 2, %s24
      // Predicated region
      $region76: #{tpu_custom_call.1} parent=5 // pred_check
        %p1565 = pneg %p1564
      $region77: #{tpu_custom_call.1} parent=5 // pred_check_branch
        %1567 = sbr.rel (%p1565) target = $region79
      $region78: #{tpu_custom_call.1} parent=5 // pred_region
        %s1568 = ssub.s32 %s24, 2
        // Predicated region
        $region80: #{tpu_custom_call.1} parent=78 // pred_check
          %p1569 = pneg %p236
        $region81: #{tpu_custom_call.1} parent=78 // pred_check_branch
          %1571 = sbr.rel (%p1569) target = $region83
        $region82: #{tpu_custom_call.1} parent=78 // pred_region
          %s1572 = sand.u32 %s221, 1
          %s1573 = scalar_lea.sflag [#allocation4], %s1572
          %s1574 = sand.u32 %s221, 1
          %s1575 = scalar_lea.vmem [#allocation7], %s1574
          %1577 = dma.done %s1573, 16
        $region83: #{tpu_custom_call.1} parent=78 // pred_fallthru
          _
        // Predicated region
        $region84: #{tpu_custom_call.1} parent=78 // pred_check
          %p1578 = pneg %p262
        $region85: #{tpu_custom_call.1} parent=78 // pred_check_branch
          %1580 = sbr.rel (%p1578) target = $region87
        $region86: #{tpu_custom_call.1} parent=78 // pred_region
          %s1581 = sand.u32 %s247, 1
          %s1582 = scalar_lea.sflag [#allocation9], %s1581
          %s1583 = sand.u32 %s247, 1
          %s1584 = smul.addr %s1583, 16
          %s1585 = scalar_lea.vmem [#allocation8], %s1584
          %1587 = dma.done %s1582, 256
        $region87: #{tpu_custom_call.1} parent=78 // pred_fallthru
          _
      $region79: #{tpu_custom_call.1} parent=5 // pred_fallthru
        _
    $region6: #{tpu_custom_call.1} parent=1 // loop_footer
      %s28 = sadd.s32 1, %s24
    $region7: #{tpu_custom_call.1} parent=1 // loop_footer_branch
      %23 = sbr.rel target = $region3
    $region8: #{tpu_custom_call.1} parent=1 // loop_exit
      _
    %1588 = vsyncpa [#allocation3], 1
    %s1589 = scalar_lea.sflag [#allocation3], 1
    %1590 = vsyncpa %s1589, 1
    %1591 = vsyncpa [#allocation6], 1
    %1592 = vsyncpa [#allocation4], 1
    %s1593 = scalar_lea.sflag [#allocation4], 1
    %1594 = vsyncpa %s1593, 1
    %1595 = vsyncpa [#allocation9], 1
    %s1596 = scalar_lea.sflag [#allocation9], 1
    %1597 = vsyncpa %s1596, 1

</llo_original>
